<compile_context>
chip_gen: v7x
topology: tpu7x:2x2x1
jax: 0.10.0
libtpu: 0.0.40
codegen_flags: <defaults>
</compile_context>

<pallas_src>
import math

import jax
import jax.numpy as jnp
from jax import lax
from jax.experimental import pallas as pl
from jax.experimental.pallas import tpu as pltpu


# ---------------------------------------------------------------------------
# Kernel A: normalize + project + neighbor-gather-max + BN partial stats
#           (grid over B, faces on lanes)
# ---------------------------------------------------------------------------
def _make_descriptor_kernel(gather_mode):
    def descriptor_kernel(normals_ref, ring_ref, dirs_ref,
                          feat_ref, sum_ref, sumsq_ref):
        # normals_ref: (1, 3, F) f32   ring_ref: (1, K, F) i32
        # dirs_ref   : (NK, 3)  f32 (already L2-normalized in the wrapper)
        # feat_ref   : (1, NK, F) f32  sum_ref/sumsq_ref: (1, NK, 1) f32
        n = normals_ref[0]                                   # (3, F)
        dirs = dirs_ref[...]                                 # (NK, 3)
        Fdim = n.shape[1]
        K = ring_ref.shape[1]
        NK = dirs.shape[0]

        # in-bounds guard (torch.gather requires valid indices anyway)
        ring = jnp.clip(ring_ref[0], 0, Fdim - 1)            # (K, F) i32

        # F.normalize(normal, dim=-1) == rsqrt(max(sumsq, eps^2)) * n
        inv = lax.rsqrt(jnp.maximum(jnp.sum(n * n, axis=0, keepdims=True),
                                    1e-24))                  # (1, F)
        n_hat = n * inv                                      # (3, F)

        # Projection onto the NK unit directions: contraction dim is only 3,
        # so use 3 broadcast FMAs on the VPU instead of a padded MXU matmul.
        proj = dirs[:, 0:1] * n_hat[0:1, :]
        proj = proj + dirs[:, 1:2] * n_hat[1:2, :]
        proj = proj + dirs[:, 2:3] * n_hat[2:3, :]           # (NK, F)

        # Neighbor max: self term, then the K gathered neighbor projections
        # (normalize+project commute with the gather, so gathering proj
        #  columns is exact).
        feat = proj
        if gather_mode == "dynamic":
            for k in range(K):                               # K small & static
                idx = jnp.broadcast_to(ring[k:k + 1, :], (NK, Fdim))
                gathered = jnp.take_along_axis(
                    proj, idx, axis=1, mode="promise_in_bounds")
                feat = jnp.maximum(feat, gathered)
        else:
            # Fallback: exact 0/1-selector gather folded into ONE MXU matmul
            # (NK, F) @ (F, K*F) (HIGHEST keeps the selected values exact).
            row_id = lax.broadcasted_iota(jnp.int32, (Fdim, K * Fdim), 0)
            targets = jnp.concatenate(
                [jnp.broadcast_to(ring[k:k + 1, :], (Fdim, Fdim))
                 for k in range(K)], axis=1)                 # (F, K*F)
            sel = (row_id == targets).astype(jnp.float32)
            gathered_all = jnp.dot(proj, sel,
                                   preferred_element_type=jnp.float32,
                                   precision=lax.Precision.HIGHEST)
            for k in range(K):
                feat = jnp.maximum(
                    feat, gathered_all[:, k * Fdim:(k + 1) * Fdim])

        feat_ref[0] = feat                                   # lane-dense store
        # per-batch partial BN statistics so the BN pass never re-reads feat
        sum_ref[0] = jnp.sum(feat, axis=1, keepdims=True)          # (NK, 1)
        sumsq_ref[0] = jnp.sum(feat * feat, axis=1, keepdims=True)  # (NK, 1)

    return descriptor_kernel


# ---------------------------------------------------------------------------
# Kernel B: streaming BatchNorm1d(apply) + ReLU, face-tiled, lane-dense
# ---------------------------------------------------------------------------
def bn_relu_kernel(feat_ref, scale_ref, shift_ref, out_ref):
    # feat_ref/out_ref: (1, NK, FT)   scale_ref/shift_ref: (NK, 1)
    x = feat_ref[0]
    out_ref[0] = jnp.maximum(x * scale_ref[...] + shift_ref[...], 0.0)
    # TODO(synk): running_mean/running_var momentum update is a training-only
    # nn.BatchNorm1d side effect and does not affect the forward output.


def _pick_face_tile(F):
    for ft in (2048, 1024, 512, 256, 128):
        if F % ft == 0:
            return ft
    return F


# ---------------------------------------------------------------------------
# Wrapper
# ---------------------------------------------------------------------------
def curve_descriptor_forward(normals, ring_n, directions, bn_gamma, bn_beta,
                             *, gather_mode="dynamic"):
    """normals: (B, 3, F) f32, ring_n: (B, F, K) i32, directions: (3, NK) f32,
    bn_gamma/bn_beta: (NK,) f32.  Returns (B, NK, F) f32 (PyTorch layout)."""
    B, _, F = normals.shape
    K = ring_n.shape[-1]
    NK = directions.shape[-1]

    # --- tiny grid-invariant glue, hoisted out of the kernels ---------------
    # F.normalize(directions, dim=0), then (NK, 3) for the in-kernel FMAs.
    d_sumsq = jnp.sum(directions * directions, axis=0, keepdims=True)
    dirs_n = (directions * lax.rsqrt(jnp.maximum(d_sumsq, 1e-24))).T  # (NK, 3)
    ring_t = jnp.transpose(ring_n, (0, 2, 1)).astype(jnp.int32)       # (B, K, F)

    feat, psum, psumsq = pl.pallas_call(
        _make_descriptor_kernel(gather_mode),
        out_shape=(
            jax.ShapeDtypeStruct((B, NK, F), jnp.float32),
            jax.ShapeDtypeStruct((B, NK, 1), jnp.float32),
            jax.ShapeDtypeStruct((B, NK, 1), jnp.float32),
        ),
        grid=(B,),
        in_specs=[
            pl.BlockSpec((1, 3, F), lambda b: (b, 0, 0)),   # normals stay (B,3,F)
            pl.BlockSpec((1, K, F), lambda b: (b, 0, 0)),   # ring, faces on lanes
            pl.BlockSpec((NK, 3), lambda b: (0, 0)),        # normalized dirs
        ],
        out_specs=(
            pl.BlockSpec((1, NK, F), lambda b: (b, 0, 0)),  # lane-dense feat
            pl.BlockSpec((1, NK, 1), lambda b: (b, 0, 0)),
            pl.BlockSpec((1, NK, 1), lambda b: (b, 0, 0)),
        ),
        compiler_params=pltpu.CompilerParams(
            dimension_semantics=("parallel",)),
    )(normals, ring_t, dirs_n)

    # --- training-mode BN statistics from the per-batch partials (tiny) -----
    count = float(B * F)
    mean = jnp.sum(psum[:, :, 0], axis=0) / count                   # (NK,)
    meansq = jnp.sum(psumsq[:, :, 0], axis=0) / count               # (NK,)
    var = jnp.maximum(meansq - mean * mean, 0.0)                    # biased var
    scale = bn_gamma * lax.rsqrt(var + 1e-5)                        # (NK,)
    shift = bn_beta - mean * scale                                  # (NK,)

    ft = _pick_face_tile(F)
    y = pl.pallas_call(
        bn_relu_kernel,
        out_shape=jax.ShapeDtypeStruct((B, NK, F), jnp.float32),
        grid=(B, F // ft),
        in_specs=[
            pl.BlockSpec((1, NK, ft), lambda b, t: (b, 0, t)),
            pl.BlockSpec((NK, 1), lambda b, t: (0, 0)),
            pl.BlockSpec((NK, 1), lambda b, t: (0, 0)),
        ],
        out_specs=pl.BlockSpec((1, NK, ft), lambda b, t: (b, 0, t)),
        compiler_params=pltpu.CompilerParams(
            dimension_semantics=("parallel", "parallel")),
    )(feat, scale.reshape(NK, 1), shift.reshape(NK, 1))

    return y                                                # (B, NK, F)


# ---------------------------------------------------------------------------
# Plain-JAX reference (mirrors the PyTorch forward exactly)
# ---------------------------------------------------------------------------
def reference_forward(normals, ring_n, directions, bn_gamma, bn_beta):
    normals_t = jnp.transpose(normals, (0, 2, 1))              # (B, F, 3)
    gathered = jax.vmap(lambda n, r: n[r])(normals_t, ring_n)  # (B, F, K, 3)
    ring_all = jnp.concatenate(
        [gathered, normals_t[:, :, None, :]], axis=2)          # (B, F, K+1, 3)
    nb_norm = jnp.sqrt(jnp.sum(ring_all * ring_all, axis=-1, keepdims=True))
    nb = ring_all / jnp.maximum(nb_norm, 1e-12)
    d_norm = jnp.sqrt(jnp.sum(directions * directions, axis=0, keepdims=True))
    d = directions / jnp.maximum(d_norm, 1e-12)
    feat = jnp.einsum("bfkc,cn->bfkn", nb, d,
                      precision=lax.Precision.HIGHEST)
    feat = jnp.max(feat, axis=2)                               # (B, F, NK)
    mean = jnp.mean(feat, axis=(0, 1), keepdims=True)
    var = jnp.mean(jnp.square(feat - mean), axis=(0, 1), keepdims=True)
    yy = (feat - mean) * lax.rsqrt(var + 1e-5) * bn_gamma + bn_beta
    yy = jnp.maximum(yy, 0.0)
    return jnp.transpose(yy, (0, 2, 1))                        # (B, NK, F)


if __name__ == "__main__":
    # cfg = {'num_kernel': 32}, num_neighbor = 3
    B, F, K, NK = 2, 128, 3, 32

    key = jax.random.PRNGKey(0)
    k_norm, k_ring, k_dir = jax.random.split(key, 3)

    normals = jax.random.normal(k_norm, (B, 3, F), dtype=jnp.float32)
    ring_n = jax.random.randint(k_ring, (B, F, K), 0, F, dtype=jnp.int32)

    # self.directions.data.uniform_(-stdv, stdv), stdv = 1/sqrt(num_kernel)
    stdv = 1.0 / math.sqrt(NK)
    directions = jax.random.uniform(
        k_dir, (3, NK), dtype=jnp.float32, minval=-stdv, maxval=stdv)

    # nn.BatchNorm1d default init: weight = 1, bias = 0
    bn_gamma = jnp.ones((NK,), jnp.float32)
    bn_beta = jnp.zeros((NK,), jnp.float32)

    ref = reference_forward(normals, ring_n, directions, bn_gamma, bn_beta)

    def _run(mode):
        out = jax.block_until_ready(
            curve_descriptor_forward(normals, ring_n, directions,
                                     bn_gamma, bn_beta, gather_mode=mode))
        assert out.shape == (B, NK, F), out.shape
        err = float(jnp.max(jnp.abs(out - ref)))
        assert err < 1e-3, f"max abs error too large ({mode}): {err}"
        return out

    try:
        out = _run("dynamic")      # real lane gather (preferred)
    except Exception:
        out = _run("onehot")       # single stacked 0/1-matmul gather fallback

    print("KERNEL_OK")
</pallas_src>

<mosaic_0001>
module attributes {stable_mosaic.version = 11 : i64} {
  func.func @descriptor_kernel(%arg0: i32, %arg1: memref<1x3x128xf32, #tpu.memory_space<vmem>>, %arg2: memref<1x3x128xi32, #tpu.memory_space<vmem>>, %arg3: memref<32x3xf32, #tpu.memory_space<vmem>>, %arg4: memref<1x32x128xf32, #tpu.memory_space<vmem>>, %arg5: memref<1x32x1xf32, #tpu.memory_space<vmem>>, %arg6: memref<1x32x1xf32, #tpu.memory_space<vmem>>) attributes {dimension_semantics = [#tpu.dimension_semantics<parallel>], iteration_bounds = array<i64: 2>, scalar_prefetch = 0 : i64, scratch_operands = 0 : i64, tpu.core_type = #tpu.core_type<tc>, window_params = [{transform_indices = @transform_0, window_bounds = array<i64: 1, 3, 128>}, {transform_indices = @transform_1, window_bounds = array<i64: 1, 3, 128>}, {pipeline_mode = #tpu.pipeline_mode<synchronous>, transform_indices = @transform_2, window_bounds = array<i64: 32, 3>}, {transform_indices = @transform_3, window_bounds = array<i64: 1, 32, 128>}, {transform_indices = @transform_4, window_bounds = array<i64: 1, 32, 1>}, {transform_indices = @transform_5, window_bounds = array<i64: 1, 32, 1>}]} {
    %c0 = arith.constant 0 : index
    %c0_0 = arith.constant 0 : index
    %c0_1 = arith.constant 0 : index
    %0 = vector.load %arg1[%c0, %c0_0, %c0_1] : memref<1x3x128xf32, #tpu.memory_space<vmem>>, vector<1x3x128xf32>
    %1 = vector.shape_cast %0 : vector<1x3x128xf32> to vector<3x128xf32>
    %c0_2 = arith.constant 0 : index
    %c0_3 = arith.constant 0 : index
    %2 = vector.load %arg3[%c0_2, %c0_3] : memref<32x3xf32, #tpu.memory_space<vmem>>, vector<32x3xf32>
    %c0_4 = arith.constant 0 : index
    %c0_5 = arith.constant 0 : index
    %c0_6 = arith.constant 0 : index
    %3 = vector.load %arg2[%c0_4, %c0_5, %c0_6] : memref<1x3x128xi32, #tpu.memory_space<vmem>>, vector<1x3x128xi32>
    %4 = vector.shape_cast %3 : vector<1x3x128xi32> to vector<3x128xi32>
    %c0_i32 = arith.constant 0 : i32
    %c127_i32 = arith.constant 127 : i32
    %5 = vector.broadcast %c0_i32 : i32 to vector<3x128xi32>
    %6 = arith.maxsi %5, %4 : vector<3x128xi32>
    %7 = vector.broadcast %c127_i32 : i32 to vector<3x128xi32>
    %8 = arith.minsi %7, %6 : vector<3x128xi32>
    %9 = arith.mulf %1, %1 : vector<3x128xf32>
    %cst = arith.constant dense<0.000000e+00> : vector<128xf32>
    %10 = vector.multi_reduction <add>, %9, %cst [0] : vector<3x128xf32> to vector<128xf32>
    %11 = vector.shape_cast %10 : vector<128xf32> to vector<1x128xf32>
    %cst_7 = arith.constant 1.000000e-24 : f32
    %12 = vector.broadcast %cst_7 : f32 to vector<1x128xf32>
    %13 = arith.maximumf %11, %12 : vector<1x128xf32>
    %14 = math.rsqrt %13 : vector<1x128xf32>
    %15 = vector.broadcast %14 : vector<1x128xf32> to vector<3x128xf32>
    %16 = arith.mulf %1, %15 : vector<3x128xf32>
    %17 = vector.extract_strided_slice %2 {offsets = [0, 0], sizes = [32, 1], strides = [1, 1]} : vector<32x3xf32> to vector<32x1xf32>
    %18 = vector.extract_strided_slice %16 {offsets = [0, 0], sizes = [1, 128], strides = [1, 1]} : vector<3x128xf32> to vector<1x128xf32>
    %19 = vector.broadcast %17 : vector<32x1xf32> to vector<32x128xf32>
    %20 = vector.broadcast %18 : vector<1x128xf32> to vector<32x128xf32>
    %21 = arith.mulf %19, %20 : vector<32x128xf32>
    %22 = vector.extract_strided_slice %2 {offsets = [0, 1], sizes = [32, 1], strides = [1, 1]} : vector<32x3xf32> to vector<32x1xf32>
    %23 = vector.extract_strided_slice %16 {offsets = [1, 0], sizes = [1, 128], strides = [1, 1]} : vector<3x128xf32> to vector<1x128xf32>
    %24 = vector.broadcast %22 : vector<32x1xf32> to vector<32x128xf32>
    %25 = vector.broadcast %23 : vector<1x128xf32> to vector<32x128xf32>
    %26 = arith.mulf %24, %25 : vector<32x128xf32>
    %27 = arith.addf %21, %26 : vector<32x128xf32>
    %28 = vector.extract_strided_slice %2 {offsets = [0, 2], sizes = [32, 1], strides = [1, 1]} : vector<32x3xf32> to vector<32x1xf32>
    %29 = vector.extract_strided_slice %16 {offsets = [2, 0], sizes = [1, 128], strides = [1, 1]} : vector<3x128xf32> to vector<1x128xf32>
    %30 = vector.broadcast %28 : vector<32x1xf32> to vector<32x128xf32>
    %31 = vector.broadcast %29 : vector<1x128xf32> to vector<32x128xf32>
    %32 = arith.mulf %30, %31 : vector<32x128xf32>
    %33 = arith.addf %27, %32 : vector<32x128xf32>
    %34 = vector.extract_strided_slice %8 {offsets = [0, 0], sizes = [1, 128], strides = [1, 1]} : vector<3x128xi32> to vector<1x128xi32>
    %35 = vector.shape_cast %34 : vector<1x128xi32> to vector<1x128xi32>
    %36 = vector.broadcast %35 : vector<1x128xi32> to vector<32x128xi32>
    %37 = vector.shape_cast %36 : vector<32x128xi32> to vector<32x128x1xi32>
    %38 = vector.shape_cast %37 : vector<32x128x1xi32> to vector<32x128xi32>
    %39 = tpu.dynamic_gather %33[%38] in [1] : vector<32x128xf32>, vector<32x128xi32> -> vector<32x128xf32>
    %40 = arith.maximumf %33, %39 : vector<32x128xf32>
    %41 = vector.extract_strided_slice %8 {offsets = [1, 0], sizes = [1, 128], strides = [1, 1]} : vector<3x128xi32> to vector<1x128xi32>
    %42 = vector.shape_cast %41 : vector<1x128xi32> to vector<1x128xi32>
    %43 = vector.broadcast %42 : vector<1x128xi32> to vector<32x128xi32>
    %44 = vector.shape_cast %43 : vector<32x128xi32> to vector<32x128x1xi32>
    %45 = vector.shape_cast %44 : vector<32x128x1xi32> to vector<32x128xi32>
    %46 = tpu.dynamic_gather %33[%45] in [1] : vector<32x128xf32>, vector<32x128xi32> -> vector<32x128xf32>
    %47 = arith.maximumf %40, %46 : vector<32x128xf32>
    %48 = vector.extract_strided_slice %8 {offsets = [2, 0], sizes = [1, 128], strides = [1, 1]} : vector<3x128xi32> to vector<1x128xi32>
    %49 = vector.shape_cast %48 : vector<1x128xi32> to vector<1x128xi32>
    %50 = vector.broadcast %49 : vector<1x128xi32> to vector<32x128xi32>
    %51 = vector.shape_cast %50 : vector<32x128xi32> to vector<32x128x1xi32>
    %52 = vector.shape_cast %51 : vector<32x128x1xi32> to vector<32x128xi32>
    %53 = tpu.dynamic_gather %33[%52] in [1] : vector<32x128xf32>, vector<32x128xi32> -> vector<32x128xf32>
    %54 = arith.maximumf %47, %53 : vector<32x128xf32>
    %c0_8 = arith.constant 0 : index
    %c0_9 = arith.constant 0 : index
    %c0_10 = arith.constant 0 : index
    %55 = vector.load %arg4[%c0_8, %c0_9, %c0_10] : memref<1x32x128xf32, #tpu.memory_space<vmem>>, vector<1x32x128xf32>
    %56 = vector.shape_cast %55 : vector<1x32x128xf32> to vector<32x128xf32>
    %57 = vector.shape_cast %54 : vector<32x128xf32> to vector<1x32x128xf32>
    tpu.vector_store %arg4[%c0_8, %c0_9, %c0_10], %57 {strides = array<i32>} : memref<1x32x128xf32, #tpu.memory_space<vmem>>, vector<1x32x128xf32>,
    %cst_11 = arith.constant dense<0.000000e+00> : vector<32xf32>
    %58 = vector.multi_reduction <add>, %54, %cst_11 [1] : vector<32x128xf32> to vector<32xf32>
    %59 = vector.shape_cast %58 : vector<32xf32> to vector<32x1xf32>
    %c0_12 = arith.constant 0 : index
    %c0_13 = arith.constant 0 : index
    %c0_14 = arith.constant 0 : index
    %60 = vector.load %arg5[%c0_12, %c0_13, %c0_14] : memref<1x32x1xf32, #tpu.memory_space<vmem>>, vector<1x32x1xf32>
    %61 = vector.shape_cast %60 : vector<1x32x1xf32> to vector<32x1xf32>
    %62 = vector.shape_cast %59 : vector<32x1xf32> to vector<1x32x1xf32>
    tpu.vector_store %arg5[%c0_12, %c0_13, %c0_14], %62 {strides = array<i32>} : memref<1x32x1xf32, #tpu.memory_space<vmem>>, vector<1x32x1xf32>,
    %63 = arith.mulf %54, %54 : vector<32x128xf32>
    %cst_15 = arith.constant dense<0.000000e+00> : vector<32xf32>
    %64 = vector.multi_reduction <add>, %63, %cst_15 [1] : vector<32x128xf32> to vector<32xf32>
    %65 = vector.shape_cast %64 : vector<32xf32> to vector<32x1xf32>
    %c0_16 = arith.constant 0 : index
    %c0_17 = arith.constant 0 : index
    %c0_18 = arith.constant 0 : index
    %66 = vector.load %arg6[%c0_16, %c0_17, %c0_18] : memref<1x32x1xf32, #tpu.memory_space<vmem>>, vector<1x32x1xf32>
    %67 = vector.shape_cast %66 : vector<1x32x1xf32> to vector<32x1xf32>
    %68 = vector.shape_cast %65 : vector<32x1xf32> to vector<1x32x1xf32>
    tpu.vector_store %arg6[%c0_16, %c0_17, %c0_18], %68 {strides = array<i32>} : memref<1x32x1xf32, #tpu.memory_space<vmem>>, vector<1x32x1xf32>,
    return
  }
  func.func @transform_0(%arg0: i32) -> (i32, i32, i32) {
    %c0_i32 = arith.constant 0 : i32
    %c0_i32_0 = arith.constant 0 : i32
    %c0_i32_1 = arith.constant 0 : i32
    return %arg0, %c0_i32, %c0_i32_0 : i32, i32, i32
  }
  func.func @transform_1(%arg0: i32) -> (i32, i32, i32) {
    %c0_i32 = arith.constant 0 : i32
    %c0_i32_0 = arith.constant 0 : i32
    %c0_i32_1 = arith.constant 0 : i32
    return %arg0, %c0_i32, %c0_i32_0 : i32, i32, i32
  }
  func.func @transform_2(%arg0: i32) -> (i32, i32) {
    %c0_i32 = arith.constant 0 : i32
    %c0_i32_0 = arith.constant 0 : i32
    %c0_i32_1 = arith.constant 0 : i32
    return %c0_i32, %c0_i32_0 : i32, i32
  }
  func.func @transform_3(%arg0: i32) -> (i32, i32, i32) {
    %c0_i32 = arith.constant 0 : i32
    %c0_i32_0 = arith.constant 0 : i32
    %c0_i32_1 = arith.constant 0 : i32
    return %arg0, %c0_i32, %c0_i32_0 : i32, i32, i32
  }
  func.func @transform_4(%arg0: i32) -> (i32, i32, i32) {
    %c0_i32 = arith.constant 0 : i32
    %c0_i32_0 = arith.constant 0 : i32
    %c0_i32_1 = arith.constant 0 : i32
    return %arg0, %c0_i32, %c0_i32_0 : i32, i32, i32
  }
  func.func @transform_5(%arg0: i32) -> (i32, i32, i32) {
    %c0_i32 = arith.constant 0 : i32
    %c0_i32_0 = arith.constant 0 : i32
    %c0_i32_1 = arith.constant 0 : i32
    return %arg0, %c0_i32, %c0_i32_0 : i32, i32, i32
  }
}

module attributes {stable_mosaic.version = 11 : i64} {
  func.func @descriptor_kernel(%arg0: i32, %arg1: memref<1x3x128xf32, #tpu.memory_space<vmem>>, %arg2: memref<1x3x128xi32, #tpu.memory_space<vmem>>, %arg3: memref<32x3xf32, #tpu.memory_space<vmem>>, %arg4: memref<1x32x128xf32, #tpu.memory_space<vmem>>, %arg5: memref<1x32x1xf32, #tpu.memory_space<vmem>>, %arg6: memref<1x32x1xf32, #tpu.memory_space<vmem>>) attributes {dimension_semantics = [#tpu.dimension_semantics<parallel>], iteration_bounds = array<i64: 2>, scalar_prefetch = 0 : i64, scratch_operands = 0 : i64, tpu.core_type = #tpu.core_type<tc>, window_params = [{transform_indices = @transform_0, window_bounds = array<i64: 1, 3, 128>}, {transform_indices = @transform_1, window_bounds = array<i64: 1, 3, 128>}, {pipeline_mode = #tpu.pipeline_mode<synchronous>, transform_indices = @transform_2, window_bounds = array<i64: 32, 3>}, {transform_indices = @transform_3, window_bounds = array<i64: 1, 32, 128>}, {transform_indices = @transform_4, window_bounds = array<i64: 1, 32, 1>}, {transform_indices = @transform_5, window_bounds = array<i64: 1, 32, 1>}]} {
    %c0 = arith.constant 0 : index
    %c0_0 = arith.constant 0 : index
    %c0_1 = arith.constant 0 : index
    %0 = vector.load %arg1[%c0, %c0_0, %c0_1] : memref<1x3x128xf32, #tpu.memory_space<vmem>>, vector<1x3x128xf32>
    %1 = vector.shape_cast %0 : vector<1x3x128xf32> to vector<3x128xf32>
    %c0_2 = arith.constant 0 : index
    %c0_3 = arith.constant 0 : index
    %2 = vector.load %arg3[%c0_2, %c0_3] : memref<32x3xf32, #tpu.memory_space<vmem>>, vector<32x3xf32>
    %c0_4 = arith.constant 0 : index
    %c0_5 = arith.constant 0 : index
    %c0_6 = arith.constant 0 : index
    %3 = vector.load %arg2[%c0_4, %c0_5, %c0_6] : memref<1x3x128xi32, #tpu.memory_space<vmem>>, vector<1x3x128xi32>
    %4 = vector.shape_cast %3 : vector<1x3x128xi32> to vector<3x128xi32>
    %c0_i32 = arith.constant 0 : i32
    %c127_i32 = arith.constant 127 : i32
    %5 = vector.broadcast %c0_i32 : i32 to vector<3x128xi32>
    %6 = arith.maxsi %5, %4 : vector<3x128xi32>
    %7 = vector.broadcast %c127_i32 : i32 to vector<3x128xi32>
    %8 = arith.minsi %7, %6 : vector<3x128xi32>
    %9 = arith.mulf %1, %1 : vector<3x128xf32>
    %cst = arith.constant dense<0.000000e+00> : vector<128xf32>
    %10 = vector.multi_reduction <add>, %9, %cst [0] : vector<3x128xf32> to vector<128xf32>
    %11 = vector.shape_cast %10 : vector<128xf32> to vector<1x128xf32>
    %cst_7 = arith.constant 1.000000e-24 : f32
    %12 = vector.broadcast %cst_7 : f32 to vector<1x128xf32>
    %13 = arith.maximumf %11, %12 : vector<1x128xf32>
    %14 = math.rsqrt %13 : vector<1x128xf32>
    %15 = vector.broadcast %14 : vector<1x128xf32> to vector<3x128xf32>
    %16 = arith.mulf %1, %15 : vector<3x128xf32>
    %17 = vector.extract_strided_slice %2 {offsets = [0, 0], sizes = [32, 1], strides = [1, 1]} : vector<32x3xf32> to vector<32x1xf32>
    %18 = vector.extract_strided_slice %16 {offsets = [0, 0], sizes = [1, 128], strides = [1, 1]} : vector<3x128xf32> to vector<1x128xf32>
    %19 = vector.broadcast %17 : vector<32x1xf32> to vector<32x128xf32>
    %20 = vector.broadcast %18 : vector<1x128xf32> to vector<32x128xf32>
    %21 = arith.mulf %19, %20 : vector<32x128xf32>
    %22 = vector.extract_strided_slice %2 {offsets = [0, 1], sizes = [32, 1], strides = [1, 1]} : vector<32x3xf32> to vector<32x1xf32>
    %23 = vector.extract_strided_slice %16 {offsets = [1, 0], sizes = [1, 128], strides = [1, 1]} : vector<3x128xf32> to vector<1x128xf32>
    %24 = vector.broadcast %22 : vector<32x1xf32> to vector<32x128xf32>
    %25 = vector.broadcast %23 : vector<1x128xf32> to vector<32x128xf32>
    %26 = arith.mulf %24, %25 : vector<32x128xf32>
    %27 = arith.addf %21, %26 : vector<32x128xf32>
    %28 = vector.extract_strided_slice %2 {offsets = [0, 2], sizes = [32, 1], strides = [1, 1]} : vector<32x3xf32> to vector<32x1xf32>
    %29 = vector.extract_strided_slice %16 {offsets = [2, 0], sizes = [1, 128], strides = [1, 1]} : vector<3x128xf32> to vector<1x128xf32>
    %30 = vector.broadcast %28 : vector<32x1xf32> to vector<32x128xf32>
    %31 = vector.broadcast %29 : vector<1x128xf32> to vector<32x128xf32>
    %32 = arith.mulf %30, %31 : vector<32x128xf32>
    %33 = arith.addf %27, %32 : vector<32x128xf32>
    %34 = tpu.iota {dimensions = array<i32: 0>} : vector<128x384xi32>
    %35 = vector.extract_strided_slice %8 {offsets = [0, 0], sizes = [1, 128], strides = [1, 1]} : vector<3x128xi32> to vector<1x128xi32>
    %36 = vector.shape_cast %35 : vector<1x128xi32> to vector<1x128xi32>
    %37 = vector.broadcast %36 : vector<1x128xi32> to vector<128x128xi32>
    %38 = vector.extract_strided_slice %8 {offsets = [1, 0], sizes = [1, 128], strides = [1, 1]} : vector<3x128xi32> to vector<1x128xi32>
    %39 = vector.shape_cast %38 : vector<1x128xi32> to vector<1x128xi32>
    %40 = vector.broadcast %39 : vector<1x128xi32> to vector<128x128xi32>
    %41 = vector.extract_strided_slice %8 {offsets = [2, 0], sizes = [1, 128], strides = [1, 1]} : vector<3x128xi32> to vector<1x128xi32>
    %42 = vector.shape_cast %41 : vector<1x128xi32> to vector<1x128xi32>
    %43 = vector.broadcast %42 : vector<1x128xi32> to vector<128x128xi32>
    %44 = tpu.concatenate %37, %40, %43 in 1 : vector<128x128xi32>, vector<128x128xi32>, vector<128x128xi32> -> vector<128x384xi32>
    %45 = arith.cmpi eq, %34, %44 : vector<128x384xi32>
    %46 = arith.extui %45 : vector<128x384xi1> to vector<128x384xi32>
    %47 = arith.sitofp %46 : vector<128x384xi32> to vector<128x384xf32>
    %cst_8 = arith.constant dense<0.000000e+00> : vector<32x384xf32>
    %48 = tpu.matmul %33, %47, %cst_8 {dimension_numbers = #tpu.dot_dimension_numbers<[1], [0], [0], [1], [0, 0, 1, 1], [], []>, precision = #tpu.contract_precision<fp32>} : vector<32x128xf32>, vector<128x384xf32>, vector<32x384xf32> -> vector<32x384xf32>
    %49 = vector.extract_strided_slice %48 {offsets = [0, 0], sizes = [32, 128], strides = [1, 1]} : vector<32x384xf32> to vector<32x128xf32>
    %50 = arith.maximumf %33, %49 : vector<32x128xf32>
    %51 = vector.extract_strided_slice %48 {offsets = [0, 128], sizes = [32, 128], strides = [1, 1]} : vector<32x384xf32> to vector<32x128xf32>
    %52 = arith.maximumf %50, %51 : vector<32x128xf32>
    %53 = vector.extract_strided_slice %48 {offsets = [0, 256], sizes = [32, 128], strides = [1, 1]} : vector<32x384xf32> to vector<32x128xf32>
    %54 = arith.maximumf %52, %53 : vector<32x128xf32>
    %c0_9 = arith.constant 0 : index
    %c0_10 = arith.constant 0 : index
    %c0_11 = arith.constant 0 : index
    %55 = vector.load %arg4[%c0_9, %c0_10, %c0_11] : memref<1x32x128xf32, #tpu.memory_space<vmem>>, vector<1x32x128xf32>
    %56 = vector.shape_cast %55 : vector<1x32x128xf32> to vector<32x128xf32>
    %57 = vector.shape_cast %54 : vector<32x128xf32> to vector<1x32x128xf32>
    tpu.vector_store %arg4[%c0_9, %c0_10, %c0_11], %57 {strides = array<i32>} : memref<1x32x128xf32, #tpu.memory_space<vmem>>, vector<1x32x128xf32>,
    %cst_12 = arith.constant dense<0.000000e+00> : vector<32xf32>
    %58 = vector.multi_reduction <add>, %54, %cst_12 [1] : vector<32x128xf32> to vector<32xf32>
    %59 = vector.shape_cast %58 : vector<32xf32> to vector<32x1xf32>
    %c0_13 = arith.constant 0 : index
    %c0_14 = arith.constant 0 : index
    %c0_15 = arith.constant 0 : index
    %60 = vector.load %arg5[%c0_13, %c0_14, %c0_15] : memref<1x32x1xf32, #tpu.memory_space<vmem>>, vector<1x32x1xf32>
    %61 = vector.shape_cast %60 : vector<1x32x1xf32> to vector<32x1xf32>
    %62 = vector.shape_cast %59 : vector<32x1xf32> to vector<1x32x1xf32>
    tpu.vector_store %arg5[%c0_13, %c0_14, %c0_15], %62 {strides = array<i32>} : memref<1x32x1xf32, #tpu.memory_space<vmem>>, vector<1x32x1xf32>,
    %63 = arith.mulf %54, %54 : vector<32x128xf32>
    %cst_16 = arith.constant dense<0.000000e+00> : vector<32xf32>
    %64 = vector.multi_reduction <add>, %63, %cst_16 [1] : vector<32x128xf32> to vector<32xf32>
    %65 = vector.shape_cast %64 : vector<32xf32> to vector<32x1xf32>
    %c0_17 = arith.constant 0 : index
    %c0_18 = arith.constant 0 : index
    %c0_19 = arith.constant 0 : index
    %66 = vector.load %arg6[%c0_17, %c0_18, %c0_19] : memref<1x32x1xf32, #tpu.memory_space<vmem>>, vector<1x32x1xf32>
    %67 = vector.shape_cast %66 : vector<1x32x1xf32> to vector<32x1xf32>
    %68 = vector.shape_cast %65 : vector<32x1xf32> to vector<1x32x1xf32>
    tpu.vector_store %arg6[%c0_17, %c0_18, %c0_19], %68 {strides = array<i32>} : memref<1x32x1xf32, #tpu.memory_space<vmem>>, vector<1x32x1xf32>,
    return
  }
  func.func @transform_0(%arg0: i32) -> (i32, i32, i32) {
    %c0_i32 = arith.constant 0 : i32
    %c0_i32_0 = arith.constant 0 : i32
    %c0_i32_1 = arith.constant 0 : i32
    return %arg0, %c0_i32, %c0_i32_0 : i32, i32, i32
  }
  func.func @transform_1(%arg0: i32) -> (i32, i32, i32) {
    %c0_i32 = arith.constant 0 : i32
    %c0_i32_0 = arith.constant 0 : i32
    %c0_i32_1 = arith.constant 0 : i32
    return %arg0, %c0_i32, %c0_i32_0 : i32, i32, i32
  }
  func.func @transform_2(%arg0: i32) -> (i32, i32) {
    %c0_i32 = arith.constant 0 : i32
    %c0_i32_0 = arith.constant 0 : i32
    %c0_i32_1 = arith.constant 0 : i32
    return %c0_i32, %c0_i32_0 : i32, i32
  }
  func.func @transform_3(%arg0: i32) -> (i32, i32, i32) {
    %c0_i32 = arith.constant 0 : i32
    %c0_i32_0 = arith.constant 0 : i32
    %c0_i32_1 = arith.constant 0 : i32
    return %arg0, %c0_i32, %c0_i32_0 : i32, i32, i32
  }
  func.func @transform_4(%arg0: i32) -> (i32, i32, i32) {
    %c0_i32 = arith.constant 0 : i32
    %c0_i32_0 = arith.constant 0 : i32
    %c0_i32_1 = arith.constant 0 : i32
    return %arg0, %c0_i32, %c0_i32_0 : i32, i32, i32
  }
  func.func @transform_5(%arg0: i32) -> (i32, i32, i32) {
    %c0_i32 = arith.constant 0 : i32
    %c0_i32_0 = arith.constant 0 : i32
    %c0_i32_1 = arith.constant 0 : i32
    return %arg0, %c0_i32, %c0_i32_0 : i32, i32, i32
  }
}

</mosaic_0001>

<llo_original>
// kernel: tpu_custom_call.1
$region0: #{tpu_custom_call.1}
  #allocation0 [shape = 'u32[]', space=smem, size = 0x4, offset = 0x4, fixed_abs, tag = 'smem constant byte address 0x4 - core index']
  #allocation1 [shape = 'u32[144,128]{1,0:T(1,128)}', space=vmem, size = 0x12000, scoped, tag = 'internal scratch']
  %s0 = inlined_call_operand.vmem [shape: f32[2,3,128], index: 0, kind: input, shape index: {}]
  %s1 = inlined_call_operand.vmem [shape: s32[2,3,128], index: 1, kind: input, shape index: {}]
  %s2 = inlined_call_operand.vmem [shape: f32[32,3], index: 2, kind: input, shape index: {}]
  %s3 = inlined_call_operand.hbm [shape: f32[2,32,128], index: 3, kind: output, shape index: {0}]
  %s4 = inlined_call_operand.vmem [shape: f32[2,32,1], index: 4, kind: output, shape index: {1}]
  %s5 = inlined_call_operand.vmem [shape: f32[2,32,1], index: 5, kind: output, shape index: {2}]
  %6 = xla_tuple %s3, %s4, %s5
  %s7 = sld [smem:[#allocation0]]
  $region61: #{tpu_custom_call.1} parent=0
    _
  %s9 = ssub.s32 1, %s7
  %s10 = scalar_select 0, %s9, %s7
  $region1: #{tpu_custom_call.1} parent=0
    #allocation2 [shape = 'u8[32768]{0}', space=vmem, size = 0x8000, scoped, tag = 'output window, operand 0']
    #allocation3 [shape = 's32[2]{0}', space=sflag, size = 0x8, scoped, tag = 'scoped memory for tpu_custom_call.1']
    %11 = vsyncpa [#allocation3], 0
    %s12 = scalar_lea.sflag [#allocation3], 1
    %13 = vsyncpa %s12, 0
    loop: start=0, step=1, limit=4
    $region2: #{tpu_custom_call.1} parent=1 // loop_pre_header
      _
    $region3: #{tpu_custom_call.1} parent=1 // loop_header
      %s15 = sphi 0, %s19
      %p16 = scmp.ge.s32.totalorder %s15, 4
      %s25 = sphi 0, %s27
      %s28 = sphi 0, %s25
      %s29 = sphi 0, %s28
      %s45 = sphi 0, %s29
      %s51 = sphi 0, %s53
      %s54 = sphi 0, %s51
      %s55 = sphi 0, %s54
      %s71 = sphi 0, %s55
      %s75 = sphi 0, %s75
      %s77 = sphi 0, %s75
      %s78 = sphi 0, %s77
      %s92 = sphi 0, %s78
      %s98 = sphi 0, %s100
      %s101 = sphi 0, %s98
      %s102 = sphi 0, %s101
      %s118 = sphi 0, %s102
      %s124 = sphi 0, %s126
      %s127 = sphi 0, %s124
      %s128 = sphi 0, %s127
      %s144 = sphi 0, %s128
      %s150 = sphi 0, %s152
      %s153 = sphi 0, %s150
      %s154 = sphi 0, %s153
      %s170 = sphi 0, %s154
    $region4: #{tpu_custom_call.1} parent=1 // loop_header_branch
      %18 = sbr.rel (%p16) target = $region8
    $region5: #{tpu_custom_call.1} parent=1 // loop_body
      %s20 = ssub.s32 %s15, 1
      %s21 = ssub.s32 %s15, 2
      %s22 = sadd.s32 %s15, 1
      %s23 = ssub.s32 %s15, %s22
      %p24 = scmp.eq.s32.totalorder %s23, 0
      %s26 = sadd.s32 %s25, 1
      %s27 = scalar_select %p24, %s25, %s26
      %p30 = pneg %p24
      %p31 = scmp.eq.s32.totalorder %s15, 1
      %p32 = por %p30, %p31
      %p33 = scmp.ne.s32.totalorder %s25, %s28
      %p34 = scmp.eq.s32.totalorder %s15, 0
      %p35 = por %p33, %p34
      %p36 = scmp.ne.s32.totalorder %s25, %s28
      %p37 = scmp.eq.s32.totalorder %s20, 1
      %p38 = por %p36, %p37
      %p39 = scmp.ne.s32.totalorder %s28, %s29
      %p40 = scmp.eq.s32.totalorder %s20, 0
      %p41 = por %p39, %p40
      %p42 = scmp.ne.s32.totalorder %s28, %s29
      %p43 = scmp.eq.s32.totalorder %s21, 1
      %p44 = por %p42, %p43
      %p46 = scmp.ne.s32.totalorder %s29, %s45
      %p47 = scmp.eq.s32.totalorder %s21, 0
      %p48 = por %p46, %p47
      %s49 = ssub.s32 %s15, %s22
      %p50 = scmp.eq.s32.totalorder %s49, 0
      %s52 = sadd.s32 %s51, 1
      %s53 = scalar_select %p50, %s51, %s52
      %p56 = pneg %p50
      %p57 = scmp.eq.s32.totalorder %s15, 1
      %p58 = por %p56, %p57
      %p59 = scmp.ne.s32.totalorder %s51, %s54
      %p60 = scmp.eq.s32.totalorder %s15, 0
      %p61 = por %p59, %p60
      %p62 = scmp.ne.s32.totalorder %s51, %s54
      %p63 = scmp.eq.s32.totalorder %s20, 1
      %p64 = por %p62, %p63
      %p65 = scmp.ne.s32.totalorder %s54, %s55
      %p66 = scmp.eq.s32.totalorder %s20, 0
      %p67 = por %p65, %p66
      %p68 = scmp.ne.s32.totalorder %s54, %s55
      %p69 = scmp.eq.s32.totalorder %s21, 1
      %p70 = por %p68, %p69
      %p72 = scmp.ne.s32.totalorder %s55, %s71
      %p73 = scmp.eq.s32.totalorder %s21, 0
      %p74 = por %p72, %p73
      %s76 = sadd.s32 %s75, 1
      %p79 = scmp.eq.s32.totalorder %s15, 1
      %p80 = scmp.ne.s32.totalorder %s75, %s77
      %p81 = scmp.eq.s32.totalorder %s15, 0
      %p82 = por %p80, %p81
      %p83 = scmp.ne.s32.totalorder %s75, %s77
      %p84 = scmp.eq.s32.totalorder %s20, 1
      %p85 = por %p83, %p84
      %p86 = scmp.ne.s32.totalorder %s77, %s78
      %p87 = scmp.eq.s32.totalorder %s20, 0
      %p88 = por %p86, %p87
      %p89 = scmp.ne.s32.totalorder %s77, %s78
      %p90 = scmp.eq.s32.totalorder %s21, 1
      %p91 = por %p89, %p90
      %p93 = scmp.ne.s32.totalorder %s78, %s92
      %p94 = scmp.eq.s32.totalorder %s21, 0
      %p95 = por %p93, %p94
      %s96 = ssub.s32 %s15, %s22
      %p97 = scmp.eq.s32.totalorder %s96, 0
      %s99 = sadd.s32 %s98, 1
      %s100 = scalar_select %p97, %s98, %s99
      %p103 = pneg %p97
      %p104 = scmp.eq.s32.totalorder %s15, 1
      %p105 = por %p103, %p104
      %p106 = scmp.ne.s32.totalorder %s98, %s101
      %p107 = scmp.eq.s32.totalorder %s15, 0
      %p108 = por %p106, %p107
      %p109 = scmp.ne.s32.totalorder %s98, %s101
      %p110 = scmp.eq.s32.totalorder %s20, 1
      %p111 = por %p109, %p110
      %p112 = scmp.ne.s32.totalorder %s101, %s102
      %p113 = scmp.eq.s32.totalorder %s20, 0
      %p114 = por %p112, %p113
      %p115 = scmp.ne.s32.totalorder %s101, %s102
      %p116 = scmp.eq.s32.totalorder %s21, 1
      %p117 = por %p115, %p116
      %p119 = scmp.ne.s32.totalorder %s102, %s118
      %p120 = scmp.eq.s32.totalorder %s21, 0
      %p121 = por %p119, %p120
      %s122 = ssub.s32 %s15, %s22
      %p123 = scmp.eq.s32.totalorder %s122, 0
      %s125 = sadd.s32 %s124, 1
      %s126 = scalar_select %p123, %s124, %s125
      %p129 = pneg %p123
      %p130 = scmp.eq.s32.totalorder %s15, 1
      %p131 = por %p129, %p130
      %p132 = scmp.ne.s32.totalorder %s124, %s127
      %p133 = scmp.eq.s32.totalorder %s15, 0
      %p134 = por %p132, %p133
      %p135 = scmp.ne.s32.totalorder %s124, %s127
      %p136 = scmp.eq.s32.totalorder %s20, 1
      %p137 = por %p135, %p136
      %p138 = scmp.ne.s32.totalorder %s127, %s128
      %p139 = scmp.eq.s32.totalorder %s20, 0
      %p140 = por %p138, %p139
      %p141 = scmp.ne.s32.totalorder %s127, %s128
      %p142 = scmp.eq.s32.totalorder %s21, 1
      %p143 = por %p141, %p142
      %p145 = scmp.ne.s32.totalorder %s128, %s144
      %p146 = scmp.eq.s32.totalorder %s21, 0
      %p147 = por %p145, %p146
      %s148 = ssub.s32 %s15, %s22
      %p149 = scmp.eq.s32.totalorder %s148, 0
      %s151 = sadd.s32 %s150, 1
      %s152 = scalar_select %p149, %s150, %s151
      %p155 = pneg %p149
      %p156 = scmp.eq.s32.totalorder %s15, 1
      %p157 = por %p155, %p156
      %p158 = scmp.ne.s32.totalorder %s150, %s153
      %p159 = scmp.eq.s32.totalorder %s15, 0
      %p160 = por %p158, %p159
      %p161 = scmp.ne.s32.totalorder %s150, %s153
      %p162 = scmp.eq.s32.totalorder %s20, 1
      %p163 = por %p161, %p162
      %p164 = scmp.ne.s32.totalorder %s153, %s154
      %p165 = scmp.eq.s32.totalorder %s20, 0
      %p166 = por %p164, %p165
      %p167 = scmp.ne.s32.totalorder %s153, %s154
      %p168 = scmp.eq.s32.totalorder %s21, 1
      %p169 = por %p167, %p168
      %p171 = scmp.ne.s32.totalorder %s154, %s170
      %p172 = scmp.eq.s32.totalorder %s21, 0
      %p173 = por %p171, %p172
      %p174 = scmp.le.s32.totalorder 1, %s15
      %p175 = scmp.lt.s32.totalorder %s15, 3
      %p176 = pnand %p174, %p175
      %p177 = pneg %p176
      // Predicated region
      $region9: #{tpu_custom_call.1} parent=5 // pred_check
        _
      $region10: #{tpu_custom_call.1} parent=5 // pred_check_branch
        %179 = sbr.rel (%p176) target = $region12
      $region11: #{tpu_custom_call.1} parent=5 // pred_region
        %s180 = ssub.s32 %s15, 1
        // Predicated region
        $region13: #{tpu_custom_call.1} parent=11 // pred_check
          %p181 = pneg %p88
        $region14: #{tpu_custom_call.1} parent=11 // pred_check_branch
          %183 = sbr.rel (%p181) target = $region16
        $region15: #{tpu_custom_call.1} parent=11 // pred_region
          _
        $region16: #{tpu_custom_call.1} parent=11 // pred_fallthru
          _
      $region12: #{tpu_custom_call.1} parent=5 // pred_fallthru
        _
      %p184 = scmp.lt.s32.totalorder %s15, 2
      // Predicated region
      $region17: #{tpu_custom_call.1} parent=5 // pred_check
        %p185 = pneg %p184
      $region18: #{tpu_custom_call.1} parent=5 // pred_check_branch
        %187 = sbr.rel (%p185) target = $region20
      $region19: #{tpu_custom_call.1} parent=5 // pred_region
        // Predicated region
        $region21: #{tpu_custom_call.1} parent=19 // pred_check
          %p188 = pneg %p35
        $region22: #{tpu_custom_call.1} parent=19 // pred_check_branch
          %190 = sbr.rel (%p188) target = $region24
        $region23: #{tpu_custom_call.1} parent=19 // pred_region
          %p191 = scmp.lt.s32.totalorder %s15, 1
          %s192 = scalar_select %p191, %s15, 1
          %s193 = smul.addr %s192, 4
          %s194 = scalar_lea.vmem %s0, %s193
        $region24: #{tpu_custom_call.1} parent=19 // pred_fallthru
          _
        // Predicated region
        $region25: #{tpu_custom_call.1} parent=19 // pred_check
          %p195 = pneg %p61
        $region26: #{tpu_custom_call.1} parent=19 // pred_check_branch
          %197 = sbr.rel (%p195) target = $region28
        $region27: #{tpu_custom_call.1} parent=19 // pred_region
          %p198 = scmp.lt.s32.totalorder %s15, 1
          %s199 = scalar_select %p198, %s15, 1
          %s200 = smul.addr %s199, 4
          %s201 = scalar_lea.vmem %s1, %s200
        $region28: #{tpu_custom_call.1} parent=19 // pred_fallthru
          _
      $region20: #{tpu_custom_call.1} parent=5 // pred_fallthru
        _
      %p202 = scmp.le.s32.totalorder 1, %s15
      %p203 = scmp.lt.s32.totalorder %s15, 3
      %p204 = pnand %p202, %p203
      %p205 = pneg %p204
      // Predicated region
      $region29: #{tpu_custom_call.1} parent=5 // pred_check
        _
      $region30: #{tpu_custom_call.1} parent=5 // pred_check_branch
        %207 = sbr.rel (%p204) target = $region32
      $region31: #{tpu_custom_call.1} parent=5 // pred_region
        %s208 = ssub.s32 %s15, 1
        %p209 = scmp.lt.s32.totalorder %s20, 1
        %s210 = scalar_select %p209, %s20, 1
        %s211 = smul.addr %s210, 4
        %s212 = scalar_lea.vmem %s0, %s211
        %p213 = pneg %p41
        %p214 = pneg %p38
        %p215 = scmp.lt.s32.totalorder %s20, 1
        %s216 = scalar_select %p215, %s20, 1
        %s217 = smul.addr %s216, 4
        %s218 = scalar_lea.vmem %s1, %s217
        %p219 = pneg %p67
        %p220 = pneg %p64
        %p221 = pneg %p88
        %p222 = pneg %p85
        %p223 = pneg %p114
        %p224 = pneg %p111
        %s225 = sand.u32 %s101, 1
        %s226 = scalar_lea.sflag [#allocation3], %s225
        %s227 = sand.u32 %s101, 1
        %s228 = smul.addr %s227, 32
        %s229 = scalar_lea.vmem [#allocation2], %s228
        %p230 = pneg %p140
        %p231 = pneg %p137
        %p232 = scmp.lt.s32.totalorder %s20, 1
        %s233 = scalar_select %p232, %s20, 1
        %s234 = smul.addr %s233, 4
        %s235 = smul.addr %s234, 8
        %s236 = scalar_lea.vmem %s4, %s235
        %p237 = pneg %p166
        %p238 = pneg %p163
        %p239 = scmp.lt.s32.totalorder %s20, 1
        %s240 = scalar_select %p239, %s20, 1
        %s241 = smul.addr %s240, 4
        %s242 = smul.addr %s241, 8
        %s243 = scalar_lea.vmem %s5, %s242
        %p244 = scmp.lt.s32.totalorder %s20, 1
        %s245 = scalar_select %p244, %s20, 1
        %s246 = smul.addr %s245, 4
        %s247 = scalar_lea.vmem %s0, %s246
        %p248 = scmp.lt.s32.totalorder %s20, 1
        %s249 = scalar_select %p248, %s20, 1
        %s250 = smul.addr %s249, 4
        %s251 = scalar_lea.vmem %s1, %s250
        %p252 = scmp.lt.s32.totalorder %s20, 1
        %s253 = scalar_select %p252, %s20, 1
        %s254 = smul.addr %s253, 4
        %s255 = smul.addr %s254, 8
        %s256 = scalar_lea.vmem %s4, %s255
        %p257 = scmp.lt.s32.totalorder %s20, 1
        %s258 = scalar_select %p257, %s20, 1
        %s259 = smul.addr %s258, 4
        %s260 = smul.addr %s259, 8
        %s261 = scalar_lea.vmem %s5, %s260
        %v262 = vld [vmem:[%s247] sm:$0x7]
        %v263 = vld [vmem:[%s2] sm:$0xff]
        %v264 = vld [vmem:[%s2 + $0x8] sm:$0xff]
        %v265 = vld [vmem:[%s2 + $0x10] sm:$0xff]
        %v266 = vld [vmem:[%s2 + $0x18] sm:$0xff]
        %v267 = vld [vmem:[%s251] sm:$0x7]
        %vm268 = vcmp.gt.s32.totalorder %v267, 0
        %v269 = vsel %vm268, %v267, 0
        %vm270 = vcmp.lt.s32.totalorder %v269, 127
        %v271 = vsel %vm270, %v269, 127
        %v272 = vmul.f32 %v262, %v262
        %vm273 = vcmask 1042432
        %v274 = vsel %vm273, %v272, 0.0
        %v275 = vrot.slane %v274, 4
        %v276 = vadd.f32 %v274, %v275
        %v277 = vrot.slane %v276, 2
        %v278 = vadd.f32 %v276, %v277
        %v279 = vrot.slane %v278, 1
        %v280 = vadd.f32 %v278, %v279
        %v281 = vmax.f32 %v280, 1e-24
        %v282 = vrsqrt.pop %v281
        %v283 = vmul.f32 %v262, %v282
        %285 = vset.pattern.permute.xlu0 0
        %286 = vperm.xlu0 %285, %v263
        %v287 = vpop.permute.xlu0 %286
        %290 = vset.pattern.permute.xlu0 0
        %291 = vperm.xlu0 %290, %v264
        %v292 = vpop.permute.xlu0 %291
        %295 = vset.pattern.permute.xlu0 0
        %296 = vperm.xlu0 %295, %v265
        %v297 = vpop.permute.xlu0 %296
        %300 = vset.pattern.permute.xlu0 0
        %301 = vperm.xlu0 %300, %v266
        %v302 = vpop.permute.xlu0 %301
        %v304 = vlaneseq
        %v305 = vshrl.u32 %v304, 7
        %v306 = vsub.s32 0, %v305
        %v307 = vrot.slane %v283, %v306
        %v308 = vmul.f32 %v287, %v307
        %v309 = vmul.f32 %v292, %v307
        %v310 = vmul.f32 %v297, %v307
        %v311 = vmul.f32 %v302, %v307
        %312 = vset.pattern.permute.xlu0 1
        %313 = vperm.xlu0 %312, %v263
        %v314 = vpop.permute.xlu0 %313
        %316 = vset.pattern.permute.xlu0 1
        %317 = vperm.xlu0 %316, %v264
        %v318 = vpop.permute.xlu0 %317
        %320 = vset.pattern.permute.xlu0 1
        %321 = vperm.xlu0 %320, %v265
        %v322 = vpop.permute.xlu0 %321
        %324 = vset.pattern.permute.xlu0 1
        %325 = vperm.xlu0 %324, %v266
        %v326 = vpop.permute.xlu0 %325
        %v328 = vlaneseq
        %v329 = vshrl.u32 %v328, 7
        %v330 = vsub.s32 1, %v329
        %v331 = vrot.slane %v283, %v330
        %v332 = vmul.f32 %v314, %v331
        %v333 = vmul.f32 %v318, %v331
        %v334 = vmul.f32 %v322, %v331
        %v335 = vmul.f32 %v326, %v331
        %v336 = vadd.f32 %v308, %v332
        %v337 = vadd.f32 %v309, %v333
        %v338 = vadd.f32 %v310, %v334
        %v339 = vadd.f32 %v311, %v335
        %340 = vset.pattern.permute.xlu0 2
        %341 = vperm.xlu0 %340, %v263
        %v342 = vpop.permute.xlu0 %341
        %344 = vset.pattern.permute.xlu0 2
        %345 = vperm.xlu0 %344, %v264
        %v346 = vpop.permute.xlu0 %345
        %348 = vset.pattern.permute.xlu0 2
        %349 = vperm.xlu0 %348, %v265
        %v350 = vpop.permute.xlu0 %349
        %352 = vset.pattern.permute.xlu0 2
        %353 = vperm.xlu0 %352, %v266
        %v354 = vpop.permute.xlu0 %353
        %v356 = vlaneseq
        %v357 = vshrl.u32 %v356, 7
        %v358 = vsub.s32 2, %v357
        %v359 = vrot.slane %v283, %v358
        %v360 = vmul.f32 %v342, %v359
        %v361 = vmul.f32 %v346, %v359
        %v362 = vmul.f32 %v350, %v359
        %v363 = vmul.f32 %v354, %v359
        %v364 = vadd.f32 %v336, %v360
        %v365 = vadd.f32 %v337, %v361
        %v366 = vadd.f32 %v338, %v362
        %v367 = vadd.f32 %v339, %v363
        %v368 = vlaneseq
        %v369 = vshrl.u32 %v368, 7
        %v370 = vsub.s32 0, %v369
        %v371 = vrot.slane %v271, %v370
        %372 = vset.pattern.permute.xlu0 %v371
        %373 = vperm.xlu0 %372, %v364
        %v374 = vpop.permute.xlu0 %373
        %375 = vset.pattern.permute.xlu0 %v371
        %376 = vperm.xlu0 %375, %v365
        %v377 = vpop.permute.xlu0 %376
        %378 = vset.pattern.permute.xlu0 %v371
        %379 = vperm.xlu0 %378, %v366
        %v380 = vpop.permute.xlu0 %379
        %381 = vset.pattern.permute.xlu0 %v371
        %382 = vperm.xlu0 %381, %v367
        %v383 = vpop.permute.xlu0 %382
        %v384 = vmax.f32 %v364, %v374
        %v385 = vmax.f32 %v365, %v377
        %v386 = vmax.f32 %v366, %v380
        %v387 = vmax.f32 %v367, %v383
        %v388 = vlaneseq
        %v389 = vshrl.u32 %v388, 7
        %v390 = vsub.s32 1, %v389
        %v391 = vrot.slane %v271, %v390
        %392 = vset.pattern.permute.xlu0 %v391
        %393 = vperm.xlu0 %392, %v364
        %v394 = vpop.permute.xlu0 %393
        %395 = vset.pattern.permute.xlu0 %v391
        %396 = vperm.xlu0 %395, %v365
        %v397 = vpop.permute.xlu0 %396
        %398 = vset.pattern.permute.xlu0 %v391
        %399 = vperm.xlu0 %398, %v366
        %v400 = vpop.permute.xlu0 %399
        %401 = vset.pattern.permute.xlu0 %v391
        %402 = vperm.xlu0 %401, %v367
        %v403 = vpop.permute.xlu0 %402
        %v404 = vmax.f32 %v384, %v394
        %v405 = vmax.f32 %v385, %v397
        %v406 = vmax.f32 %v386, %v400
        %v407 = vmax.f32 %v387, %v403
        %v408 = vlaneseq
        %v409 = vshrl.u32 %v408, 7
        %v410 = vsub.s32 2, %v409
        %v411 = vrot.slane %v271, %v410
        %412 = vset.pattern.permute.xlu0 %v411
        %413 = vperm.xlu0 %412, %v364
        %v414 = vpop.permute.xlu0 %413
        %415 = vset.pattern.permute.xlu0 %v411
        %416 = vperm.xlu0 %415, %v365
        %v417 = vpop.permute.xlu0 %416
        %418 = vset.pattern.permute.xlu0 %v411
        %419 = vperm.xlu0 %418, %v366
        %v420 = vpop.permute.xlu0 %419
        %421 = vset.pattern.permute.xlu0 %v411
        %422 = vperm.xlu0 %421, %v367
        %v423 = vpop.permute.xlu0 %422
        %v424 = vmax.f32 %v404, %v414
        %v425 = vmax.f32 %v405, %v417
        %v426 = vmax.f32 %v406, %v420
        %v427 = vmax.f32 %v407, %v423
        %428 = vst [vmem:[%s229] sm:$0xff] %v424
        %429 = vst [vmem:[%s229 + $0x8] sm:$0xff] %v425
        %430 = vst [vmem:[%s229 + $0x10] sm:$0xff] %v426
        %431 = vst [vmem:[%s229 + $0x18] sm:$0xff] %v427
        %432 = vadd.xlane.f32.xlu0 %v424
        %v433 = vpop.xlane.xlu0 %432
        %434 = vadd.xlane.f32.xlu0 %v425
        %v435 = vpop.xlane.xlu0 %434
        %436 = vadd.xlane.f32.xlu0 %v426
        %v437 = vpop.xlane.xlu0 %436
        %438 = vadd.xlane.f32.xlu0 %v427
        %v439 = vpop.xlane.xlu0 %438
        %vm440 = vcmask 7168
        %441 = vst.msk [vmem:[%s256] sm:$0xff] %vm440, %v433
        %442 = vst.msk [vmem:[%s256 + $0x8] sm:$0xff] %vm440, %v435
        %443 = vst.msk [vmem:[%s256 + $0x10] sm:$0xff] %vm440, %v437
        %444 = vst.msk [vmem:[%s256 + $0x18] sm:$0xff] %vm440, %v439
        %v445 = vmul.f32 %v424, %v424
        %v446 = vmul.f32 %v425, %v425
        %v447 = vmul.f32 %v426, %v426
        %v448 = vmul.f32 %v427, %v427
        %449 = vadd.xlane.f32.xlu0 %v445
        %v450 = vpop.xlane.xlu0 %449
        %451 = vadd.xlane.f32.xlu0 %v446
        %v452 = vpop.xlane.xlu0 %451
        %453 = vadd.xlane.f32.xlu0 %v447
        %v454 = vpop.xlane.xlu0 %453
        %455 = vadd.xlane.f32.xlu0 %v448
        %v456 = vpop.xlane.xlu0 %455
        %457 = vst.msk [vmem:[%s261] sm:$0xff] %vm440, %v450
        %458 = vst.msk [vmem:[%s261 + $0x8] sm:$0xff] %vm440, %v452
        %459 = vst.msk [vmem:[%s261 + $0x10] sm:$0xff] %vm440, %v454
        %460 = vst.msk [vmem:[%s261 + $0x18] sm:$0xff] %vm440, %v456
        %s461 = sand.u32 %s101, 1
        %s462 = scalar_lea.sflag [#allocation3], %s461
        %s463 = sand.u32 %s101, 1
        %s464 = smul.addr %s463, 32
        %s465 = scalar_lea.vmem [#allocation2], %s464
        %p466 = scmp.lt.s32.totalorder %s20, 1
        %s467 = scalar_select %p466, %s20, 1
        %s468 = smul.addr %s467, 4
        %s469 = smul.addr %s468, 8
        %s470 = scalar_lea.vmem %s4, %s469
        %p471 = scmp.lt.s32.totalorder %s20, 1
        %s472 = scalar_select %p471, %s20, 1
        %s473 = smul.addr %s472, 4
        %s474 = smul.addr %s473, 8
        %s475 = scalar_lea.vmem %s5, %s474
        // Predicated region
        $region33: #{tpu_custom_call.1} parent=31 // pred_check
          %p476 = pneg %p111
        $region34: #{tpu_custom_call.1} parent=31 // pred_check_branch
          %478 = sbr.rel (%p476) target = $region36
        $region35: #{tpu_custom_call.1} parent=31 // pred_region
          %s480 = ssub.s32 512, 512
          %481 = vsyncadd %s462, %s480
          %s482 = smul.addr %s20, 4
          %s483 = smul.addr %s482, 128
          %s484 = scalar_lea.hbm %s3, %s483
          %s485 = sshll.u32 %s465, 4
          %s486 = int_to_ptr.vmem [resolvable:$true] %s485
          %491 = dma.vmem_to_hbm [thread:$0]  %s486, 512, %s484, %s462, 128, 128, 8
        $region36: #{tpu_custom_call.1} parent=31 // pred_fallthru
          _
        // Predicated region
        $region37: #{tpu_custom_call.1} parent=31 // pred_check
          %p492 = pneg %p137
        $region38: #{tpu_custom_call.1} parent=31 // pred_check_branch
          %494 = sbr.rel (%p492) target = $region40
        $region39: #{tpu_custom_call.1} parent=31 // pred_region
          _
        $region40: #{tpu_custom_call.1} parent=31 // pred_fallthru
          _
        // Predicated region
        $region41: #{tpu_custom_call.1} parent=31 // pred_check
          %p495 = pneg %p163
        $region42: #{tpu_custom_call.1} parent=31 // pred_check_branch
          %497 = sbr.rel (%p495) target = $region44
        $region43: #{tpu_custom_call.1} parent=31 // pred_region
          _
        $region44: #{tpu_custom_call.1} parent=31 // pred_fallthru
          _
      $region32: #{tpu_custom_call.1} parent=5 // pred_fallthru
        _
      %p498 = scmp.le.s32.totalorder 2, %s15
      // Predicated region
      $region45: #{tpu_custom_call.1} parent=5 // pred_check
        %p499 = pneg %p498
      $region46: #{tpu_custom_call.1} parent=5 // pred_check_branch
        %501 = sbr.rel (%p499) target = $region48
      $region47: #{tpu_custom_call.1} parent=5 // pred_region
        %s502 = ssub.s32 %s15, 2
        // Predicated region
        $region49: #{tpu_custom_call.1} parent=47 // pred_check
          %p503 = pneg %p117
        $region50: #{tpu_custom_call.1} parent=47 // pred_check_branch
          %505 = sbr.rel (%p503) target = $region52
        $region51: #{tpu_custom_call.1} parent=47 // pred_region
          %s506 = sand.u32 %s102, 1
          %s507 = scalar_lea.sflag [#allocation3], %s506
          %s508 = sand.u32 %s102, 1
          %s509 = smul.addr %s508, 32
          %s510 = scalar_lea.vmem [#allocation2], %s509
          %511 = dma.done %s507, 512
        $region52: #{tpu_custom_call.1} parent=47 // pred_fallthru
          _
        // Predicated region
        $region53: #{tpu_custom_call.1} parent=47 // pred_check
          %p512 = pneg %p143
        $region54: #{tpu_custom_call.1} parent=47 // pred_check_branch
          %514 = sbr.rel (%p512) target = $region56
        $region55: #{tpu_custom_call.1} parent=47 // pred_region
          %p515 = scmp.lt.s32.totalorder %s21, 1
          %s516 = scalar_select %p515, %s21, 1
          %s517 = smul.addr %s516, 4
          %s518 = smul.addr %s517, 8
          %s519 = scalar_lea.vmem %s4, %s518
        $region56: #{tpu_custom_call.1} parent=47 // pred_fallthru
          _
        // Predicated region
        $region57: #{tpu_custom_call.1} parent=47 // pred_check
          %p520 = pneg %p169
        $region58: #{tpu_custom_call.1} parent=47 // pred_check_branch
          %522 = sbr.rel (%p520) target = $region60
        $region59: #{tpu_custom_call.1} parent=47 // pred_region
          %p523 = scmp.lt.s32.totalorder %s21, 1
          %s524 = scalar_select %p523, %s21, 1
          %s525 = smul.addr %s524, 4
          %s526 = smul.addr %s525, 8
          %s527 = scalar_lea.vmem %s5, %s526
        $region60: #{tpu_custom_call.1} parent=47 // pred_fallthru
          _
      $region48: #{tpu_custom_call.1} parent=5 // pred_fallthru
        _
    $region6: #{tpu_custom_call.1} parent=1 // loop_footer
      %s19 = sadd.s32 1, %s15
    $region7: #{tpu_custom_call.1} parent=1 // loop_footer_branch
      %14 = sbr.rel target = $region3
    $region8: #{tpu_custom_call.1} parent=1 // loop_exit
      _
    %528 = vsyncpa [#allocation3], 1
    %s529 = scalar_lea.sflag [#allocation3], 1
    %530 = vsyncpa %s529, 1

// kernel: tpu_custom_call.1
$region0: #{tpu_custom_call.1}
  #allocation0 [shape = 'u32[]', space=smem, size = 0x4, offset = 0x4, fixed_abs, tag = 'smem constant byte address 0x4 - core index']
  #allocation1 [shape = 'u32[144,128]{1,0:T(1,128)}', space=vmem, size = 0x12000, scoped, tag = 'internal scratch']
  %s0 = inlined_call_operand.vmem [shape: f32[2,3,128], index: 0, kind: input, shape index: {}]
  %s1 = inlined_call_operand.vmem [shape: s32[2,3,128], index: 1, kind: input, shape index: {}]
  %s2 = inlined_call_operand.vmem [shape: f32[32,3], index: 2, kind: input, shape index: {}]
  %s3 = inlined_call_operand.hbm [shape: f32[2,32,128], index: 3, kind: output, shape index: {0}]
  %s4 = inlined_call_operand.vmem [shape: f32[2,32,1], index: 4, kind: output, shape index: {1}]
  %s5 = inlined_call_operand.vmem [shape: f32[2,32,1], index: 5, kind: output, shape index: {2}]
  %6 = xla_tuple %s3, %s4, %s5
  %s7 = sld [smem:[#allocation0]]
  $region61: #{tpu_custom_call.1} parent=0
    _
  %s9 = ssub.s32 1, %s7
  %s10 = scalar_select 0, %s9, %s7
  $region1: #{tpu_custom_call.1} parent=0
    #allocation2 [shape = 'u8[32768]{0}', space=vmem, size = 0x8000, scoped, tag = 'output window, operand 0']
    #allocation3 [shape = 's32[2]{0}', space=sflag, size = 0x8, scoped, tag = 'scoped memory for tpu_custom_call.1']
    %11 = vsyncpa [#allocation3], 0
    %s12 = scalar_lea.sflag [#allocation3], 1
    %13 = vsyncpa %s12, 0
    loop: start=0, step=1, limit=4
    $region2: #{tpu_custom_call.1} parent=1 // loop_pre_header
      _
    $region3: #{tpu_custom_call.1} parent=1 // loop_header
      %s15 = sphi 0, %s19
      %p16 = scmp.ge.s32.totalorder %s15, 4
      %s25 = sphi 0, %s27
      %s28 = sphi 0, %s25
      %s29 = sphi 0, %s28
      %s45 = sphi 0, %s29
      %s51 = sphi 0, %s53
      %s54 = sphi 0, %s51
      %s55 = sphi 0, %s54
      %s71 = sphi 0, %s55
      %s75 = sphi 0, %s75
      %s77 = sphi 0, %s75
      %s78 = sphi 0, %s77
      %s92 = sphi 0, %s78
      %s98 = sphi 0, %s100
      %s101 = sphi 0, %s98
      %s102 = sphi 0, %s101
      %s118 = sphi 0, %s102
      %s124 = sphi 0, %s126
      %s127 = sphi 0, %s124
      %s128 = sphi 0, %s127
      %s144 = sphi 0, %s128
      %s150 = sphi 0, %s152
      %s153 = sphi 0, %s150
      %s154 = sphi 0, %s153
      %s170 = sphi 0, %s154
    $region4: #{tpu_custom_call.1} parent=1 // loop_header_branch
      %18 = sbr.rel (%p16) target = $region8
    $region5: #{tpu_custom_call.1} parent=1 // loop_body
      %s20 = ssub.s32 %s15, 1
      %s21 = ssub.s32 %s15, 2
      %s22 = sadd.s32 %s15, 1
      %s23 = ssub.s32 %s15, %s22
      %p24 = scmp.eq.s32.totalorder %s23, 0
      %s26 = sadd.s32 %s25, 1
      %s27 = scalar_select %p24, %s25, %s26
      %p30 = pneg %p24
      %p31 = scmp.eq.s32.totalorder %s15, 1
      %p32 = por %p30, %p31
      %p33 = scmp.ne.s32.totalorder %s25, %s28
      %p34 = scmp.eq.s32.totalorder %s15, 0
      %p35 = por %p33, %p34
      %p36 = scmp.ne.s32.totalorder %s25, %s28
      %p37 = scmp.eq.s32.totalorder %s20, 1
      %p38 = por %p36, %p37
      %p39 = scmp.ne.s32.totalorder %s28, %s29
      %p40 = scmp.eq.s32.totalorder %s20, 0
      %p41 = por %p39, %p40
      %p42 = scmp.ne.s32.totalorder %s28, %s29
      %p43 = scmp.eq.s32.totalorder %s21, 1
      %p44 = por %p42, %p43
      %p46 = scmp.ne.s32.totalorder %s29, %s45
      %p47 = scmp.eq.s32.totalorder %s21, 0
      %p48 = por %p46, %p47
      %s49 = ssub.s32 %s15, %s22
      %p50 = scmp.eq.s32.totalorder %s49, 0
      %s52 = sadd.s32 %s51, 1
      %s53 = scalar_select %p50, %s51, %s52
      %p56 = pneg %p50
      %p57 = scmp.eq.s32.totalorder %s15, 1
      %p58 = por %p56, %p57
      %p59 = scmp.ne.s32.totalorder %s51, %s54
      %p60 = scmp.eq.s32.totalorder %s15, 0
      %p61 = por %p59, %p60
      %p62 = scmp.ne.s32.totalorder %s51, %s54
      %p63 = scmp.eq.s32.totalorder %s20, 1
      %p64 = por %p62, %p63
      %p65 = scmp.ne.s32.totalorder %s54, %s55
      %p66 = scmp.eq.s32.totalorder %s20, 0
      %p67 = por %p65, %p66
      %p68 = scmp.ne.s32.totalorder %s54, %s55
      %p69 = scmp.eq.s32.totalorder %s21, 1
      %p70 = por %p68, %p69
      %p72 = scmp.ne.s32.totalorder %s55, %s71
      %p73 = scmp.eq.s32.totalorder %s21, 0
      %p74 = por %p72, %p73
      %s76 = sadd.s32 %s75, 1
      %p79 = scmp.eq.s32.totalorder %s15, 1
      %p80 = scmp.ne.s32.totalorder %s75, %s77
      %p81 = scmp.eq.s32.totalorder %s15, 0
      %p82 = por %p80, %p81
      %p83 = scmp.ne.s32.totalorder %s75, %s77
      %p84 = scmp.eq.s32.totalorder %s20, 1
      %p85 = por %p83, %p84
      %p86 = scmp.ne.s32.totalorder %s77, %s78
      %p87 = scmp.eq.s32.totalorder %s20, 0
      %p88 = por %p86, %p87
      %p89 = scmp.ne.s32.totalorder %s77, %s78
      %p90 = scmp.eq.s32.totalorder %s21, 1
      %p91 = por %p89, %p90
      %p93 = scmp.ne.s32.totalorder %s78, %s92
      %p94 = scmp.eq.s32.totalorder %s21, 0
      %p95 = por %p93, %p94
      %s96 = ssub.s32 %s15, %s22
      %p97 = scmp.eq.s32.totalorder %s96, 0
      %s99 = sadd.s32 %s98, 1
      %s100 = scalar_select %p97, %s98, %s99
      %p103 = pneg %p97
      %p104 = scmp.eq.s32.totalorder %s15, 1
      %p105 = por %p103, %p104
      %p106 = scmp.ne.s32.totalorder %s98, %s101
      %p107 = scmp.eq.s32.totalorder %s15, 0
      %p108 = por %p106, %p107
      %p109 = scmp.ne.s32.totalorder %s98, %s101
      %p110 = scmp.eq.s32.totalorder %s20, 1
      %p111 = por %p109, %p110
      %p112 = scmp.ne.s32.totalorder %s101, %s102
      %p113 = scmp.eq.s32.totalorder %s20, 0
      %p114 = por %p112, %p113
      %p115 = scmp.ne.s32.totalorder %s101, %s102
      %p116 = scmp.eq.s32.totalorder %s21, 1
      %p117 = por %p115, %p116
      %p119 = scmp.ne.s32.totalorder %s102, %s118
      %p120 = scmp.eq.s32.totalorder %s21, 0
      %p121 = por %p119, %p120
      %s122 = ssub.s32 %s15, %s22
      %p123 = scmp.eq.s32.totalorder %s122, 0
      %s125 = sadd.s32 %s124, 1
      %s126 = scalar_select %p123, %s124, %s125
      %p129 = pneg %p123
      %p130 = scmp.eq.s32.totalorder %s15, 1
      %p131 = por %p129, %p130
      %p132 = scmp.ne.s32.totalorder %s124, %s127
      %p133 = scmp.eq.s32.totalorder %s15, 0
      %p134 = por %p132, %p133
      %p135 = scmp.ne.s32.totalorder %s124, %s127
      %p136 = scmp.eq.s32.totalorder %s20, 1
      %p137 = por %p135, %p136
      %p138 = scmp.ne.s32.totalorder %s127, %s128
      %p139 = scmp.eq.s32.totalorder %s20, 0
      %p140 = por %p138, %p139
      %p141 = scmp.ne.s32.totalorder %s127, %s128
      %p142 = scmp.eq.s32.totalorder %s21, 1
      %p143 = por %p141, %p142
      %p145 = scmp.ne.s32.totalorder %s128, %s144
      %p146 = scmp.eq.s32.totalorder %s21, 0
      %p147 = por %p145, %p146
      %s148 = ssub.s32 %s15, %s22
      %p149 = scmp.eq.s32.totalorder %s148, 0
      %s151 = sadd.s32 %s150, 1
      %s152 = scalar_select %p149, %s150, %s151
      %p155 = pneg %p149
      %p156 = scmp.eq.s32.totalorder %s15, 1
      %p157 = por %p155, %p156
      %p158 = scmp.ne.s32.totalorder %s150, %s153
      %p159 = scmp.eq.s32.totalorder %s15, 0
      %p160 = por %p158, %p159
      %p161 = scmp.ne.s32.totalorder %s150, %s153
      %p162 = scmp.eq.s32.totalorder %s20, 1
      %p163 = por %p161, %p162
      %p164 = scmp.ne.s32.totalorder %s153, %s154
      %p165 = scmp.eq.s32.totalorder %s20, 0
      %p166 = por %p164, %p165
      %p167 = scmp.ne.s32.totalorder %s153, %s154
      %p168 = scmp.eq.s32.totalorder %s21, 1
      %p169 = por %p167, %p168
      %p171 = scmp.ne.s32.totalorder %s154, %s170
      %p172 = scmp.eq.s32.totalorder %s21, 0
      %p173 = por %p171, %p172
      %p174 = scmp.le.s32.totalorder 1, %s15
      %p175 = scmp.lt.s32.totalorder %s15, 3
      %p176 = pnand %p174, %p175
      %p177 = pneg %p176
      // Predicated region
      $region9: #{tpu_custom_call.1} parent=5 // pred_check
        _
      $region10: #{tpu_custom_call.1} parent=5 // pred_check_branch
        %179 = sbr.rel (%p176) target = $region12
      $region11: #{tpu_custom_call.1} parent=5 // pred_region
        %s180 = ssub.s32 %s15, 1
        // Predicated region
        $region13: #{tpu_custom_call.1} parent=11 // pred_check
          %p181 = pneg %p88
        $region14: #{tpu_custom_call.1} parent=11 // pred_check_branch
          %183 = sbr.rel (%p181) target = $region16
        $region15: #{tpu_custom_call.1} parent=11 // pred_region
          _
        $region16: #{tpu_custom_call.1} parent=11 // pred_fallthru
          _
      $region12: #{tpu_custom_call.1} parent=5 // pred_fallthru
        _
      %p184 = scmp.lt.s32.totalorder %s15, 2
      // Predicated region
      $region17: #{tpu_custom_call.1} parent=5 // pred_check
        %p185 = pneg %p184
      $region18: #{tpu_custom_call.1} parent=5 // pred_check_branch
        %187 = sbr.rel (%p185) target = $region20
      $region19: #{tpu_custom_call.1} parent=5 // pred_region
        // Predicated region
        $region21: #{tpu_custom_call.1} parent=19 // pred_check
          %p188 = pneg %p35
        $region22: #{tpu_custom_call.1} parent=19 // pred_check_branch
          %190 = sbr.rel (%p188) target = $region24
        $region23: #{tpu_custom_call.1} parent=19 // pred_region
          %p191 = scmp.lt.s32.totalorder %s15, 1
          %s192 = scalar_select %p191, %s15, 1
          %s193 = smul.addr %s192, 4
          %s194 = scalar_lea.vmem %s0, %s193
        $region24: #{tpu_custom_call.1} parent=19 // pred_fallthru
          _
        // Predicated region
        $region25: #{tpu_custom_call.1} parent=19 // pred_check
          %p195 = pneg %p61
        $region26: #{tpu_custom_call.1} parent=19 // pred_check_branch
          %197 = sbr.rel (%p195) target = $region28
        $region27: #{tpu_custom_call.1} parent=19 // pred_region
          %p198 = scmp.lt.s32.totalorder %s15, 1
          %s199 = scalar_select %p198, %s15, 1
          %s200 = smul.addr %s199, 4
          %s201 = scalar_lea.vmem %s1, %s200
        $region28: #{tpu_custom_call.1} parent=19 // pred_fallthru
          _
      $region20: #{tpu_custom_call.1} parent=5 // pred_fallthru
        _
      %p202 = scmp.le.s32.totalorder 1, %s15
      %p203 = scmp.lt.s32.totalorder %s15, 3
      %p204 = pnand %p202, %p203
      %p205 = pneg %p204
      // Predicated region
      $region29: #{tpu_custom_call.1} parent=5 // pred_check
        _
      $region30: #{tpu_custom_call.1} parent=5 // pred_check_branch
        %207 = sbr.rel (%p204) target = $region32
      $region31: #{tpu_custom_call.1} parent=5 // pred_region
        %s208 = ssub.s32 %s15, 1
        %p209 = scmp.lt.s32.totalorder %s20, 1
        %s210 = scalar_select %p209, %s20, 1
        %s211 = smul.addr %s210, 4
        %s212 = scalar_lea.vmem %s0, %s211
        %p213 = pneg %p41
        %p214 = pneg %p38
        %p215 = scmp.lt.s32.totalorder %s20, 1
        %s216 = scalar_select %p215, %s20, 1
        %s217 = smul.addr %s216, 4
        %s218 = scalar_lea.vmem %s1, %s217
        %p219 = pneg %p67
        %p220 = pneg %p64
        %p221 = pneg %p88
        %p222 = pneg %p85
        %p223 = pneg %p114
        %p224 = pneg %p111
        %s225 = sand.u32 %s101, 1
        %s226 = scalar_lea.sflag [#allocation3], %s225
        %s227 = sand.u32 %s101, 1
        %s228 = smul.addr %s227, 32
        %s229 = scalar_lea.vmem [#allocation2], %s228
        %p230 = pneg %p140
        %p231 = pneg %p137
        %p232 = scmp.lt.s32.totalorder %s20, 1
        %s233 = scalar_select %p232, %s20, 1
        %s234 = smul.addr %s233, 4
        %s235 = smul.addr %s234, 8
        %s236 = scalar_lea.vmem %s4, %s235
        %p237 = pneg %p166
        %p238 = pneg %p163
        %p239 = scmp.lt.s32.totalorder %s20, 1
        %s240 = scalar_select %p239, %s20, 1
        %s241 = smul.addr %s240, 4
        %s242 = smul.addr %s241, 8
        %s243 = scalar_lea.vmem %s5, %s242
        %p244 = scmp.lt.s32.totalorder %s20, 1
        %s245 = scalar_select %p244, %s20, 1
        %s246 = smul.addr %s245, 4
        %s247 = scalar_lea.vmem %s0, %s246
        %p248 = scmp.lt.s32.totalorder %s20, 1
        %s249 = scalar_select %p248, %s20, 1
        %s250 = smul.addr %s249, 4
        %s251 = scalar_lea.vmem %s1, %s250
        %p252 = scmp.lt.s32.totalorder %s20, 1
        %s253 = scalar_select %p252, %s20, 1
        %s254 = smul.addr %s253, 4
        %s255 = smul.addr %s254, 8
        %s256 = scalar_lea.vmem %s4, %s255
        %p257 = scmp.lt.s32.totalorder %s20, 1
        %s258 = scalar_select %p257, %s20, 1
        %s259 = smul.addr %s258, 4
        %s260 = smul.addr %s259, 8
        %s261 = scalar_lea.vmem %s5, %s260
        %v262 = vld [vmem:[%s247] sm:$0x7]
        %v263 = vld [vmem:[%s2] sm:$0xff]
        %v264 = vld [vmem:[%s2 + $0x8] sm:$0xff]
        %v265 = vld [vmem:[%s2 + $0x10] sm:$0xff]
        %v266 = vld [vmem:[%s2 + $0x18] sm:$0xff]
        %v267 = vld [vmem:[%s251] sm:$0x7]
        %vm268 = vcmp.gt.s32.totalorder %v267, 0
        %v269 = vsel %vm268, %v267, 0
        %vm270 = vcmp.lt.s32.totalorder %v269, 127
        %v271 = vsel %vm270, %v269, 127
        %v272 = vmul.f32 %v262, %v262
        %vm273 = vcmask 1042432
        %v274 = vsel %vm273, %v272, 0.0
        %v275 = vrot.slane %v274, 4
        %v276 = vadd.f32 %v274, %v275
        %v277 = vrot.slane %v276, 2
        %v278 = vadd.f32 %v276, %v277
        %v279 = vrot.slane %v278, 1
        %v280 = vadd.f32 %v278, %v279
        %v281 = vmax.f32 %v280, 1e-24
        %v282 = vrsqrt.pop %v281
        %v283 = vmul.f32 %v262, %v282
        %285 = vset.pattern.permute.xlu0 0
        %286 = vperm.xlu0 %285, %v263
        %v287 = vpop.permute.xlu0 %286
        %290 = vset.pattern.permute.xlu0 0
        %291 = vperm.xlu0 %290, %v264
        %v292 = vpop.permute.xlu0 %291
        %295 = vset.pattern.permute.xlu0 0
        %296 = vperm.xlu0 %295, %v265
        %v297 = vpop.permute.xlu0 %296
        %300 = vset.pattern.permute.xlu0 0
        %301 = vperm.xlu0 %300, %v266
        %v302 = vpop.permute.xlu0 %301
        %v304 = vlaneseq
        %v305 = vshrl.u32 %v304, 7
        %v306 = vsub.s32 0, %v305
        %v307 = vrot.slane %v283, %v306
        %v308 = vmul.f32 %v287, %v307
        %v309 = vmul.f32 %v292, %v307
        %v310 = vmul.f32 %v297, %v307
        %v311 = vmul.f32 %v302, %v307
        %312 = vset.pattern.permute.xlu0 1
        %313 = vperm.xlu0 %312, %v263
        %v314 = vpop.permute.xlu0 %313
        %316 = vset.pattern.permute.xlu0 1
        %317 = vperm.xlu0 %316, %v264
        %v318 = vpop.permute.xlu0 %317
        %320 = vset.pattern.permute.xlu0 1
        %321 = vperm.xlu0 %320, %v265
        %v322 = vpop.permute.xlu0 %321
        %324 = vset.pattern.permute.xlu0 1
        %325 = vperm.xlu0 %324, %v266
        %v326 = vpop.permute.xlu0 %325
        %v328 = vlaneseq
        %v329 = vshrl.u32 %v328, 7
        %v330 = vsub.s32 1, %v329
        %v331 = vrot.slane %v283, %v330
        %v332 = vmul.f32 %v314, %v331
        %v333 = vmul.f32 %v318, %v331
        %v334 = vmul.f32 %v322, %v331
        %v335 = vmul.f32 %v326, %v331
        %v336 = vadd.f32 %v308, %v332
        %v337 = vadd.f32 %v309, %v333
        %v338 = vadd.f32 %v310, %v334
        %v339 = vadd.f32 %v311, %v335
        %340 = vset.pattern.permute.xlu0 2
        %341 = vperm.xlu0 %340, %v263
        %v342 = vpop.permute.xlu0 %341
        %344 = vset.pattern.permute.xlu0 2
        %345 = vperm.xlu0 %344, %v264
        %v346 = vpop.permute.xlu0 %345
        %348 = vset.pattern.permute.xlu0 2
        %349 = vperm.xlu0 %348, %v265
        %v350 = vpop.permute.xlu0 %349
        %352 = vset.pattern.permute.xlu0 2
        %353 = vperm.xlu0 %352, %v266
        %v354 = vpop.permute.xlu0 %353
        %v356 = vlaneseq
        %v357 = vshrl.u32 %v356, 7
        %v358 = vsub.s32 2, %v357
        %v359 = vrot.slane %v283, %v358
        %v360 = vmul.f32 %v342, %v359
        %v361 = vmul.f32 %v346, %v359
        %v362 = vmul.f32 %v350, %v359
        %v363 = vmul.f32 %v354, %v359
        %v364 = vadd.f32 %v336, %v360
        %v365 = vadd.f32 %v337, %v361
        %v366 = vadd.f32 %v338, %v362
        %v367 = vadd.f32 %v339, %v363
        %v368 = vlaneseq
        %v369 = vshrl.u32 %v368, 7
        %v370 = vadd.s32 %v369, 8
        %v371 = vadd.s32 %v369, 16
        %v372 = vadd.s32 %v369, 24
        %v373 = vadd.s32 %v369, 32
        %v374 = vadd.s32 %v369, 40
        %v375 = vadd.s32 %v369, 48
        %v376 = vadd.s32 %v369, 56
        %v377 = vadd.s32 %v369, 64
        %v378 = vadd.s32 %v369, 72
        %v379 = vadd.s32 %v369, 80
        %v380 = vadd.s32 %v369, 88
        %v381 = vadd.s32 %v369, 96
        %v382 = vadd.s32 %v369, 104
        %v383 = vadd.s32 %v369, 112
        %v384 = vadd.s32 %v369, 120
        %v385 = vlaneseq
        %v386 = vshrl.u32 %v385, 7
        %v387 = vsub.s32 0, %v386
        %v388 = vrot.slane %v271, %v387
        %v389 = vlaneseq
        %v390 = vshrl.u32 %v389, 7
        %v391 = vsub.s32 1, %v390
        %v392 = vrot.slane %v271, %v391
        %v393 = vlaneseq
        %v394 = vshrl.u32 %v393, 7
        %v395 = vsub.s32 2, %v394
        %v396 = vrot.slane %v271, %v395
        %vm397 = vcmp.eq.s32.totalorder %v369, %v388
        %vm398 = vcmp.eq.s32.totalorder %v369, %v392
        %vm399 = vcmp.eq.s32.totalorder %v369, %v396
        %vm400 = vcmp.eq.s32.totalorder %v370, %v388
        %vm401 = vcmp.eq.s32.totalorder %v370, %v392
        %vm402 = vcmp.eq.s32.totalorder %v370, %v396
        %vm403 = vcmp.eq.s32.totalorder %v371, %v388
        %vm404 = vcmp.eq.s32.totalorder %v371, %v392
        %vm405 = vcmp.eq.s32.totalorder %v371, %v396
        %vm406 = vcmp.eq.s32.totalorder %v372, %v388
        %vm407 = vcmp.eq.s32.totalorder %v372, %v392
        %vm408 = vcmp.eq.s32.totalorder %v372, %v396
        %vm409 = vcmp.eq.s32.totalorder %v373, %v388
        %vm410 = vcmp.eq.s32.totalorder %v373, %v392
        %vm411 = vcmp.eq.s32.totalorder %v373, %v396
        %vm412 = vcmp.eq.s32.totalorder %v374, %v388
        %vm413 = vcmp.eq.s32.totalorder %v374, %v392
        %vm414 = vcmp.eq.s32.totalorder %v374, %v396
        %vm415 = vcmp.eq.s32.totalorder %v375, %v388
        %vm416 = vcmp.eq.s32.totalorder %v375, %v392
        %vm417 = vcmp.eq.s32.totalorder %v375, %v396
        %vm418 = vcmp.eq.s32.totalorder %v376, %v388
        %vm419 = vcmp.eq.s32.totalorder %v376, %v392
        %vm420 = vcmp.eq.s32.totalorder %v376, %v396
        %vm421 = vcmp.eq.s32.totalorder %v377, %v388
        %vm422 = vcmp.eq.s32.totalorder %v377, %v392
        %vm423 = vcmp.eq.s32.totalorder %v377, %v396
        %vm424 = vcmp.eq.s32.totalorder %v378, %v388
        %vm425 = vcmp.eq.s32.totalorder %v378, %v392
        %vm426 = vcmp.eq.s32.totalorder %v378, %v396
        %vm427 = vcmp.eq.s32.totalorder %v379, %v388
        %vm428 = vcmp.eq.s32.totalorder %v379, %v392
        %vm429 = vcmp.eq.s32.totalorder %v379, %v396
        %vm430 = vcmp.eq.s32.totalorder %v380, %v388
        %vm431 = vcmp.eq.s32.totalorder %v380, %v392
        %vm432 = vcmp.eq.s32.totalorder %v380, %v396
        %vm433 = vcmp.eq.s32.totalorder %v381, %v388
        %vm434 = vcmp.eq.s32.totalorder %v381, %v392
        %vm435 = vcmp.eq.s32.totalorder %v381, %v396
        %vm436 = vcmp.eq.s32.totalorder %v382, %v388
        %vm437 = vcmp.eq.s32.totalorder %v382, %v392
        %vm438 = vcmp.eq.s32.totalorder %v382, %v396
        %vm439 = vcmp.eq.s32.totalorder %v383, %v388
        %vm440 = vcmp.eq.s32.totalorder %v383, %v392
        %vm441 = vcmp.eq.s32.totalorder %v383, %v396
        %vm442 = vcmp.eq.s32.totalorder %v384, %v388
        %vm443 = vcmp.eq.s32.totalorder %v384, %v392
        %vm444 = vcmp.eq.s32.totalorder %v384, %v396
        %v445 = vsel %vm397, 1, 0
        %v446 = vsel %vm398, 1, 0
        %v447 = vsel %vm399, 1, 0
        %v448 = vsel %vm400, 1, 0
        %v449 = vsel %vm401, 1, 0
        %v450 = vsel %vm402, 1, 0
        %v451 = vsel %vm403, 1, 0
        %v452 = vsel %vm404, 1, 0
        %v453 = vsel %vm405, 1, 0
        %v454 = vsel %vm406, 1, 0
        %v455 = vsel %vm407, 1, 0
        %v456 = vsel %vm408, 1, 0
        %v457 = vsel %vm409, 1, 0
        %v458 = vsel %vm410, 1, 0
        %v459 = vsel %vm411, 1, 0
        %v460 = vsel %vm412, 1, 0
        %v461 = vsel %vm413, 1, 0
        %v462 = vsel %vm414, 1, 0
        %v463 = vsel %vm415, 1, 0
        %v464 = vsel %vm416, 1, 0
        %v465 = vsel %vm417, 1, 0
        %v466 = vsel %vm418, 1, 0
        %v467 = vsel %vm419, 1, 0
        %v468 = vsel %vm420, 1, 0
        %v469 = vsel %vm421, 1, 0
        %v470 = vsel %vm422, 1, 0
        %v471 = vsel %vm423, 1, 0
        %v472 = vsel %vm424, 1, 0
        %v473 = vsel %vm425, 1, 0
        %v474 = vsel %vm426, 1, 0
        %v475 = vsel %vm427, 1, 0
        %v476 = vsel %vm428, 1, 0
        %v477 = vsel %vm429, 1, 0
        %v478 = vsel %vm430, 1, 0
        %v479 = vsel %vm431, 1, 0
        %v480 = vsel %vm432, 1, 0
        %v481 = vsel %vm433, 1, 0
        %v482 = vsel %vm434, 1, 0
        %v483 = vsel %vm435, 1, 0
        %v484 = vsel %vm436, 1, 0
        %v485 = vsel %vm437, 1, 0
        %v486 = vsel %vm438, 1, 0
        %v487 = vsel %vm439, 1, 0
        %v488 = vsel %vm440, 1, 0
        %v489 = vsel %vm441, 1, 0
        %v490 = vsel %vm442, 1, 0
        %v491 = vsel %vm443, 1, 0
        %v492 = vsel %vm444, 1, 0
        %v493 = vcvt.s32.f32 %v445
        %v494 = vcvt.s32.f32 %v446
        %v495 = vcvt.s32.f32 %v447
        %v496 = vcvt.s32.f32 %v448
        %v497 = vcvt.s32.f32 %v449
        %v498 = vcvt.s32.f32 %v450
        %v499 = vcvt.s32.f32 %v451
        %v500 = vcvt.s32.f32 %v452
        %v501 = vcvt.s32.f32 %v453
        %v502 = vcvt.s32.f32 %v454
        %v503 = vcvt.s32.f32 %v455
        %v504 = vcvt.s32.f32 %v456
        %v505 = vcvt.s32.f32 %v457
        %v506 = vcvt.s32.f32 %v458
        %v507 = vcvt.s32.f32 %v459
        %v508 = vcvt.s32.f32 %v460
        %v509 = vcvt.s32.f32 %v461
        %v510 = vcvt.s32.f32 %v462
        %v511 = vcvt.s32.f32 %v463
        %v512 = vcvt.s32.f32 %v464
        %v513 = vcvt.s32.f32 %v465
        %v514 = vcvt.s32.f32 %v466
        %v515 = vcvt.s32.f32 %v467
        %v516 = vcvt.s32.f32 %v468
        %v517 = vcvt.s32.f32 %v469
        %v518 = vcvt.s32.f32 %v470
        %v519 = vcvt.s32.f32 %v471
        %v520 = vcvt.s32.f32 %v472
        %v521 = vcvt.s32.f32 %v473
        %v522 = vcvt.s32.f32 %v474
        %v523 = vcvt.s32.f32 %v475
        %v524 = vcvt.s32.f32 %v476
        %v525 = vcvt.s32.f32 %v477
        %v526 = vcvt.s32.f32 %v478
        %v527 = vcvt.s32.f32 %v479
        %v528 = vcvt.s32.f32 %v480
        %v529 = vcvt.s32.f32 %v481
        %v530 = vcvt.s32.f32 %v482
        %v531 = vcvt.s32.f32 %v483
        %v532 = vcvt.s32.f32 %v484
        %v533 = vcvt.s32.f32 %v485
        %v534 = vcvt.s32.f32 %v486
        %v535 = vcvt.s32.f32 %v487
        %v536 = vcvt.s32.f32 %v488
        %v537 = vcvt.s32.f32 %v489
        %v538 = vcvt.s32.f32 %v490
        %v539 = vcvt.s32.f32 %v491
        %v540 = vcvt.s32.f32 %v492
        %v541 = vand.u32 %v494, 4294901760
        %542 = vmatprep.subr.mxu0 %v541
        %v543 = vand.u32 %v493, 4294901760
        %544 = vmatpush1.msra.mxu0 %v543
        %v545 = vand.u32 %v497, 4294901760
        %546 = vmatprep.subr.mxu0 %v545
        %v547 = vand.u32 %v496, 4294901760
        %548 = vmatpush1.msra.mxu0 %v547
        %v549 = vand.u32 %v500, 4294901760
        %550 = vmatprep.subr.mxu0 %v549
        %v551 = vand.u32 %v499, 4294901760
        %552 = vmatpush1.msra.mxu0 %v551
        %v553 = vand.u32 %v503, 4294901760
        %554 = vmatprep.subr.mxu0 %v553
        %v555 = vand.u32 %v502, 4294901760
        %556 = vmatpush1.msra.mxu0 %v555
        %v557 = vand.u32 %v506, 4294901760
        %558 = vmatprep.subr.mxu0 %v557
        %v559 = vand.u32 %v505, 4294901760
        %560 = vmatpush1.msra.mxu0 %v559
        %v561 = vand.u32 %v509, 4294901760
        %562 = vmatprep.subr.mxu0 %v561
        %v563 = vand.u32 %v508, 4294901760
        %564 = vmatpush1.msra.mxu0 %v563
        %v565 = vand.u32 %v512, 4294901760
        %566 = vmatprep.subr.mxu0 %v565
        %v567 = vand.u32 %v511, 4294901760
        %568 = vmatpush1.msra.mxu0 %v567
        %v569 = vand.u32 %v515, 4294901760
        %570 = vmatprep.subr.mxu0 %v569
        %v571 = vand.u32 %v514, 4294901760
        %572 = vmatpush1.msra.mxu0 %v571
        %v573 = vand.u32 %v518, 4294901760
        %574 = vmatprep.subr.mxu0 %v573
        %v575 = vand.u32 %v517, 4294901760
        %576 = vmatpush1.msra.mxu0 %v575
        %v577 = vand.u32 %v521, 4294901760
        %578 = vmatprep.subr.mxu0 %v577
        %v579 = vand.u32 %v520, 4294901760
        %580 = vmatpush1.msra.mxu0 %v579
        %v581 = vand.u32 %v524, 4294901760
        %582 = vmatprep.subr.mxu0 %v581
        %v583 = vand.u32 %v523, 4294901760
        %584 = vmatpush1.msra.mxu0 %v583
        %v585 = vand.u32 %v527, 4294901760
        %586 = vmatprep.subr.mxu0 %v585
        %v587 = vand.u32 %v526, 4294901760
        %588 = vmatpush1.msra.mxu0 %v587
        %v589 = vand.u32 %v530, 4294901760
        %590 = vmatprep.subr.mxu0 %v589
        %v591 = vand.u32 %v529, 4294901760
        %592 = vmatpush1.msra.mxu0 %v591
        %v593 = vand.u32 %v533, 4294901760
        %594 = vmatprep.subr.mxu0 %v593
        %v595 = vand.u32 %v532, 4294901760
        %596 = vmatpush1.msra.mxu0 %v595
        %v597 = vand.u32 %v536, 4294901760
        %598 = vmatprep.subr.mxu0 %v597
        %v599 = vand.u32 %v535, 4294901760
        %600 = vmatpush1.msra.mxu0 %v599
        %v601 = vand.u32 %v539, 4294901760
        %602 = vmatprep.subr.mxu0 %v601
        %v603 = vand.u32 %v538, 4294901760
        %604 = vmatpush1.msra.mxu0 %v603
        %605 = vmatprep.subr.mxu0 0.0
        %606 = vmatpush1.msra.mxu0 0.0
        %607 = vmatprep.subr.mxu0 0.0
        %608 = vmatpush1.msra.mxu0 0.0
        %609 = vmatprep.subr.mxu0 0.0
        %610 = vmatpush1.msra.mxu0 0.0
        %611 = vmatprep.subr.mxu0 0.0
        %612 = vmatpush1.msra.mxu0 0.0
        %613 = vmatprep.subr.mxu0 0.0
        %614 = vmatpush1.msra.mxu0 0.0
        %615 = vmatprep.subr.mxu0 0.0
        %616 = vmatpush1.msra.mxu0 0.0
        %617 = vmatprep.subr.mxu0 0.0
        %618 = vmatpush1.msra.mxu0 0.0
        %619 = vmatprep.subr.mxu0 0.0
        %620 = vmatpush1.msra.mxu0 0.0
        %621 = vmatprep.subr.mxu0 0.0
        %622 = vmatpush1.msra.mxu0 0.0
        %623 = vmatprep.subr.mxu0 0.0
        %624 = vmatpush1.msra.mxu0 0.0
        %625 = vmatprep.subr.mxu0 0.0
        %626 = vmatpush1.msra.mxu0 0.0
        %627 = vmatprep.subr.mxu0 0.0
        %628 = vmatpush1.msra.mxu0 0.0
        %629 = vmatprep.subr.mxu0 0.0
        %630 = vmatpush1.msra.mxu0 0.0
        %631 = vmatprep.subr.mxu0 0.0
        %632 = vmatpush1.msra.mxu0 0.0
        %633 = vmatprep.subr.mxu0 0.0
        %634 = vmatpush1.msra.mxu0 0.0
        %635 = vmatprep.subr.mxu0 0.0
        %636 = vmatpush1.msra.mxu0 0.0
        %637 = vmatprep.mubr.f32.mxu0 0.0
        %v638 = vand.u32 %v364, 4294901760
        %v639 = vsub.f32 %v364, %v638
        %v640 = vand.u32 %v639, 4294901760
        %v641 = vsub.f32 %v639, %v640
        %v642 = vand.u32 %v641, 4294901760
        %643 = vmatmul.mubr.f32.gmra.mrb[0].mxu0 %v642
        %v644 = vpop.f32.mrb[0].mxu0
        %v645 = vadd.f32 0.0, %v644
        %v646 = vpop.f32.mrb[0].mxu0
        %v647 = vadd.f32 0.0, %v646
        %648 = vmatprep.mubr.f32.mxu0 0.0
        %v649 = vand.u32 %v365, 4294901760
        %v650 = vsub.f32 %v365, %v649
        %v651 = vand.u32 %v650, 4294901760
        %v652 = vsub.f32 %v650, %v651
        %v653 = vand.u32 %v652, 4294901760
        %654 = vmatmul.mubr.f32.gmra.mrb[0].mxu0 %v653
        %v655 = vpop.f32.mrb[0].mxu0
        %v656 = vadd.f32 0.0, %v655
        %v657 = vpop.f32.mrb[0].mxu0
        %v658 = vadd.f32 0.0, %v657
        %659 = vmatprep.mubr.f32.mxu0 0.0
        %v660 = vand.u32 %v366, 4294901760
        %v661 = vsub.f32 %v366, %v660
        %v662 = vand.u32 %v661, 4294901760
        %v663 = vsub.f32 %v661, %v662
        %v664 = vand.u32 %v663, 4294901760
        %665 = vmatmul.mubr.f32.gmra.mrb[0].mxu0 %v664
        %v666 = vpop.f32.mrb[0].mxu0
        %v667 = vadd.f32 0.0, %v666
        %v668 = vpop.f32.mrb[0].mxu0
        %v669 = vadd.f32 0.0, %v668
        %670 = vmatprep.mubr.f32.mxu0 0.0
        %v671 = vand.u32 %v367, 4294901760
        %v672 = vsub.f32 %v367, %v671
        %v673 = vand.u32 %v672, 4294901760
        %v674 = vsub.f32 %v672, %v673
        %v675 = vand.u32 %v674, 4294901760
        %676 = vmatmul.mubr.f32.gmra.mrb[0].mxu0 %v675
        %v677 = vpop.f32.mrb[0].mxu0
        %v678 = vadd.f32 0.0, %v677
        %v679 = vpop.f32.mrb[0].mxu0
        %v680 = vadd.f32 0.0, %v679
        %681 = vdwg.mxu0
        %v682 = vand.u32 %v494, 4294901760
        %v683 = vsub.f32 %v494, %v682
        %v684 = vand.u32 %v683, 4294901760
        %v685 = vsub.f32 %v683, %v684
        %v686 = vand.u32 %v685, 4294901760
        %687 = vmatprep.subr.mxu0 %v686
        %v688 = vand.u32 %v493, 4294901760
        %v689 = vsub.f32 %v493, %v688
        %v690 = vand.u32 %v689, 4294901760
        %v691 = vsub.f32 %v689, %v690
        %v692 = vand.u32 %v691, 4294901760
        %693 = vmatpush1.msra.mxu0 %v692
        %v694 = vand.u32 %v497, 4294901760
        %v695 = vsub.f32 %v497, %v694
        %v696 = vand.u32 %v695, 4294901760
        %v697 = vsub.f32 %v695, %v696
        %v698 = vand.u32 %v697, 4294901760
        %699 = vmatprep.subr.mxu0 %v698
        %v700 = vand.u32 %v496, 4294901760
        %v701 = vsub.f32 %v496, %v700
        %v702 = vand.u32 %v701, 4294901760
        %v703 = vsub.f32 %v701, %v702
        %v704 = vand.u32 %v703, 4294901760
        %705 = vmatpush1.msra.mxu0 %v704
        %v706 = vand.u32 %v500, 4294901760
        %v707 = vsub.f32 %v500, %v706
        %v708 = vand.u32 %v707, 4294901760
        %v709 = vsub.f32 %v707, %v708
        %v710 = vand.u32 %v709, 4294901760
        %711 = vmatprep.subr.mxu0 %v710
        %v712 = vand.u32 %v499, 4294901760
        %v713 = vsub.f32 %v499, %v712
        %v714 = vand.u32 %v713, 4294901760
        %v715 = vsub.f32 %v713, %v714
        %v716 = vand.u32 %v715, 4294901760
        %717 = vmatpush1.msra.mxu0 %v716
        %v718 = vand.u32 %v503, 4294901760
        %v719 = vsub.f32 %v503, %v718
        %v720 = vand.u32 %v719, 4294901760
        %v721 = vsub.f32 %v719, %v720
        %v722 = vand.u32 %v721, 4294901760
        %723 = vmatprep.subr.mxu0 %v722
        %v724 = vand.u32 %v502, 4294901760
        %v725 = vsub.f32 %v502, %v724
        %v726 = vand.u32 %v725, 4294901760
        %v727 = vsub.f32 %v725, %v726
        %v728 = vand.u32 %v727, 4294901760
        %729 = vmatpush1.msra.mxu0 %v728
        %v730 = vand.u32 %v506, 4294901760
        %v731 = vsub.f32 %v506, %v730
        %v732 = vand.u32 %v731, 4294901760
        %v733 = vsub.f32 %v731, %v732
        %v734 = vand.u32 %v733, 4294901760
        %735 = vmatprep.subr.mxu0 %v734
        %v736 = vand.u32 %v505, 4294901760
        %v737 = vsub.f32 %v505, %v736
        %v738 = vand.u32 %v737, 4294901760
        %v739 = vsub.f32 %v737, %v738
        %v740 = vand.u32 %v739, 4294901760
        %741 = vmatpush1.msra.mxu0 %v740
        %v742 = vand.u32 %v509, 4294901760
        %v743 = vsub.f32 %v509, %v742
        %v744 = vand.u32 %v743, 4294901760
        %v745 = vsub.f32 %v743, %v744
        %v746 = vand.u32 %v745, 4294901760
        %747 = vmatprep.subr.mxu0 %v746
        %v748 = vand.u32 %v508, 4294901760
        %v749 = vsub.f32 %v508, %v748
        %v750 = vand.u32 %v749, 4294901760
        %v751 = vsub.f32 %v749, %v750
        %v752 = vand.u32 %v751, 4294901760
        %753 = vmatpush1.msra.mxu0 %v752
        %v754 = vand.u32 %v512, 4294901760
        %v755 = vsub.f32 %v512, %v754
        %v756 = vand.u32 %v755, 4294901760
        %v757 = vsub.f32 %v755, %v756
        %v758 = vand.u32 %v757, 4294901760
        %759 = vmatprep.subr.mxu0 %v758
        %v760 = vand.u32 %v511, 4294901760
        %v761 = vsub.f32 %v511, %v760
        %v762 = vand.u32 %v761, 4294901760
        %v763 = vsub.f32 %v761, %v762
        %v764 = vand.u32 %v763, 4294901760
        %765 = vmatpush1.msra.mxu0 %v764
        %v766 = vand.u32 %v515, 4294901760
        %v767 = vsub.f32 %v515, %v766
        %v768 = vand.u32 %v767, 4294901760
        %v769 = vsub.f32 %v767, %v768
        %v770 = vand.u32 %v769, 4294901760
        %771 = vmatprep.subr.mxu0 %v770
        %v772 = vand.u32 %v514, 4294901760
        %v773 = vsub.f32 %v514, %v772
        %v774 = vand.u32 %v773, 4294901760
        %v775 = vsub.f32 %v773, %v774
        %v776 = vand.u32 %v775, 4294901760
        %777 = vmatpush1.msra.mxu0 %v776
        %v778 = vand.u32 %v518, 4294901760
        %v779 = vsub.f32 %v518, %v778
        %v780 = vand.u32 %v779, 4294901760
        %v781 = vsub.f32 %v779, %v780
        %v782 = vand.u32 %v781, 4294901760
        %783 = vmatprep.subr.mxu0 %v782
        %v784 = vand.u32 %v517, 4294901760
        %v785 = vsub.f32 %v517, %v784
        %v786 = vand.u32 %v785, 4294901760
        %v787 = vsub.f32 %v785, %v786
        %v788 = vand.u32 %v787, 4294901760
        %789 = vmatpush1.msra.mxu0 %v788
        %v790 = vand.u32 %v521, 4294901760
        %v791 = vsub.f32 %v521, %v790
        %v792 = vand.u32 %v791, 4294901760
        %v793 = vsub.f32 %v791, %v792
        %v794 = vand.u32 %v793, 4294901760
        %795 = vmatprep.subr.mxu0 %v794
        %v796 = vand.u32 %v520, 4294901760
        %v797 = vsub.f32 %v520, %v796
        %v798 = vand.u32 %v797, 4294901760
        %v799 = vsub.f32 %v797, %v798
        %v800 = vand.u32 %v799, 4294901760
        %801 = vmatpush1.msra.mxu0 %v800
        %v802 = vand.u32 %v524, 4294901760
        %v803 = vsub.f32 %v524, %v802
        %v804 = vand.u32 %v803, 4294901760
        %v805 = vsub.f32 %v803, %v804
        %v806 = vand.u32 %v805, 4294901760
        %807 = vmatprep.subr.mxu0 %v806
        %v808 = vand.u32 %v523, 4294901760
        %v809 = vsub.f32 %v523, %v808
        %v810 = vand.u32 %v809, 4294901760
        %v811 = vsub.f32 %v809, %v810
        %v812 = vand.u32 %v811, 4294901760
        %813 = vmatpush1.msra.mxu0 %v812
        %v814 = vand.u32 %v527, 4294901760
        %v815 = vsub.f32 %v527, %v814
        %v816 = vand.u32 %v815, 4294901760
        %v817 = vsub.f32 %v815, %v816
        %v818 = vand.u32 %v817, 4294901760
        %819 = vmatprep.subr.mxu0 %v818
        %v820 = vand.u32 %v526, 4294901760
        %v821 = vsub.f32 %v526, %v820
        %v822 = vand.u32 %v821, 4294901760
        %v823 = vsub.f32 %v821, %v822
        %v824 = vand.u32 %v823, 4294901760
        %825 = vmatpush1.msra.mxu0 %v824
        %v826 = vand.u32 %v530, 4294901760
        %v827 = vsub.f32 %v530, %v826
        %v828 = vand.u32 %v827, 4294901760
        %v829 = vsub.f32 %v827, %v828
        %v830 = vand.u32 %v829, 4294901760
        %831 = vmatprep.subr.mxu0 %v830
        %v832 = vand.u32 %v529, 4294901760
        %v833 = vsub.f32 %v529, %v832
        %v834 = vand.u32 %v833, 4294901760
        %v835 = vsub.f32 %v833, %v834
        %v836 = vand.u32 %v835, 4294901760
        %837 = vmatpush1.msra.mxu0 %v836
        %v838 = vand.u32 %v533, 4294901760
        %v839 = vsub.f32 %v533, %v838
        %v840 = vand.u32 %v839, 4294901760
        %v841 = vsub.f32 %v839, %v840
        %v842 = vand.u32 %v841, 4294901760
        %843 = vmatprep.subr.mxu0 %v842
        %v844 = vand.u32 %v532, 4294901760
        %v845 = vsub.f32 %v532, %v844
        %v846 = vand.u32 %v845, 4294901760
        %v847 = vsub.f32 %v845, %v846
        %v848 = vand.u32 %v847, 4294901760
        %849 = vmatpush1.msra.mxu0 %v848
        %v850 = vand.u32 %v536, 4294901760
        %v851 = vsub.f32 %v536, %v850
        %v852 = vand.u32 %v851, 4294901760
        %v853 = vsub.f32 %v851, %v852
        %v854 = vand.u32 %v853, 4294901760
        %855 = vmatprep.subr.mxu0 %v854
        %v856 = vand.u32 %v535, 4294901760
        %v857 = vsub.f32 %v535, %v856
        %v858 = vand.u32 %v857, 4294901760
        %v859 = vsub.f32 %v857, %v858
        %v860 = vand.u32 %v859, 4294901760
        %861 = vmatpush1.msra.mxu0 %v860
        %v862 = vand.u32 %v539, 4294901760
        %v863 = vsub.f32 %v539, %v862
        %v864 = vand.u32 %v863, 4294901760
        %v865 = vsub.f32 %v863, %v864
        %v866 = vand.u32 %v865, 4294901760
        %867 = vmatprep.subr.mxu0 %v866
        %v868 = vand.u32 %v538, 4294901760
        %v869 = vsub.f32 %v538, %v868
        %v870 = vand.u32 %v869, 4294901760
        %v871 = vsub.f32 %v869, %v870
        %v872 = vand.u32 %v871, 4294901760
        %873 = vmatpush1.msra.mxu0 %v872
        %874 = vmatprep.subr.mxu0 0.0
        %875 = vmatpush1.msra.mxu0 0.0
        %876 = vmatprep.subr.mxu0 0.0
        %877 = vmatpush1.msra.mxu0 0.0
        %878 = vmatprep.subr.mxu0 0.0
        %879 = vmatpush1.msra.mxu0 0.0
        %880 = vmatprep.subr.mxu0 0.0
        %881 = vmatpush1.msra.mxu0 0.0
        %882 = vmatprep.subr.mxu0 0.0
        %883 = vmatpush1.msra.mxu0 0.0
        %884 = vmatprep.subr.mxu0 0.0
        %885 = vmatpush1.msra.mxu0 0.0
        %886 = vmatprep.subr.mxu0 0.0
        %887 = vmatpush1.msra.mxu0 0.0
        %888 = vmatprep.subr.mxu0 0.0
        %889 = vmatpush1.msra.mxu0 0.0
        %890 = vmatprep.subr.mxu0 0.0
        %891 = vmatpush1.msra.mxu0 0.0
        %892 = vmatprep.subr.mxu0 0.0
        %893 = vmatpush1.msra.mxu0 0.0
        %894 = vmatprep.subr.mxu0 0.0
        %895 = vmatpush1.msra.mxu0 0.0
        %896 = vmatprep.subr.mxu0 0.0
        %897 = vmatpush1.msra.mxu0 0.0
        %898 = vmatprep.subr.mxu0 0.0
        %899 = vmatpush1.msra.mxu0 0.0
        %900 = vmatprep.subr.mxu0 0.0
        %901 = vmatpush1.msra.mxu0 0.0
        %902 = vmatprep.subr.mxu0 0.0
        %903 = vmatpush1.msra.mxu0 0.0
        %904 = vmatprep.subr.mxu0 0.0
        %905 = vmatpush1.msra.mxu0 0.0
        %906 = vmatprep.mubr.f32.mxu0 0.0
        %v907 = vand.u32 %v364, 4294901760
        %908 = vmatmul.mubr.f32.gmra.mrb[0].mxu0 %v907
        %v909 = vpop.f32.mrb[0].mxu0
        %v910 = vadd.f32 %v645, %v909
        %v911 = vpop.f32.mrb[0].mxu0
        %v912 = vadd.f32 %v647, %v911
        %913 = vmatprep.mubr.f32.mxu0 0.0
        %v914 = vand.u32 %v365, 4294901760
        %915 = vmatmul.mubr.f32.gmra.mrb[0].mxu0 %v914
        %v916 = vpop.f32.mrb[0].mxu0
        %v917 = vadd.f32 %v656, %v916
        %v918 = vpop.f32.mrb[0].mxu0
        %v919 = vadd.f32 %v658, %v918
        %920 = vmatprep.mubr.f32.mxu0 0.0
        %v921 = vand.u32 %v366, 4294901760
        %922 = vmatmul.mubr.f32.gmra.mrb[0].mxu0 %v921
        %v923 = vpop.f32.mrb[0].mxu0
        %v924 = vadd.f32 %v667, %v923
        %v925 = vpop.f32.mrb[0].mxu0
        %v926 = vadd.f32 %v669, %v925
        %927 = vmatprep.mubr.f32.mxu0 0.0
        %v928 = vand.u32 %v367, 4294901760
        %929 = vmatmul.mubr.f32.gmra.mrb[0].mxu0 %v928
        %v930 = vpop.f32.mrb[0].mxu0
        %v931 = vadd.f32 %v678, %v930
        %v932 = vpop.f32.mrb[0].mxu0
        %v933 = vadd.f32 %v680, %v932
        %934 = vdwg.mxu0
        %v935 = vand.u32 %v494, 4294901760
        %v936 = vsub.f32 %v494, %v935
        %937 = vmatprep.subr.mxu0 %v936
        %v938 = vand.u32 %v493, 4294901760
        %v939 = vsub.f32 %v493, %v938
        %940 = vmatpush1.msra.mxu0 %v939
        %v941 = vand.u32 %v497, 4294901760
        %v942 = vsub.f32 %v497, %v941
        %943 = vmatprep.subr.mxu0 %v942
        %v944 = vand.u32 %v496, 4294901760
        %v945 = vsub.f32 %v496, %v944
        %946 = vmatpush1.msra.mxu0 %v945
        %v947 = vand.u32 %v500, 4294901760
        %v948 = vsub.f32 %v500, %v947
        %949 = vmatprep.subr.mxu0 %v948
        %v950 = vand.u32 %v499, 4294901760
        %v951 = vsub.f32 %v499, %v950
        %952 = vmatpush1.msra.mxu0 %v951
        %v953 = vand.u32 %v503, 4294901760
        %v954 = vsub.f32 %v503, %v953
        %955 = vmatprep.subr.mxu0 %v954
        %v956 = vand.u32 %v502, 4294901760
        %v957 = vsub.f32 %v502, %v956
        %958 = vmatpush1.msra.mxu0 %v957
        %v959 = vand.u32 %v506, 4294901760
        %v960 = vsub.f32 %v506, %v959
        %961 = vmatprep.subr.mxu0 %v960
        %v962 = vand.u32 %v505, 4294901760
        %v963 = vsub.f32 %v505, %v962
        %964 = vmatpush1.msra.mxu0 %v963
        %v965 = vand.u32 %v509, 4294901760
        %v966 = vsub.f32 %v509, %v965
        %967 = vmatprep.subr.mxu0 %v966
        %v968 = vand.u32 %v508, 4294901760
        %v969 = vsub.f32 %v508, %v968
        %970 = vmatpush1.msra.mxu0 %v969
        %v971 = vand.u32 %v512, 4294901760
        %v972 = vsub.f32 %v512, %v971
        %973 = vmatprep.subr.mxu0 %v972
        %v974 = vand.u32 %v511, 4294901760
        %v975 = vsub.f32 %v511, %v974
        %976 = vmatpush1.msra.mxu0 %v975
        %v977 = vand.u32 %v515, 4294901760
        %v978 = vsub.f32 %v515, %v977
        %979 = vmatprep.subr.mxu0 %v978
        %v980 = vand.u32 %v514, 4294901760
        %v981 = vsub.f32 %v514, %v980
        %982 = vmatpush1.msra.mxu0 %v981
        %v983 = vand.u32 %v518, 4294901760
        %v984 = vsub.f32 %v518, %v983
        %985 = vmatprep.subr.mxu0 %v984
        %v986 = vand.u32 %v517, 4294901760
        %v987 = vsub.f32 %v517, %v986
        %988 = vmatpush1.msra.mxu0 %v987
        %v989 = vand.u32 %v521, 4294901760
        %v990 = vsub.f32 %v521, %v989
        %991 = vmatprep.subr.mxu0 %v990
        %v992 = vand.u32 %v520, 4294901760
        %v993 = vsub.f32 %v520, %v992
        %994 = vmatpush1.msra.mxu0 %v993
        %v995 = vand.u32 %v524, 4294901760
        %v996 = vsub.f32 %v524, %v995
        %997 = vmatprep.subr.mxu0 %v996
        %v998 = vand.u32 %v523, 4294901760
        %v999 = vsub.f32 %v523, %v998
        %1000 = vmatpush1.msra.mxu0 %v999
        %v1001 = vand.u32 %v527, 4294901760
        %v1002 = vsub.f32 %v527, %v1001
        %1003 = vmatprep.subr.mxu0 %v1002
        %v1004 = vand.u32 %v526, 4294901760
        %v1005 = vsub.f32 %v526, %v1004
        %1006 = vmatpush1.msra.mxu0 %v1005
        %v1007 = vand.u32 %v530, 4294901760
        %v1008 = vsub.f32 %v530, %v1007
        %1009 = vmatprep.subr.mxu0 %v1008
        %v1010 = vand.u32 %v529, 4294901760
        %v1011 = vsub.f32 %v529, %v1010
        %1012 = vmatpush1.msra.mxu0 %v1011
        %v1013 = vand.u32 %v533, 4294901760
        %v1014 = vsub.f32 %v533, %v1013
        %1015 = vmatprep.subr.mxu0 %v1014
        %v1016 = vand.u32 %v532, 4294901760
        %v1017 = vsub.f32 %v532, %v1016
        %1018 = vmatpush1.msra.mxu0 %v1017
        %v1019 = vand.u32 %v536, 4294901760
        %v1020 = vsub.f32 %v536, %v1019
        %1021 = vmatprep.subr.mxu0 %v1020
        %v1022 = vand.u32 %v535, 4294901760
        %v1023 = vsub.f32 %v535, %v1022
        %1024 = vmatpush1.msra.mxu0 %v1023
        %v1025 = vand.u32 %v539, 4294901760
        %v1026 = vsub.f32 %v539, %v1025
        %1027 = vmatprep.subr.mxu0 %v1026
        %v1028 = vand.u32 %v538, 4294901760
        %v1029 = vsub.f32 %v538, %v1028
        %1030 = vmatpush1.msra.mxu0 %v1029
        %1031 = vmatprep.subr.mxu0 0.0
        %1032 = vmatpush1.msra.mxu0 0.0
        %1033 = vmatprep.subr.mxu0 0.0
        %1034 = vmatpush1.msra.mxu0 0.0
        %1035 = vmatprep.subr.mxu0 0.0
        %1036 = vmatpush1.msra.mxu0 0.0
        %1037 = vmatprep.subr.mxu0 0.0
        %1038 = vmatpush1.msra.mxu0 0.0
        %1039 = vmatprep.subr.mxu0 0.0
        %1040 = vmatpush1.msra.mxu0 0.0
        %1041 = vmatprep.subr.mxu0 0.0
        %1042 = vmatpush1.msra.mxu0 0.0
        %1043 = vmatprep.subr.mxu0 0.0
        %1044 = vmatpush1.msra.mxu0 0.0
        %1045 = vmatprep.subr.mxu0 0.0
        %1046 = vmatpush1.msra.mxu0 0.0
        %1047 = vmatprep.subr.mxu0 0.0
        %1048 = vmatpush1.msra.mxu0 0.0
        %1049 = vmatprep.subr.mxu0 0.0
        %1050 = vmatpush1.msra.mxu0 0.0
        %1051 = vmatprep.subr.mxu0 0.0
        %1052 = vmatpush1.msra.mxu0 0.0
        %1053 = vmatprep.subr.mxu0 0.0
        %1054 = vmatpush1.msra.mxu0 0.0
        %1055 = vmatprep.subr.mxu0 0.0
        %1056 = vmatpush1.msra.mxu0 0.0
        %1057 = vmatprep.subr.mxu0 0.0
        %1058 = vmatpush1.msra.mxu0 0.0
        %1059 = vmatprep.subr.mxu0 0.0
        %1060 = vmatpush1.msra.mxu0 0.0
        %1061 = vmatprep.subr.mxu0 0.0
        %1062 = vmatpush1.msra.mxu0 0.0
        %1063 = vmatprep.mubr.f32.mxu0 0.0
        %v1064 = vand.u32 %v364, 4294901760
        %v1065 = vsub.f32 %v364, %v1064
        %1066 = vmatmul.mubr.f32.gmra.mrb[0].mxu0 %v1065
        %v1067 = vpop.f32.mrb[0].mxu0
        %v1068 = vadd.f32 %v910, %v1067
        %v1069 = vpop.f32.mrb[0].mxu0
        %v1070 = vadd.f32 %v912, %v1069
        %1071 = vmatprep.mubr.f32.mxu0 0.0
        %v1072 = vand.u32 %v365, 4294901760
        %v1073 = vsub.f32 %v365, %v1072
        %1074 = vmatmul.mubr.f32.gmra.mrb[0].mxu0 %v1073
        %v1075 = vpop.f32.mrb[0].mxu0
        %v1076 = vadd.f32 %v917, %v1075
        %v1077 = vpop.f32.mrb[0].mxu0
        %v1078 = vadd.f32 %v919, %v1077
        %1079 = vmatprep.mubr.f32.mxu0 0.0
        %v1080 = vand.u32 %v366, 4294901760
        %v1081 = vsub.f32 %v366, %v1080
        %1082 = vmatmul.mubr.f32.gmra.mrb[0].mxu0 %v1081
        %v1083 = vpop.f32.mrb[0].mxu0
        %v1084 = vadd.f32 %v924, %v1083
        %v1085 = vpop.f32.mrb[0].mxu0
        %v1086 = vadd.f32 %v926, %v1085
        %1087 = vmatprep.mubr.f32.mxu0 0.0
        %v1088 = vand.u32 %v367, 4294901760
        %v1089 = vsub.f32 %v367, %v1088
        %1090 = vmatmul.mubr.f32.gmra.mrb[0].mxu0 %v1089
        %v1091 = vpop.f32.mrb[0].mxu0
        %v1092 = vadd.f32 %v931, %v1091
        %v1093 = vpop.f32.mrb[0].mxu0
        %v1094 = vadd.f32 %v933, %v1093
        %1095 = vdwg.mxu0
        %v1096 = vand.u32 %v494, 4294901760
        %1097 = vmatprep.subr.mxu0 %v1096
        %v1098 = vand.u32 %v493, 4294901760
        %1099 = vmatpush1.msra.mxu0 %v1098
        %v1100 = vand.u32 %v497, 4294901760
        %1101 = vmatprep.subr.mxu0 %v1100
        %v1102 = vand.u32 %v496, 4294901760
        %1103 = vmatpush1.msra.mxu0 %v1102
        %v1104 = vand.u32 %v500, 4294901760
        %1105 = vmatprep.subr.mxu0 %v1104
        %v1106 = vand.u32 %v499, 4294901760
        %1107 = vmatpush1.msra.mxu0 %v1106
        %v1108 = vand.u32 %v503, 4294901760
        %1109 = vmatprep.subr.mxu0 %v1108
        %v1110 = vand.u32 %v502, 4294901760
        %1111 = vmatpush1.msra.mxu0 %v1110
        %v1112 = vand.u32 %v506, 4294901760
        %1113 = vmatprep.subr.mxu0 %v1112
        %v1114 = vand.u32 %v505, 4294901760
        %1115 = vmatpush1.msra.mxu0 %v1114
        %v1116 = vand.u32 %v509, 4294901760
        %1117 = vmatprep.subr.mxu0 %v1116
        %v1118 = vand.u32 %v508, 4294901760
        %1119 = vmatpush1.msra.mxu0 %v1118
        %v1120 = vand.u32 %v512, 4294901760
        %1121 = vmatprep.subr.mxu0 %v1120
        %v1122 = vand.u32 %v511, 4294901760
        %1123 = vmatpush1.msra.mxu0 %v1122
        %v1124 = vand.u32 %v515, 4294901760
        %1125 = vmatprep.subr.mxu0 %v1124
        %v1126 = vand.u32 %v514, 4294901760
        %1127 = vmatpush1.msra.mxu0 %v1126
        %v1128 = vand.u32 %v518, 4294901760
        %1129 = vmatprep.subr.mxu0 %v1128
        %v1130 = vand.u32 %v517, 4294901760
        %1131 = vmatpush1.msra.mxu0 %v1130
        %v1132 = vand.u32 %v521, 4294901760
        %1133 = vmatprep.subr.mxu0 %v1132
        %v1134 = vand.u32 %v520, 4294901760
        %1135 = vmatpush1.msra.mxu0 %v1134
        %v1136 = vand.u32 %v524, 4294901760
        %1137 = vmatprep.subr.mxu0 %v1136
        %v1138 = vand.u32 %v523, 4294901760
        %1139 = vmatpush1.msra.mxu0 %v1138
        %v1140 = vand.u32 %v527, 4294901760
        %1141 = vmatprep.subr.mxu0 %v1140
        %v1142 = vand.u32 %v526, 4294901760
        %1143 = vmatpush1.msra.mxu0 %v1142
        %v1144 = vand.u32 %v530, 4294901760
        %1145 = vmatprep.subr.mxu0 %v1144
        %v1146 = vand.u32 %v529, 4294901760
        %1147 = vmatpush1.msra.mxu0 %v1146
        %v1148 = vand.u32 %v533, 4294901760
        %1149 = vmatprep.subr.mxu0 %v1148
        %v1150 = vand.u32 %v532, 4294901760
        %1151 = vmatpush1.msra.mxu0 %v1150
        %v1152 = vand.u32 %v536, 4294901760
        %1153 = vmatprep.subr.mxu0 %v1152
        %v1154 = vand.u32 %v535, 4294901760
        %1155 = vmatpush1.msra.mxu0 %v1154
        %v1156 = vand.u32 %v539, 4294901760
        %1157 = vmatprep.subr.mxu0 %v1156
        %v1158 = vand.u32 %v538, 4294901760
        %1159 = vmatpush1.msra.mxu0 %v1158
        %1160 = vmatprep.subr.mxu0 0.0
        %1161 = vmatpush1.msra.mxu0 0.0
        %1162 = vmatprep.subr.mxu0 0.0
        %1163 = vmatpush1.msra.mxu0 0.0
        %1164 = vmatprep.subr.mxu0 0.0
        %1165 = vmatpush1.msra.mxu0 0.0
        %1166 = vmatprep.subr.mxu0 0.0
        %1167 = vmatpush1.msra.mxu0 0.0
        %1168 = vmatprep.subr.mxu0 0.0
        %1169 = vmatpush1.msra.mxu0 0.0
        %1170 = vmatprep.subr.mxu0 0.0
        %1171 = vmatpush1.msra.mxu0 0.0
        %1172 = vmatprep.subr.mxu0 0.0
        %1173 = vmatpush1.msra.mxu0 0.0
        %1174 = vmatprep.subr.mxu0 0.0
        %1175 = vmatpush1.msra.mxu0 0.0
        %1176 = vmatprep.subr.mxu0 0.0
        %1177 = vmatpush1.msra.mxu0 0.0
        %1178 = vmatprep.subr.mxu0 0.0
        %1179 = vmatpush1.msra.mxu0 0.0
        %1180 = vmatprep.subr.mxu0 0.0
        %1181 = vmatpush1.msra.mxu0 0.0
        %1182 = vmatprep.subr.mxu0 0.0
        %1183 = vmatpush1.msra.mxu0 0.0
        %1184 = vmatprep.subr.mxu0 0.0
        %1185 = vmatpush1.msra.mxu0 0.0
        %1186 = vmatprep.subr.mxu0 0.0
        %1187 = vmatpush1.msra.mxu0 0.0
        %1188 = vmatprep.subr.mxu0 0.0
        %1189 = vmatpush1.msra.mxu0 0.0
        %1190 = vmatprep.subr.mxu0 0.0
        %1191 = vmatpush1.msra.mxu0 0.0
        %1192 = vmatprep.mubr.f32.mxu0 0.0
        %v1193 = vand.u32 %v364, 4294901760
        %v1194 = vsub.f32 %v364, %v1193
        %v1195 = vand.u32 %v1194, 4294901760
        %1196 = vmatmul.mubr.f32.gmra.mrb[0].mxu0 %v1195
        %v1197 = vpop.f32.mrb[0].mxu0
        %v1198 = vadd.f32 %v1068, %v1197
        %v1199 = vpop.f32.mrb[0].mxu0
        %v1200 = vadd.f32 %v1070, %v1199
        %1201 = vmatprep.mubr.f32.mxu0 0.0
        %v1202 = vand.u32 %v365, 4294901760
        %v1203 = vsub.f32 %v365, %v1202
        %v1204 = vand.u32 %v1203, 4294901760
        %1205 = vmatmul.mubr.f32.gmra.mrb[0].mxu0 %v1204
        %v1206 = vpop.f32.mrb[0].mxu0
        %v1207 = vadd.f32 %v1076, %v1206
        %v1208 = vpop.f32.mrb[0].mxu0
        %v1209 = vadd.f32 %v1078, %v1208
        %1210 = vmatprep.mubr.f32.mxu0 0.0
        %v1211 = vand.u32 %v366, 4294901760
        %v1212 = vsub.f32 %v366, %v1211
        %v1213 = vand.u32 %v1212, 4294901760
        %1214 = vmatmul.mubr.f32.gmra.mrb[0].mxu0 %v1213
        %v1215 = vpop.f32.mrb[0].mxu0
        %v1216 = vadd.f32 %v1084, %v1215
        %v1217 = vpop.f32.mrb[0].mxu0
        %v1218 = vadd.f32 %v1086, %v1217
        %1219 = vmatprep.mubr.f32.mxu0 0.0
        %v1220 = vand.u32 %v367, 4294901760
        %v1221 = vsub.f32 %v367, %v1220
        %v1222 = vand.u32 %v1221, 4294901760
        %1223 = vmatmul.mubr.f32.gmra.mrb[0].mxu0 %v1222
        %v1224 = vpop.f32.mrb[0].mxu0
        %v1225 = vadd.f32 %v1092, %v1224
        %v1226 = vpop.f32.mrb[0].mxu0
        %v1227 = vadd.f32 %v1094, %v1226
        %1228 = vdwg.mxu0
        %v1229 = vand.u32 %v494, 4294901760
        %v1230 = vsub.f32 %v494, %v1229
        %v1231 = vand.u32 %v1230, 4294901760
        %1232 = vmatprep.subr.mxu0 %v1231
        %v1233 = vand.u32 %v493, 4294901760
        %v1234 = vsub.f32 %v493, %v1233
        %v1235 = vand.u32 %v1234, 4294901760
        %1236 = vmatpush1.msra.mxu0 %v1235
        %v1237 = vand.u32 %v497, 4294901760
        %v1238 = vsub.f32 %v497, %v1237
        %v1239 = vand.u32 %v1238, 4294901760
        %1240 = vmatprep.subr.mxu0 %v1239
        %v1241 = vand.u32 %v496, 4294901760
        %v1242 = vsub.f32 %v496, %v1241
        %v1243 = vand.u32 %v1242, 4294901760
        %1244 = vmatpush1.msra.mxu0 %v1243
        %v1245 = vand.u32 %v500, 4294901760
        %v1246 = vsub.f32 %v500, %v1245
        %v1247 = vand.u32 %v1246, 4294901760
        %1248 = vmatprep.subr.mxu0 %v1247
        %v1249 = vand.u32 %v499, 4294901760
        %v1250 = vsub.f32 %v499, %v1249
        %v1251 = vand.u32 %v1250, 4294901760
        %1252 = vmatpush1.msra.mxu0 %v1251
        %v1253 = vand.u32 %v503, 4294901760
        %v1254 = vsub.f32 %v503, %v1253
        %v1255 = vand.u32 %v1254, 4294901760
        %1256 = vmatprep.subr.mxu0 %v1255
        %v1257 = vand.u32 %v502, 4294901760
        %v1258 = vsub.f32 %v502, %v1257
        %v1259 = vand.u32 %v1258, 4294901760
        %1260 = vmatpush1.msra.mxu0 %v1259
        %v1261 = vand.u32 %v506, 4294901760
        %v1262 = vsub.f32 %v506, %v1261
        %v1263 = vand.u32 %v1262, 4294901760
        %1264 = vmatprep.subr.mxu0 %v1263
        %v1265 = vand.u32 %v505, 4294901760
        %v1266 = vsub.f32 %v505, %v1265
        %v1267 = vand.u32 %v1266, 4294901760
        %1268 = vmatpush1.msra.mxu0 %v1267
        %v1269 = vand.u32 %v509, 4294901760
        %v1270 = vsub.f32 %v509, %v1269
        %v1271 = vand.u32 %v1270, 4294901760
        %1272 = vmatprep.subr.mxu0 %v1271
        %v1273 = vand.u32 %v508, 4294901760
        %v1274 = vsub.f32 %v508, %v1273
        %v1275 = vand.u32 %v1274, 4294901760
        %1276 = vmatpush1.msra.mxu0 %v1275
        %v1277 = vand.u32 %v512, 4294901760
        %v1278 = vsub.f32 %v512, %v1277
        %v1279 = vand.u32 %v1278, 4294901760
        %1280 = vmatprep.subr.mxu0 %v1279
        %v1281 = vand.u32 %v511, 4294901760
        %v1282 = vsub.f32 %v511, %v1281
        %v1283 = vand.u32 %v1282, 4294901760
        %1284 = vmatpush1.msra.mxu0 %v1283
        %v1285 = vand.u32 %v515, 4294901760
        %v1286 = vsub.f32 %v515, %v1285
        %v1287 = vand.u32 %v1286, 4294901760
        %1288 = vmatprep.subr.mxu0 %v1287
        %v1289 = vand.u32 %v514, 4294901760
        %v1290 = vsub.f32 %v514, %v1289
        %v1291 = vand.u32 %v1290, 4294901760
        %1292 = vmatpush1.msra.mxu0 %v1291
        %v1293 = vand.u32 %v518, 4294901760
        %v1294 = vsub.f32 %v518, %v1293
        %v1295 = vand.u32 %v1294, 4294901760
        %1296 = vmatprep.subr.mxu0 %v1295
        %v1297 = vand.u32 %v517, 4294901760
        %v1298 = vsub.f32 %v517, %v1297
        %v1299 = vand.u32 %v1298, 4294901760
        %1300 = vmatpush1.msra.mxu0 %v1299
        %v1301 = vand.u32 %v521, 4294901760
        %v1302 = vsub.f32 %v521, %v1301
        %v1303 = vand.u32 %v1302, 4294901760
        %1304 = vmatprep.subr.mxu0 %v1303
        %v1305 = vand.u32 %v520, 4294901760
        %v1306 = vsub.f32 %v520, %v1305
        %v1307 = vand.u32 %v1306, 4294901760
        %1308 = vmatpush1.msra.mxu0 %v1307
        %v1309 = vand.u32 %v524, 4294901760
        %v1310 = vsub.f32 %v524, %v1309
        %v1311 = vand.u32 %v1310, 4294901760
        %1312 = vmatprep.subr.mxu0 %v1311
        %v1313 = vand.u32 %v523, 4294901760
        %v1314 = vsub.f32 %v523, %v1313
        %v1315 = vand.u32 %v1314, 4294901760
        %1316 = vmatpush1.msra.mxu0 %v1315
        %v1317 = vand.u32 %v527, 4294901760
        %v1318 = vsub.f32 %v527, %v1317
        %v1319 = vand.u32 %v1318, 4294901760
        %1320 = vmatprep.subr.mxu0 %v1319
        %v1321 = vand.u32 %v526, 4294901760
        %v1322 = vsub.f32 %v526, %v1321
        %v1323 = vand.u32 %v1322, 4294901760
        %1324 = vmatpush1.msra.mxu0 %v1323
        %v1325 = vand.u32 %v530, 4294901760
        %v1326 = vsub.f32 %v530, %v1325
        %v1327 = vand.u32 %v1326, 4294901760
        %1328 = vmatprep.subr.mxu0 %v1327
        %v1329 = vand.u32 %v529, 4294901760
        %v1330 = vsub.f32 %v529, %v1329
        %v1331 = vand.u32 %v1330, 4294901760
        %1332 = vmatpush1.msra.mxu0 %v1331
        %v1333 = vand.u32 %v533, 4294901760
        %v1334 = vsub.f32 %v533, %v1333
        %v1335 = vand.u32 %v1334, 4294901760
        %1336 = vmatprep.subr.mxu0 %v1335
        %v1337 = vand.u32 %v532, 4294901760
        %v1338 = vsub.f32 %v532, %v1337
        %v1339 = vand.u32 %v1338, 4294901760
        %1340 = vmatpush1.msra.mxu0 %v1339
        %v1341 = vand.u32 %v536, 4294901760
        %v1342 = vsub.f32 %v536, %v1341
        %v1343 = vand.u32 %v1342, 4294901760
        %1344 = vmatprep.subr.mxu0 %v1343
        %v1345 = vand.u32 %v535, 4294901760
        %v1346 = vsub.f32 %v535, %v1345
        %v1347 = vand.u32 %v1346, 4294901760
        %1348 = vmatpush1.msra.mxu0 %v1347
        %v1349 = vand.u32 %v539, 4294901760
        %v1350 = vsub.f32 %v539, %v1349
        %v1351 = vand.u32 %v1350, 4294901760
        %1352 = vmatprep.subr.mxu0 %v1351
        %v1353 = vand.u32 %v538, 4294901760
        %v1354 = vsub.f32 %v538, %v1353
        %v1355 = vand.u32 %v1354, 4294901760
        %1356 = vmatpush1.msra.mxu0 %v1355
        %1357 = vmatprep.subr.mxu0 0.0
        %1358 = vmatpush1.msra.mxu0 0.0
        %1359 = vmatprep.subr.mxu0 0.0
        %1360 = vmatpush1.msra.mxu0 0.0
        %1361 = vmatprep.subr.mxu0 0.0
        %1362 = vmatpush1.msra.mxu0 0.0
        %1363 = vmatprep.subr.mxu0 0.0
        %1364 = vmatpush1.msra.mxu0 0.0
        %1365 = vmatprep.subr.mxu0 0.0
        %1366 = vmatpush1.msra.mxu0 0.0
        %1367 = vmatprep.subr.mxu0 0.0
        %1368 = vmatpush1.msra.mxu0 0.0
        %1369 = vmatprep.subr.mxu0 0.0
        %1370 = vmatpush1.msra.mxu0 0.0
        %1371 = vmatprep.subr.mxu0 0.0
        %1372 = vmatpush1.msra.mxu0 0.0
        %1373 = vmatprep.subr.mxu0 0.0
        %1374 = vmatpush1.msra.mxu0 0.0
        %1375 = vmatprep.subr.mxu0 0.0
        %1376 = vmatpush1.msra.mxu0 0.0
        %1377 = vmatprep.subr.mxu0 0.0
        %1378 = vmatpush1.msra.mxu0 0.0
        %1379 = vmatprep.subr.mxu0 0.0
        %1380 = vmatpush1.msra.mxu0 0.0
        %1381 = vmatprep.subr.mxu0 0.0
        %1382 = vmatpush1.msra.mxu0 0.0
        %1383 = vmatprep.subr.mxu0 0.0
        %1384 = vmatpush1.msra.mxu0 0.0
        %1385 = vmatprep.subr.mxu0 0.0
        %1386 = vmatpush1.msra.mxu0 0.0
        %1387 = vmatprep.subr.mxu0 0.0
        %1388 = vmatpush1.msra.mxu0 0.0
        %1389 = vmatprep.mubr.f32.mxu0 0.0
        %v1390 = vand.u32 %v364, 4294901760
        %1391 = vmatmul.mubr.f32.gmra.mrb[0].mxu0 %v1390
        %v1392 = vpop.f32.mrb[0].mxu0
        %v1393 = vadd.f32 %v1198, %v1392
        %v1394 = vpop.f32.mrb[0].mxu0
        %v1395 = vadd.f32 %v1200, %v1394
        %1396 = vmatprep.mubr.f32.mxu0 0.0
        %v1397 = vand.u32 %v365, 4294901760
        %1398 = vmatmul.mubr.f32.gmra.mrb[0].mxu0 %v1397
        %v1399 = vpop.f32.mrb[0].mxu0
        %v1400 = vadd.f32 %v1207, %v1399
        %v1401 = vpop.f32.mrb[0].mxu0
        %v1402 = vadd.f32 %v1209, %v1401
        %1403 = vmatprep.mubr.f32.mxu0 0.0
        %v1404 = vand.u32 %v366, 4294901760
        %1405 = vmatmul.mubr.f32.gmra.mrb[0].mxu0 %v1404
        %v1406 = vpop.f32.mrb[0].mxu0
        %v1407 = vadd.f32 %v1216, %v1406
        %v1408 = vpop.f32.mrb[0].mxu0
        %v1409 = vadd.f32 %v1218, %v1408
        %1410 = vmatprep.mubr.f32.mxu0 0.0
        %v1411 = vand.u32 %v367, 4294901760
        %1412 = vmatmul.mubr.f32.gmra.mrb[0].mxu0 %v1411
        %v1413 = vpop.f32.mrb[0].mxu0
        %v1414 = vadd.f32 %v1225, %v1413
        %v1415 = vpop.f32.mrb[0].mxu0
        %v1416 = vadd.f32 %v1227, %v1415
        %1417 = vdwg.mxu0
        %v1418 = vand.u32 %v494, 4294901760
        %1419 = vmatprep.subr.mxu0 %v1418
        %v1420 = vand.u32 %v493, 4294901760
        %1421 = vmatpush1.msra.mxu0 %v1420
        %v1422 = vand.u32 %v497, 4294901760
        %1423 = vmatprep.subr.mxu0 %v1422
        %v1424 = vand.u32 %v496, 4294901760
        %1425 = vmatpush1.msra.mxu0 %v1424
        %v1426 = vand.u32 %v500, 4294901760
        %1427 = vmatprep.subr.mxu0 %v1426
        %v1428 = vand.u32 %v499, 4294901760
        %1429 = vmatpush1.msra.mxu0 %v1428
        %v1430 = vand.u32 %v503, 4294901760
        %1431 = vmatprep.subr.mxu0 %v1430
        %v1432 = vand.u32 %v502, 4294901760
        %1433 = vmatpush1.msra.mxu0 %v1432
        %v1434 = vand.u32 %v506, 4294901760
        %1435 = vmatprep.subr.mxu0 %v1434
        %v1436 = vand.u32 %v505, 4294901760
        %1437 = vmatpush1.msra.mxu0 %v1436
        %v1438 = vand.u32 %v509, 4294901760
        %1439 = vmatprep.subr.mxu0 %v1438
        %v1440 = vand.u32 %v508, 4294901760
        %1441 = vmatpush1.msra.mxu0 %v1440
        %v1442 = vand.u32 %v512, 4294901760
        %1443 = vmatprep.subr.mxu0 %v1442
        %v1444 = vand.u32 %v511, 4294901760
        %1445 = vmatpush1.msra.mxu0 %v1444
        %v1446 = vand.u32 %v515, 4294901760
        %1447 = vmatprep.subr.mxu0 %v1446
        %v1448 = vand.u32 %v514, 4294901760
        %1449 = vmatpush1.msra.mxu0 %v1448
        %v1450 = vand.u32 %v518, 4294901760
        %1451 = vmatprep.subr.mxu0 %v1450
        %v1452 = vand.u32 %v517, 4294901760
        %1453 = vmatpush1.msra.mxu0 %v1452
        %v1454 = vand.u32 %v521, 4294901760
        %1455 = vmatprep.subr.mxu0 %v1454
        %v1456 = vand.u32 %v520, 4294901760
        %1457 = vmatpush1.msra.mxu0 %v1456
        %v1458 = vand.u32 %v524, 4294901760
        %1459 = vmatprep.subr.mxu0 %v1458
        %v1460 = vand.u32 %v523, 4294901760
        %1461 = vmatpush1.msra.mxu0 %v1460
        %v1462 = vand.u32 %v527, 4294901760
        %1463 = vmatprep.subr.mxu0 %v1462
        %v1464 = vand.u32 %v526, 4294901760
        %1465 = vmatpush1.msra.mxu0 %v1464
        %v1466 = vand.u32 %v530, 4294901760
        %1467 = vmatprep.subr.mxu0 %v1466
        %v1468 = vand.u32 %v529, 4294901760
        %1469 = vmatpush1.msra.mxu0 %v1468
        %v1470 = vand.u32 %v533, 4294901760
        %1471 = vmatprep.subr.mxu0 %v1470
        %v1472 = vand.u32 %v532, 4294901760
        %1473 = vmatpush1.msra.mxu0 %v1472
        %v1474 = vand.u32 %v536, 4294901760
        %1475 = vmatprep.subr.mxu0 %v1474
        %v1476 = vand.u32 %v535, 4294901760
        %1477 = vmatpush1.msra.mxu0 %v1476
        %v1478 = vand.u32 %v539, 4294901760
        %1479 = vmatprep.subr.mxu0 %v1478
        %v1480 = vand.u32 %v538, 4294901760
        %1481 = vmatpush1.msra.mxu0 %v1480
        %1482 = vmatprep.subr.mxu0 0.0
        %1483 = vmatpush1.msra.mxu0 0.0
        %1484 = vmatprep.subr.mxu0 0.0
        %1485 = vmatpush1.msra.mxu0 0.0
        %1486 = vmatprep.subr.mxu0 0.0
        %1487 = vmatpush1.msra.mxu0 0.0
        %1488 = vmatprep.subr.mxu0 0.0
        %1489 = vmatpush1.msra.mxu0 0.0
        %1490 = vmatprep.subr.mxu0 0.0
        %1491 = vmatpush1.msra.mxu0 0.0
        %1492 = vmatprep.subr.mxu0 0.0
        %1493 = vmatpush1.msra.mxu0 0.0
        %1494 = vmatprep.subr.mxu0 0.0
        %1495 = vmatpush1.msra.mxu0 0.0
        %1496 = vmatprep.subr.mxu0 0.0
        %1497 = vmatpush1.msra.mxu0 0.0
        %1498 = vmatprep.subr.mxu0 0.0
        %1499 = vmatpush1.msra.mxu0 0.0
        %1500 = vmatprep.subr.mxu0 0.0
        %1501 = vmatpush1.msra.mxu0 0.0
        %1502 = vmatprep.subr.mxu0 0.0
        %1503 = vmatpush1.msra.mxu0 0.0
        %1504 = vmatprep.subr.mxu0 0.0
        %1505 = vmatpush1.msra.mxu0 0.0
        %1506 = vmatprep.subr.mxu0 0.0
        %1507 = vmatpush1.msra.mxu0 0.0
        %1508 = vmatprep.subr.mxu0 0.0
        %1509 = vmatpush1.msra.mxu0 0.0
        %1510 = vmatprep.subr.mxu0 0.0
        %1511 = vmatpush1.msra.mxu0 0.0
        %1512 = vmatprep.subr.mxu0 0.0
        %1513 = vmatpush1.msra.mxu0 0.0
        %1514 = vmatprep.mubr.f32.mxu0 0.0
        %v1515 = vand.u32 %v364, 4294901760
        %1516 = vmatmul.mubr.f32.gmra.mrb[0].mxu0 %v1515
        %v1517 = vpop.f32.mrb[0].mxu0
        %v1518 = vadd.f32 %v1393, %v1517
        %v1519 = vpop.f32.mrb[0].mxu0
        %v1520 = vadd.f32 %v1395, %v1519
        %1521 = vmatprep.mubr.f32.mxu0 0.0
        %v1522 = vand.u32 %v365, 4294901760
        %1523 = vmatmul.mubr.f32.gmra.mrb[0].mxu0 %v1522
        %v1524 = vpop.f32.mrb[0].mxu0
        %v1525 = vadd.f32 %v1400, %v1524
        %v1526 = vpop.f32.mrb[0].mxu0
        %v1527 = vadd.f32 %v1402, %v1526
        %1528 = vmatprep.mubr.f32.mxu0 0.0
        %v1529 = vand.u32 %v366, 4294901760
        %1530 = vmatmul.mubr.f32.gmra.mrb[0].mxu0 %v1529
        %v1531 = vpop.f32.mrb[0].mxu0
        %v1532 = vadd.f32 %v1407, %v1531
        %v1533 = vpop.f32.mrb[0].mxu0
        %v1534 = vadd.f32 %v1409, %v1533
        %1535 = vmatprep.mubr.f32.mxu0 0.0
        %v1536 = vand.u32 %v367, 4294901760
        %1537 = vmatmul.mubr.f32.gmra.mrb[0].mxu0 %v1536
        %v1538 = vpop.f32.mrb[0].mxu0
        %v1539 = vadd.f32 %v1414, %v1538
        %v1540 = vpop.f32.mrb[0].mxu0
        %v1541 = vadd.f32 %v1416, %v1540
        %1542 = vdwg.mxu0
        %1543 = vmatprep.subr.mxu0 0.0
        %v1544 = vand.u32 %v495, 4294901760
        %1545 = vmatpush1.msra.mxu0 %v1544
        %1546 = vmatprep.subr.mxu0 0.0
        %v1547 = vand.u32 %v498, 4294901760
        %1548 = vmatpush1.msra.mxu0 %v1547
        %1549 = vmatprep.subr.mxu0 0.0
        %v1550 = vand.u32 %v501, 4294901760
        %1551 = vmatpush1.msra.mxu0 %v1550
        %1552 = vmatprep.subr.mxu0 0.0
        %v1553 = vand.u32 %v504, 4294901760
        %1554 = vmatpush1.msra.mxu0 %v1553
        %1555 = vmatprep.subr.mxu0 0.0
        %v1556 = vand.u32 %v507, 4294901760
        %1557 = vmatpush1.msra.mxu0 %v1556
        %1558 = vmatprep.subr.mxu0 0.0
        %v1559 = vand.u32 %v510, 4294901760
        %1560 = vmatpush1.msra.mxu0 %v1559
        %1561 = vmatprep.subr.mxu0 0.0
        %v1562 = vand.u32 %v513, 4294901760
        %1563 = vmatpush1.msra.mxu0 %v1562
        %1564 = vmatprep.subr.mxu0 0.0
        %v1565 = vand.u32 %v516, 4294901760
        %1566 = vmatpush1.msra.mxu0 %v1565
        %1567 = vmatprep.subr.mxu0 0.0
        %v1568 = vand.u32 %v519, 4294901760
        %1569 = vmatpush1.msra.mxu0 %v1568
        %1570 = vmatprep.subr.mxu0 0.0
        %v1571 = vand.u32 %v522, 4294901760
        %1572 = vmatpush1.msra.mxu0 %v1571
        %1573 = vmatprep.subr.mxu0 0.0
        %v1574 = vand.u32 %v525, 4294901760
        %1575 = vmatpush1.msra.mxu0 %v1574
        %1576 = vmatprep.subr.mxu0 0.0
        %v1577 = vand.u32 %v528, 4294901760
        %1578 = vmatpush1.msra.mxu0 %v1577
        %1579 = vmatprep.subr.mxu0 0.0
        %v1580 = vand.u32 %v531, 4294901760
        %1581 = vmatpush1.msra.mxu0 %v1580
        %1582 = vmatprep.subr.mxu0 0.0
        %v1583 = vand.u32 %v534, 4294901760
        %1584 = vmatpush1.msra.mxu0 %v1583
        %1585 = vmatprep.subr.mxu0 0.0
        %v1586 = vand.u32 %v537, 4294901760
        %1587 = vmatpush1.msra.mxu0 %v1586
        %1588 = vmatprep.subr.mxu0 0.0
        %v1589 = vand.u32 %v540, 4294901760
        %1590 = vmatpush1.msra.mxu0 %v1589
        %1591 = vmatprep.subr.mxu0 0.0
        %1592 = vmatpush1.msra.mxu0 0.0
        %1593 = vmatprep.subr.mxu0 0.0
        %1594 = vmatpush1.msra.mxu0 0.0
        %1595 = vmatprep.subr.mxu0 0.0
        %1596 = vmatpush1.msra.mxu0 0.0
        %1597 = vmatprep.subr.mxu0 0.0
        %1598 = vmatpush1.msra.mxu0 0.0
        %1599 = vmatprep.subr.mxu0 0.0
        %1600 = vmatpush1.msra.mxu0 0.0
        %1601 = vmatprep.subr.mxu0 0.0
        %1602 = vmatpush1.msra.mxu0 0.0
        %1603 = vmatprep.subr.mxu0 0.0
        %1604 = vmatpush1.msra.mxu0 0.0
        %1605 = vmatprep.subr.mxu0 0.0
        %1606 = vmatpush1.msra.mxu0 0.0
        %1607 = vmatprep.subr.mxu0 0.0
        %1608 = vmatpush1.msra.mxu0 0.0
        %1609 = vmatprep.subr.mxu0 0.0
        %1610 = vmatpush1.msra.mxu0 0.0
        %1611 = vmatprep.subr.mxu0 0.0
        %1612 = vmatpush1.msra.mxu0 0.0
        %1613 = vmatprep.subr.mxu0 0.0
        %1614 = vmatpush1.msra.mxu0 0.0
        %1615 = vmatprep.subr.mxu0 0.0
        %1616 = vmatpush1.msra.mxu0 0.0
        %1617 = vmatprep.subr.mxu0 0.0
        %1618 = vmatpush1.msra.mxu0 0.0
        %1619 = vmatprep.subr.mxu0 0.0
        %1620 = vmatpush1.msra.mxu0 0.0
        %1621 = vmatprep.subr.mxu0 0.0
        %1622 = vmatpush1.msra.mxu0 0.0
        %1623 = vmatprep.mubr.f32.mxu0 0.0
        %v1624 = vand.u32 %v364, 4294901760
        %v1625 = vsub.f32 %v364, %v1624
        %v1626 = vand.u32 %v1625, 4294901760
        %v1627 = vsub.f32 %v1625, %v1626
        %v1628 = vand.u32 %v1627, 4294901760
        %1629 = vmatmul.mubr.f32.gmra.mrb[0].mxu0 %v1628
        %v1630 = vpop.f32.mrb[0].mxu0
        %v1631 = vadd.f32 0.0, %v1630
        %v1632 = vpop.f32.mrb[0].mxu0
        %1633 = vmatprep.mubr.f32.mxu0 0.0
        %v1634 = vand.u32 %v365, 4294901760
        %v1635 = vsub.f32 %v365, %v1634
        %v1636 = vand.u32 %v1635, 4294901760
        %v1637 = vsub.f32 %v1635, %v1636
        %v1638 = vand.u32 %v1637, 4294901760
        %1639 = vmatmul.mubr.f32.gmra.mrb[0].mxu0 %v1638
        %v1640 = vpop.f32.mrb[0].mxu0
        %v1641 = vadd.f32 0.0, %v1640
        %v1642 = vpop.f32.mrb[0].mxu0
        %1643 = vmatprep.mubr.f32.mxu0 0.0
        %v1644 = vand.u32 %v366, 4294901760
        %v1645 = vsub.f32 %v366, %v1644
        %v1646 = vand.u32 %v1645, 4294901760
        %v1647 = vsub.f32 %v1645, %v1646
        %v1648 = vand.u32 %v1647, 4294901760
        %1649 = vmatmul.mubr.f32.gmra.mrb[0].mxu0 %v1648
        %v1650 = vpop.f32.mrb[0].mxu0
        %v1651 = vadd.f32 0.0, %v1650
        %v1652 = vpop.f32.mrb[0].mxu0
        %1653 = vmatprep.mubr.f32.mxu0 0.0
        %v1654 = vand.u32 %v367, 4294901760
        %v1655 = vsub.f32 %v367, %v1654
        %v1656 = vand.u32 %v1655, 4294901760
        %v1657 = vsub.f32 %v1655, %v1656
        %v1658 = vand.u32 %v1657, 4294901760
        %1659 = vmatmul.mubr.f32.gmra.mrb[0].mxu0 %v1658
        %v1660 = vpop.f32.mrb[0].mxu0
        %v1661 = vadd.f32 0.0, %v1660
        %v1662 = vpop.f32.mrb[0].mxu0
        %1663 = vdwg.mxu0
        %1664 = vmatprep.subr.mxu0 0.0
        %v1665 = vand.u32 %v495, 4294901760
        %v1666 = vsub.f32 %v495, %v1665
        %v1667 = vand.u32 %v1666, 4294901760
        %v1668 = vsub.f32 %v1666, %v1667
        %v1669 = vand.u32 %v1668, 4294901760
        %1670 = vmatpush1.msra.mxu0 %v1669
        %1671 = vmatprep.subr.mxu0 0.0
        %v1672 = vand.u32 %v498, 4294901760
        %v1673 = vsub.f32 %v498, %v1672
        %v1674 = vand.u32 %v1673, 4294901760
        %v1675 = vsub.f32 %v1673, %v1674
        %v1676 = vand.u32 %v1675, 4294901760
        %1677 = vmatpush1.msra.mxu0 %v1676
        %1678 = vmatprep.subr.mxu0 0.0
        %v1679 = vand.u32 %v501, 4294901760
        %v1680 = vsub.f32 %v501, %v1679
        %v1681 = vand.u32 %v1680, 4294901760
        %v1682 = vsub.f32 %v1680, %v1681
        %v1683 = vand.u32 %v1682, 4294901760
        %1684 = vmatpush1.msra.mxu0 %v1683
        %1685 = vmatprep.subr.mxu0 0.0
        %v1686 = vand.u32 %v504, 4294901760
        %v1687 = vsub.f32 %v504, %v1686
        %v1688 = vand.u32 %v1687, 4294901760
        %v1689 = vsub.f32 %v1687, %v1688
        %v1690 = vand.u32 %v1689, 4294901760
        %1691 = vmatpush1.msra.mxu0 %v1690
        %1692 = vmatprep.subr.mxu0 0.0
        %v1693 = vand.u32 %v507, 4294901760
        %v1694 = vsub.f32 %v507, %v1693
        %v1695 = vand.u32 %v1694, 4294901760
        %v1696 = vsub.f32 %v1694, %v1695
        %v1697 = vand.u32 %v1696, 4294901760
        %1698 = vmatpush1.msra.mxu0 %v1697
        %1699 = vmatprep.subr.mxu0 0.0
        %v1700 = vand.u32 %v510, 4294901760
        %v1701 = vsub.f32 %v510, %v1700
        %v1702 = vand.u32 %v1701, 4294901760
        %v1703 = vsub.f32 %v1701, %v1702
        %v1704 = vand.u32 %v1703, 4294901760
        %1705 = vmatpush1.msra.mxu0 %v1704
        %1706 = vmatprep.subr.mxu0 0.0
        %v1707 = vand.u32 %v513, 4294901760
        %v1708 = vsub.f32 %v513, %v1707
        %v1709 = vand.u32 %v1708, 4294901760
        %v1710 = vsub.f32 %v1708, %v1709
        %v1711 = vand.u32 %v1710, 4294901760
        %1712 = vmatpush1.msra.mxu0 %v1711
        %1713 = vmatprep.subr.mxu0 0.0
        %v1714 = vand.u32 %v516, 4294901760
        %v1715 = vsub.f32 %v516, %v1714
        %v1716 = vand.u32 %v1715, 4294901760
        %v1717 = vsub.f32 %v1715, %v1716
        %v1718 = vand.u32 %v1717, 4294901760
        %1719 = vmatpush1.msra.mxu0 %v1718
        %1720 = vmatprep.subr.mxu0 0.0
        %v1721 = vand.u32 %v519, 4294901760
        %v1722 = vsub.f32 %v519, %v1721
        %v1723 = vand.u32 %v1722, 4294901760
        %v1724 = vsub.f32 %v1722, %v1723
        %v1725 = vand.u32 %v1724, 4294901760
        %1726 = vmatpush1.msra.mxu0 %v1725
        %1727 = vmatprep.subr.mxu0 0.0
        %v1728 = vand.u32 %v522, 4294901760
        %v1729 = vsub.f32 %v522, %v1728
        %v1730 = vand.u32 %v1729, 4294901760
        %v1731 = vsub.f32 %v1729, %v1730
        %v1732 = vand.u32 %v1731, 4294901760
        %1733 = vmatpush1.msra.mxu0 %v1732
        %1734 = vmatprep.subr.mxu0 0.0
        %v1735 = vand.u32 %v525, 4294901760
        %v1736 = vsub.f32 %v525, %v1735
        %v1737 = vand.u32 %v1736, 4294901760
        %v1738 = vsub.f32 %v1736, %v1737
        %v1739 = vand.u32 %v1738, 4294901760
        %1740 = vmatpush1.msra.mxu0 %v1739
        %1741 = vmatprep.subr.mxu0 0.0
        %v1742 = vand.u32 %v528, 4294901760
        %v1743 = vsub.f32 %v528, %v1742
        %v1744 = vand.u32 %v1743, 4294901760
        %v1745 = vsub.f32 %v1743, %v1744
        %v1746 = vand.u32 %v1745, 4294901760
        %1747 = vmatpush1.msra.mxu0 %v1746
        %1748 = vmatprep.subr.mxu0 0.0
        %v1749 = vand.u32 %v531, 4294901760
        %v1750 = vsub.f32 %v531, %v1749
        %v1751 = vand.u32 %v1750, 4294901760
        %v1752 = vsub.f32 %v1750, %v1751
        %v1753 = vand.u32 %v1752, 4294901760
        %1754 = vmatpush1.msra.mxu0 %v1753
        %1755 = vmatprep.subr.mxu0 0.0
        %v1756 = vand.u32 %v534, 4294901760
        %v1757 = vsub.f32 %v534, %v1756
        %v1758 = vand.u32 %v1757, 4294901760
        %v1759 = vsub.f32 %v1757, %v1758
        %v1760 = vand.u32 %v1759, 4294901760
        %1761 = vmatpush1.msra.mxu0 %v1760
        %1762 = vmatprep.subr.mxu0 0.0
        %v1763 = vand.u32 %v537, 4294901760
        %v1764 = vsub.f32 %v537, %v1763
        %v1765 = vand.u32 %v1764, 4294901760
        %v1766 = vsub.f32 %v1764, %v1765
        %v1767 = vand.u32 %v1766, 4294901760
        %1768 = vmatpush1.msra.mxu0 %v1767
        %1769 = vmatprep.subr.mxu0 0.0
        %v1770 = vand.u32 %v540, 4294901760
        %v1771 = vsub.f32 %v540, %v1770
        %v1772 = vand.u32 %v1771, 4294901760
        %v1773 = vsub.f32 %v1771, %v1772
        %v1774 = vand.u32 %v1773, 4294901760
        %1775 = vmatpush1.msra.mxu0 %v1774
        %1776 = vmatprep.subr.mxu0 0.0
        %1777 = vmatpush1.msra.mxu0 0.0
        %1778 = vmatprep.subr.mxu0 0.0
        %1779 = vmatpush1.msra.mxu0 0.0
        %1780 = vmatprep.subr.mxu0 0.0
        %1781 = vmatpush1.msra.mxu0 0.0
        %1782 = vmatprep.subr.mxu0 0.0
        %1783 = vmatpush1.msra.mxu0 0.0
        %1784 = vmatprep.subr.mxu0 0.0
        %1785 = vmatpush1.msra.mxu0 0.0
        %1786 = vmatprep.subr.mxu0 0.0
        %1787 = vmatpush1.msra.mxu0 0.0
        %1788 = vmatprep.subr.mxu0 0.0
        %1789 = vmatpush1.msra.mxu0 0.0
        %1790 = vmatprep.subr.mxu0 0.0
        %1791 = vmatpush1.msra.mxu0 0.0
        %1792 = vmatprep.subr.mxu0 0.0
        %1793 = vmatpush1.msra.mxu0 0.0
        %1794 = vmatprep.subr.mxu0 0.0
        %1795 = vmatpush1.msra.mxu0 0.0
        %1796 = vmatprep.subr.mxu0 0.0
        %1797 = vmatpush1.msra.mxu0 0.0
        %1798 = vmatprep.subr.mxu0 0.0
        %1799 = vmatpush1.msra.mxu0 0.0
        %1800 = vmatprep.subr.mxu0 0.0
        %1801 = vmatpush1.msra.mxu0 0.0
        %1802 = vmatprep.subr.mxu0 0.0
        %1803 = vmatpush1.msra.mxu0 0.0
        %1804 = vmatprep.subr.mxu0 0.0
        %1805 = vmatpush1.msra.mxu0 0.0
        %1806 = vmatprep.subr.mxu0 0.0
        %1807 = vmatpush1.msra.mxu0 0.0
        %1808 = vmatprep.mubr.f32.mxu0 0.0
        %v1809 = vand.u32 %v364, 4294901760
        %1810 = vmatmul.mubr.f32.gmra.mrb[0].mxu0 %v1809
        %v1811 = vpop.f32.mrb[0].mxu0
        %v1812 = vadd.f32 %v1631, %v1811
        %v1813 = vpop.f32.mrb[0].mxu0
        %1814 = vmatprep.mubr.f32.mxu0 0.0
        %v1815 = vand.u32 %v365, 4294901760
        %1816 = vmatmul.mubr.f32.gmra.mrb[0].mxu0 %v1815
        %v1817 = vpop.f32.mrb[0].mxu0
        %v1818 = vadd.f32 %v1641, %v1817
        %v1819 = vpop.f32.mrb[0].mxu0
        %1820 = vmatprep.mubr.f32.mxu0 0.0
        %v1821 = vand.u32 %v366, 4294901760
        %1822 = vmatmul.mubr.f32.gmra.mrb[0].mxu0 %v1821
        %v1823 = vpop.f32.mrb[0].mxu0
        %v1824 = vadd.f32 %v1651, %v1823
        %v1825 = vpop.f32.mrb[0].mxu0
        %1826 = vmatprep.mubr.f32.mxu0 0.0
        %v1827 = vand.u32 %v367, 4294901760
        %1828 = vmatmul.mubr.f32.gmra.mrb[0].mxu0 %v1827
        %v1829 = vpop.f32.mrb[0].mxu0
        %v1830 = vadd.f32 %v1661, %v1829
        %v1831 = vpop.f32.mrb[0].mxu0
        %1832 = vdwg.mxu0
        %1833 = vmatprep.subr.mxu0 0.0
        %v1834 = vand.u32 %v495, 4294901760
        %v1835 = vsub.f32 %v495, %v1834
        %1836 = vmatpush1.msra.mxu0 %v1835
        %1837 = vmatprep.subr.mxu0 0.0
        %v1838 = vand.u32 %v498, 4294901760
        %v1839 = vsub.f32 %v498, %v1838
        %1840 = vmatpush1.msra.mxu0 %v1839
        %1841 = vmatprep.subr.mxu0 0.0
        %v1842 = vand.u32 %v501, 4294901760
        %v1843 = vsub.f32 %v501, %v1842
        %1844 = vmatpush1.msra.mxu0 %v1843
        %1845 = vmatprep.subr.mxu0 0.0
        %v1846 = vand.u32 %v504, 4294901760
        %v1847 = vsub.f32 %v504, %v1846
        %1848 = vmatpush1.msra.mxu0 %v1847
        %1849 = vmatprep.subr.mxu0 0.0
        %v1850 = vand.u32 %v507, 4294901760
        %v1851 = vsub.f32 %v507, %v1850
        %1852 = vmatpush1.msra.mxu0 %v1851
        %1853 = vmatprep.subr.mxu0 0.0
        %v1854 = vand.u32 %v510, 4294901760
        %v1855 = vsub.f32 %v510, %v1854
        %1856 = vmatpush1.msra.mxu0 %v1855
        %1857 = vmatprep.subr.mxu0 0.0
        %v1858 = vand.u32 %v513, 4294901760
        %v1859 = vsub.f32 %v513, %v1858
        %1860 = vmatpush1.msra.mxu0 %v1859
        %1861 = vmatprep.subr.mxu0 0.0
        %v1862 = vand.u32 %v516, 4294901760
        %v1863 = vsub.f32 %v516, %v1862
        %1864 = vmatpush1.msra.mxu0 %v1863
        %1865 = vmatprep.subr.mxu0 0.0
        %v1866 = vand.u32 %v519, 4294901760
        %v1867 = vsub.f32 %v519, %v1866
        %1868 = vmatpush1.msra.mxu0 %v1867
        %1869 = vmatprep.subr.mxu0 0.0
        %v1870 = vand.u32 %v522, 4294901760
        %v1871 = vsub.f32 %v522, %v1870
        %1872 = vmatpush1.msra.mxu0 %v1871
        %1873 = vmatprep.subr.mxu0 0.0
        %v1874 = vand.u32 %v525, 4294901760
        %v1875 = vsub.f32 %v525, %v1874
        %1876 = vmatpush1.msra.mxu0 %v1875
        %1877 = vmatprep.subr.mxu0 0.0
        %v1878 = vand.u32 %v528, 4294901760
        %v1879 = vsub.f32 %v528, %v1878
        %1880 = vmatpush1.msra.mxu0 %v1879
        %1881 = vmatprep.subr.mxu0 0.0
        %v1882 = vand.u32 %v531, 4294901760
        %v1883 = vsub.f32 %v531, %v1882
        %1884 = vmatpush1.msra.mxu0 %v1883
        %1885 = vmatprep.subr.mxu0 0.0
        %v1886 = vand.u32 %v534, 4294901760
        %v1887 = vsub.f32 %v534, %v1886
        %1888 = vmatpush1.msra.mxu0 %v1887
        %1889 = vmatprep.subr.mxu0 0.0
        %v1890 = vand.u32 %v537, 4294901760
        %v1891 = vsub.f32 %v537, %v1890
        %1892 = vmatpush1.msra.mxu0 %v1891
        %1893 = vmatprep.subr.mxu0 0.0
        %v1894 = vand.u32 %v540, 4294901760
        %v1895 = vsub.f32 %v540, %v1894
        %1896 = vmatpush1.msra.mxu0 %v1895
        %1897 = vmatprep.subr.mxu0 0.0
        %1898 = vmatpush1.msra.mxu0 0.0
        %1899 = vmatprep.subr.mxu0 0.0
        %1900 = vmatpush1.msra.mxu0 0.0
        %1901 = vmatprep.subr.mxu0 0.0
        %1902 = vmatpush1.msra.mxu0 0.0
        %1903 = vmatprep.subr.mxu0 0.0
        %1904 = vmatpush1.msra.mxu0 0.0
        %1905 = vmatprep.subr.mxu0 0.0
        %1906 = vmatpush1.msra.mxu0 0.0
        %1907 = vmatprep.subr.mxu0 0.0
        %1908 = vmatpush1.msra.mxu0 0.0
        %1909 = vmatprep.subr.mxu0 0.0
        %1910 = vmatpush1.msra.mxu0 0.0
        %1911 = vmatprep.subr.mxu0 0.0
        %1912 = vmatpush1.msra.mxu0 0.0
        %1913 = vmatprep.subr.mxu0 0.0
        %1914 = vmatpush1.msra.mxu0 0.0
        %1915 = vmatprep.subr.mxu0 0.0
        %1916 = vmatpush1.msra.mxu0 0.0
        %1917 = vmatprep.subr.mxu0 0.0
        %1918 = vmatpush1.msra.mxu0 0.0
        %1919 = vmatprep.subr.mxu0 0.0
        %1920 = vmatpush1.msra.mxu0 0.0
        %1921 = vmatprep.subr.mxu0 0.0
        %1922 = vmatpush1.msra.mxu0 0.0
        %1923 = vmatprep.subr.mxu0 0.0
        %1924 = vmatpush1.msra.mxu0 0.0
        %1925 = vmatprep.subr.mxu0 0.0
        %1926 = vmatpush1.msra.mxu0 0.0
        %1927 = vmatprep.subr.mxu0 0.0
        %1928 = vmatpush1.msra.mxu0 0.0
        %1929 = vmatprep.mubr.f32.mxu0 0.0
        %v1930 = vand.u32 %v364, 4294901760
        %v1931 = vsub.f32 %v364, %v1930
        %1932 = vmatmul.mubr.f32.gmra.mrb[0].mxu0 %v1931
        %v1933 = vpop.f32.mrb[0].mxu0
        %v1934 = vadd.f32 %v1812, %v1933
        %v1935 = vpop.f32.mrb[0].mxu0
        %1936 = vmatprep.mubr.f32.mxu0 0.0
        %v1937 = vand.u32 %v365, 4294901760
        %v1938 = vsub.f32 %v365, %v1937
        %1939 = vmatmul.mubr.f32.gmra.mrb[0].mxu0 %v1938
        %v1940 = vpop.f32.mrb[0].mxu0
        %v1941 = vadd.f32 %v1818, %v1940
        %v1942 = vpop.f32.mrb[0].mxu0
        %1943 = vmatprep.mubr.f32.mxu0 0.0
        %v1944 = vand.u32 %v366, 4294901760
        %v1945 = vsub.f32 %v366, %v1944
        %1946 = vmatmul.mubr.f32.gmra.mrb[0].mxu0 %v1945
        %v1947 = vpop.f32.mrb[0].mxu0
        %v1948 = vadd.f32 %v1824, %v1947
        %v1949 = vpop.f32.mrb[0].mxu0
        %1950 = vmatprep.mubr.f32.mxu0 0.0
        %v1951 = vand.u32 %v367, 4294901760
        %v1952 = vsub.f32 %v367, %v1951
        %1953 = vmatmul.mubr.f32.gmra.mrb[0].mxu0 %v1952
        %v1954 = vpop.f32.mrb[0].mxu0
        %v1955 = vadd.f32 %v1830, %v1954
        %v1956 = vpop.f32.mrb[0].mxu0
        %1957 = vdwg.mxu0
        %1958 = vmatprep.subr.mxu0 0.0
        %v1959 = vand.u32 %v495, 4294901760
        %1960 = vmatpush1.msra.mxu0 %v1959
        %1961 = vmatprep.subr.mxu0 0.0
        %v1962 = vand.u32 %v498, 4294901760
        %1963 = vmatpush1.msra.mxu0 %v1962
        %1964 = vmatprep.subr.mxu0 0.0
        %v1965 = vand.u32 %v501, 4294901760
        %1966 = vmatpush1.msra.mxu0 %v1965
        %1967 = vmatprep.subr.mxu0 0.0
        %v1968 = vand.u32 %v504, 4294901760
        %1969 = vmatpush1.msra.mxu0 %v1968
        %1970 = vmatprep.subr.mxu0 0.0
        %v1971 = vand.u32 %v507, 4294901760
        %1972 = vmatpush1.msra.mxu0 %v1971
        %1973 = vmatprep.subr.mxu0 0.0
        %v1974 = vand.u32 %v510, 4294901760
        %1975 = vmatpush1.msra.mxu0 %v1974
        %1976 = vmatprep.subr.mxu0 0.0
        %v1977 = vand.u32 %v513, 4294901760
        %1978 = vmatpush1.msra.mxu0 %v1977
        %1979 = vmatprep.subr.mxu0 0.0
        %v1980 = vand.u32 %v516, 4294901760
        %1981 = vmatpush1.msra.mxu0 %v1980
        %1982 = vmatprep.subr.mxu0 0.0
        %v1983 = vand.u32 %v519, 4294901760
        %1984 = vmatpush1.msra.mxu0 %v1983
        %1985 = vmatprep.subr.mxu0 0.0
        %v1986 = vand.u32 %v522, 4294901760
        %1987 = vmatpush1.msra.mxu0 %v1986
        %1988 = vmatprep.subr.mxu0 0.0
        %v1989 = vand.u32 %v525, 4294901760
        %1990 = vmatpush1.msra.mxu0 %v1989
        %1991 = vmatprep.subr.mxu0 0.0
        %v1992 = vand.u32 %v528, 4294901760
        %1993 = vmatpush1.msra.mxu0 %v1992
        %1994 = vmatprep.subr.mxu0 0.0
        %v1995 = vand.u32 %v531, 4294901760
        %1996 = vmatpush1.msra.mxu0 %v1995
        %1997 = vmatprep.subr.mxu0 0.0
        %v1998 = vand.u32 %v534, 4294901760
        %1999 = vmatpush1.msra.mxu0 %v1998
        %2000 = vmatprep.subr.mxu0 0.0
        %v2001 = vand.u32 %v537, 4294901760
        %2002 = vmatpush1.msra.mxu0 %v2001
        %2003 = vmatprep.subr.mxu0 0.0
        %v2004 = vand.u32 %v540, 4294901760
        %2005 = vmatpush1.msra.mxu0 %v2004
        %2006 = vmatprep.subr.mxu0 0.0
        %2007 = vmatpush1.msra.mxu0 0.0
        %2008 = vmatprep.subr.mxu0 0.0
        %2009 = vmatpush1.msra.mxu0 0.0
        %2010 = vmatprep.subr.mxu0 0.0
        %2011 = vmatpush1.msra.mxu0 0.0
        %2012 = vmatprep.subr.mxu0 0.0
        %2013 = vmatpush1.msra.mxu0 0.0
        %2014 = vmatprep.subr.mxu0 0.0
        %2015 = vmatpush1.msra.mxu0 0.0
        %2016 = vmatprep.subr.mxu0 0.0
        %2017 = vmatpush1.msra.mxu0 0.0
        %2018 = vmatprep.subr.mxu0 0.0
        %2019 = vmatpush1.msra.mxu0 0.0
        %2020 = vmatprep.subr.mxu0 0.0
        %2021 = vmatpush1.msra.mxu0 0.0
        %2022 = vmatprep.subr.mxu0 0.0
        %2023 = vmatpush1.msra.mxu0 0.0
        %2024 = vmatprep.subr.mxu0 0.0
        %2025 = vmatpush1.msra.mxu0 0.0
        %2026 = vmatprep.subr.mxu0 0.0
        %2027 = vmatpush1.msra.mxu0 0.0
        %2028 = vmatprep.subr.mxu0 0.0
        %2029 = vmatpush1.msra.mxu0 0.0
        %2030 = vmatprep.subr.mxu0 0.0
        %2031 = vmatpush1.msra.mxu0 0.0
        %2032 = vmatprep.subr.mxu0 0.0
        %2033 = vmatpush1.msra.mxu0 0.0
        %2034 = vmatprep.subr.mxu0 0.0
        %2035 = vmatpush1.msra.mxu0 0.0
        %2036 = vmatprep.subr.mxu0 0.0
        %2037 = vmatpush1.msra.mxu0 0.0
        %2038 = vmatprep.mubr.f32.mxu0 0.0
        %v2039 = vand.u32 %v364, 4294901760
        %v2040 = vsub.f32 %v364, %v2039
        %v2041 = vand.u32 %v2040, 4294901760
        %2042 = vmatmul.mubr.f32.gmra.mrb[0].mxu0 %v2041
        %v2043 = vpop.f32.mrb[0].mxu0
        %v2044 = vadd.f32 %v1934, %v2043
        %v2045 = vpop.f32.mrb[0].mxu0
        %2046 = vmatprep.mubr.f32.mxu0 0.0
        %v2047 = vand.u32 %v365, 4294901760
        %v2048 = vsub.f32 %v365, %v2047
        %v2049 = vand.u32 %v2048, 4294901760
        %2050 = vmatmul.mubr.f32.gmra.mrb[0].mxu0 %v2049
        %v2051 = vpop.f32.mrb[0].mxu0
        %v2052 = vadd.f32 %v1941, %v2051
        %v2053 = vpop.f32.mrb[0].mxu0
        %2054 = vmatprep.mubr.f32.mxu0 0.0
        %v2055 = vand.u32 %v366, 4294901760
        %v2056 = vsub.f32 %v366, %v2055
        %v2057 = vand.u32 %v2056, 4294901760
        %2058 = vmatmul.mubr.f32.gmra.mrb[0].mxu0 %v2057
        %v2059 = vpop.f32.mrb[0].mxu0
        %v2060 = vadd.f32 %v1948, %v2059
        %v2061 = vpop.f32.mrb[0].mxu0
        %2062 = vmatprep.mubr.f32.mxu0 0.0
        %v2063 = vand.u32 %v367, 4294901760
        %v2064 = vsub.f32 %v367, %v2063
        %v2065 = vand.u32 %v2064, 4294901760
        %2066 = vmatmul.mubr.f32.gmra.mrb[0].mxu0 %v2065
        %v2067 = vpop.f32.mrb[0].mxu0
        %v2068 = vadd.f32 %v1955, %v2067
        %v2069 = vpop.f32.mrb[0].mxu0
        %2070 = vdwg.mxu0
        %2071 = vmatprep.subr.mxu0 0.0
        %v2072 = vand.u32 %v495, 4294901760
        %v2073 = vsub.f32 %v495, %v2072
        %v2074 = vand.u32 %v2073, 4294901760
        %2075 = vmatpush1.msra.mxu0 %v2074
        %2076 = vmatprep.subr.mxu0 0.0
        %v2077 = vand.u32 %v498, 4294901760
        %v2078 = vsub.f32 %v498, %v2077
        %v2079 = vand.u32 %v2078, 4294901760
        %2080 = vmatpush1.msra.mxu0 %v2079
        %2081 = vmatprep.subr.mxu0 0.0
        %v2082 = vand.u32 %v501, 4294901760
        %v2083 = vsub.f32 %v501, %v2082
        %v2084 = vand.u32 %v2083, 4294901760
        %2085 = vmatpush1.msra.mxu0 %v2084
        %2086 = vmatprep.subr.mxu0 0.0
        %v2087 = vand.u32 %v504, 4294901760
        %v2088 = vsub.f32 %v504, %v2087
        %v2089 = vand.u32 %v2088, 4294901760
        %2090 = vmatpush1.msra.mxu0 %v2089
        %2091 = vmatprep.subr.mxu0 0.0
        %v2092 = vand.u32 %v507, 4294901760
        %v2093 = vsub.f32 %v507, %v2092
        %v2094 = vand.u32 %v2093, 4294901760
        %2095 = vmatpush1.msra.mxu0 %v2094
        %2096 = vmatprep.subr.mxu0 0.0
        %v2097 = vand.u32 %v510, 4294901760
        %v2098 = vsub.f32 %v510, %v2097
        %v2099 = vand.u32 %v2098, 4294901760
        %2100 = vmatpush1.msra.mxu0 %v2099
        %2101 = vmatprep.subr.mxu0 0.0
        %v2102 = vand.u32 %v513, 4294901760
        %v2103 = vsub.f32 %v513, %v2102
        %v2104 = vand.u32 %v2103, 4294901760
        %2105 = vmatpush1.msra.mxu0 %v2104
        %2106 = vmatprep.subr.mxu0 0.0
        %v2107 = vand.u32 %v516, 4294901760
        %v2108 = vsub.f32 %v516, %v2107
        %v2109 = vand.u32 %v2108, 4294901760
        %2110 = vmatpush1.msra.mxu0 %v2109
        %2111 = vmatprep.subr.mxu0 0.0
        %v2112 = vand.u32 %v519, 4294901760
        %v2113 = vsub.f32 %v519, %v2112
        %v2114 = vand.u32 %v2113, 4294901760
        %2115 = vmatpush1.msra.mxu0 %v2114
        %2116 = vmatprep.subr.mxu0 0.0
        %v2117 = vand.u32 %v522, 4294901760
        %v2118 = vsub.f32 %v522, %v2117
        %v2119 = vand.u32 %v2118, 4294901760
        %2120 = vmatpush1.msra.mxu0 %v2119
        %2121 = vmatprep.subr.mxu0 0.0
        %v2122 = vand.u32 %v525, 4294901760
        %v2123 = vsub.f32 %v525, %v2122
        %v2124 = vand.u32 %v2123, 4294901760
        %2125 = vmatpush1.msra.mxu0 %v2124
        %2126 = vmatprep.subr.mxu0 0.0
        %v2127 = vand.u32 %v528, 4294901760
        %v2128 = vsub.f32 %v528, %v2127
        %v2129 = vand.u32 %v2128, 4294901760
        %2130 = vmatpush1.msra.mxu0 %v2129
        %2131 = vmatprep.subr.mxu0 0.0
        %v2132 = vand.u32 %v531, 4294901760
        %v2133 = vsub.f32 %v531, %v2132
        %v2134 = vand.u32 %v2133, 4294901760
        %2135 = vmatpush1.msra.mxu0 %v2134
        %2136 = vmatprep.subr.mxu0 0.0
        %v2137 = vand.u32 %v534, 4294901760
        %v2138 = vsub.f32 %v534, %v2137
        %v2139 = vand.u32 %v2138, 4294901760
        %2140 = vmatpush1.msra.mxu0 %v2139
        %2141 = vmatprep.subr.mxu0 0.0
        %v2142 = vand.u32 %v537, 4294901760
        %v2143 = vsub.f32 %v537, %v2142
        %v2144 = vand.u32 %v2143, 4294901760
        %2145 = vmatpush1.msra.mxu0 %v2144
        %2146 = vmatprep.subr.mxu0 0.0
        %v2147 = vand.u32 %v540, 4294901760
        %v2148 = vsub.f32 %v540, %v2147
        %v2149 = vand.u32 %v2148, 4294901760
        %2150 = vmatpush1.msra.mxu0 %v2149
        %2151 = vmatprep.subr.mxu0 0.0
        %2152 = vmatpush1.msra.mxu0 0.0
        %2153 = vmatprep.subr.mxu0 0.0
        %2154 = vmatpush1.msra.mxu0 0.0
        %2155 = vmatprep.subr.mxu0 0.0
        %2156 = vmatpush1.msra.mxu0 0.0
        %2157 = vmatprep.subr.mxu0 0.0
        %2158 = vmatpush1.msra.mxu0 0.0
        %2159 = vmatprep.subr.mxu0 0.0
        %2160 = vmatpush1.msra.mxu0 0.0
        %2161 = vmatprep.subr.mxu0 0.0
        %2162 = vmatpush1.msra.mxu0 0.0
        %2163 = vmatprep.subr.mxu0 0.0
        %2164 = vmatpush1.msra.mxu0 0.0
        %2165 = vmatprep.subr.mxu0 0.0
        %2166 = vmatpush1.msra.mxu0 0.0
        %2167 = vmatprep.subr.mxu0 0.0
        %2168 = vmatpush1.msra.mxu0 0.0
        %2169 = vmatprep.subr.mxu0 0.0
        %2170 = vmatpush1.msra.mxu0 0.0
        %2171 = vmatprep.subr.mxu0 0.0
        %2172 = vmatpush1.msra.mxu0 0.0
        %2173 = vmatprep.subr.mxu0 0.0
        %2174 = vmatpush1.msra.mxu0 0.0
        %2175 = vmatprep.subr.mxu0 0.0
        %2176 = vmatpush1.msra.mxu0 0.0
        %2177 = vmatprep.subr.mxu0 0.0
        %2178 = vmatpush1.msra.mxu0 0.0
        %2179 = vmatprep.subr.mxu0 0.0
        %2180 = vmatpush1.msra.mxu0 0.0
        %2181 = vmatprep.subr.mxu0 0.0
        %2182 = vmatpush1.msra.mxu0 0.0
        %2183 = vmatprep.mubr.f32.mxu0 0.0
        %v2184 = vand.u32 %v364, 4294901760
        %2185 = vmatmul.mubr.f32.gmra.mrb[0].mxu0 %v2184
        %v2186 = vpop.f32.mrb[0].mxu0
        %v2187 = vadd.f32 %v2044, %v2186
        %v2188 = vpop.f32.mrb[0].mxu0
        %2189 = vmatprep.mubr.f32.mxu0 0.0
        %v2190 = vand.u32 %v365, 4294901760
        %2191 = vmatmul.mubr.f32.gmra.mrb[0].mxu0 %v2190
        %v2192 = vpop.f32.mrb[0].mxu0
        %v2193 = vadd.f32 %v2052, %v2192
        %v2194 = vpop.f32.mrb[0].mxu0
        %2195 = vmatprep.mubr.f32.mxu0 0.0
        %v2196 = vand.u32 %v366, 4294901760
        %2197 = vmatmul.mubr.f32.gmra.mrb[0].mxu0 %v2196
        %v2198 = vpop.f32.mrb[0].mxu0
        %v2199 = vadd.f32 %v2060, %v2198
        %v2200 = vpop.f32.mrb[0].mxu0
        %2201 = vmatprep.mubr.f32.mxu0 0.0
        %v2202 = vand.u32 %v367, 4294901760
        %2203 = vmatmul.mubr.f32.gmra.mrb[0].mxu0 %v2202
        %v2204 = vpop.f32.mrb[0].mxu0
        %v2205 = vadd.f32 %v2068, %v2204
        %v2206 = vpop.f32.mrb[0].mxu0
        %2207 = vdwg.mxu0
        %2208 = vmatprep.subr.mxu0 0.0
        %v2209 = vand.u32 %v495, 4294901760
        %2210 = vmatpush1.msra.mxu0 %v2209
        %2211 = vmatprep.subr.mxu0 0.0
        %v2212 = vand.u32 %v498, 4294901760
        %2213 = vmatpush1.msra.mxu0 %v2212
        %2214 = vmatprep.subr.mxu0 0.0
        %v2215 = vand.u32 %v501, 4294901760
        %2216 = vmatpush1.msra.mxu0 %v2215
        %2217 = vmatprep.subr.mxu0 0.0
        %v2218 = vand.u32 %v504, 4294901760
        %2219 = vmatpush1.msra.mxu0 %v2218
        %2220 = vmatprep.subr.mxu0 0.0
        %v2221 = vand.u32 %v507, 4294901760
        %2222 = vmatpush1.msra.mxu0 %v2221
        %2223 = vmatprep.subr.mxu0 0.0
        %v2224 = vand.u32 %v510, 4294901760
        %2225 = vmatpush1.msra.mxu0 %v2224
        %2226 = vmatprep.subr.mxu0 0.0
        %v2227 = vand.u32 %v513, 4294901760
        %2228 = vmatpush1.msra.mxu0 %v2227
        %2229 = vmatprep.subr.mxu0 0.0
        %v2230 = vand.u32 %v516, 4294901760
        %2231 = vmatpush1.msra.mxu0 %v2230
        %2232 = vmatprep.subr.mxu0 0.0
        %v2233 = vand.u32 %v519, 4294901760
        %2234 = vmatpush1.msra.mxu0 %v2233
        %2235 = vmatprep.subr.mxu0 0.0
        %v2236 = vand.u32 %v522, 4294901760
        %2237 = vmatpush1.msra.mxu0 %v2236
        %2238 = vmatprep.subr.mxu0 0.0
        %v2239 = vand.u32 %v525, 4294901760
        %2240 = vmatpush1.msra.mxu0 %v2239
        %2241 = vmatprep.subr.mxu0 0.0
        %v2242 = vand.u32 %v528, 4294901760
        %2243 = vmatpush1.msra.mxu0 %v2242
        %2244 = vmatprep.subr.mxu0 0.0
        %v2245 = vand.u32 %v531, 4294901760
        %2246 = vmatpush1.msra.mxu0 %v2245
        %2247 = vmatprep.subr.mxu0 0.0
        %v2248 = vand.u32 %v534, 4294901760
        %2249 = vmatpush1.msra.mxu0 %v2248
        %2250 = vmatprep.subr.mxu0 0.0
        %v2251 = vand.u32 %v537, 4294901760
        %2252 = vmatpush1.msra.mxu0 %v2251
        %2253 = vmatprep.subr.mxu0 0.0
        %v2254 = vand.u32 %v540, 4294901760
        %2255 = vmatpush1.msra.mxu0 %v2254
        %2256 = vmatprep.subr.mxu0 0.0
        %2257 = vmatpush1.msra.mxu0 0.0
        %2258 = vmatprep.subr.mxu0 0.0
        %2259 = vmatpush1.msra.mxu0 0.0
        %2260 = vmatprep.subr.mxu0 0.0
        %2261 = vmatpush1.msra.mxu0 0.0
        %2262 = vmatprep.subr.mxu0 0.0
        %2263 = vmatpush1.msra.mxu0 0.0
        %2264 = vmatprep.subr.mxu0 0.0
        %2265 = vmatpush1.msra.mxu0 0.0
        %2266 = vmatprep.subr.mxu0 0.0
        %2267 = vmatpush1.msra.mxu0 0.0
        %2268 = vmatprep.subr.mxu0 0.0
        %2269 = vmatpush1.msra.mxu0 0.0
        %2270 = vmatprep.subr.mxu0 0.0
        %2271 = vmatpush1.msra.mxu0 0.0
        %2272 = vmatprep.subr.mxu0 0.0
        %2273 = vmatpush1.msra.mxu0 0.0
        %2274 = vmatprep.subr.mxu0 0.0
        %2275 = vmatpush1.msra.mxu0 0.0
        %2276 = vmatprep.subr.mxu0 0.0
        %2277 = vmatpush1.msra.mxu0 0.0
        %2278 = vmatprep.subr.mxu0 0.0
        %2279 = vmatpush1.msra.mxu0 0.0
        %2280 = vmatprep.subr.mxu0 0.0
        %2281 = vmatpush1.msra.mxu0 0.0
        %2282 = vmatprep.subr.mxu0 0.0
        %2283 = vmatpush1.msra.mxu0 0.0
        %2284 = vmatprep.subr.mxu0 0.0
        %2285 = vmatpush1.msra.mxu0 0.0
        %2286 = vmatprep.subr.mxu0 0.0
        %2287 = vmatpush1.msra.mxu0 0.0
        %2288 = vmatprep.mubr.f32.mxu0 0.0
        %v2289 = vand.u32 %v364, 4294901760
        %2290 = vmatmul.mubr.f32.gmra.mrb[0].mxu0 %v2289
        %v2291 = vpop.f32.mrb[0].mxu0
        %v2292 = vadd.f32 %v2187, %v2291
        %v2293 = vpop.f32.mrb[0].mxu0
        %2294 = vmatprep.mubr.f32.mxu0 0.0
        %v2295 = vand.u32 %v365, 4294901760
        %2296 = vmatmul.mubr.f32.gmra.mrb[0].mxu0 %v2295
        %v2297 = vpop.f32.mrb[0].mxu0
        %v2298 = vadd.f32 %v2193, %v2297
        %v2299 = vpop.f32.mrb[0].mxu0
        %2300 = vmatprep.mubr.f32.mxu0 0.0
        %v2301 = vand.u32 %v366, 4294901760
        %2302 = vmatmul.mubr.f32.gmra.mrb[0].mxu0 %v2301
        %v2303 = vpop.f32.mrb[0].mxu0
        %v2304 = vadd.f32 %v2199, %v2303
        %v2305 = vpop.f32.mrb[0].mxu0
        %2306 = vmatprep.mubr.f32.mxu0 0.0
        %v2307 = vand.u32 %v367, 4294901760
        %2308 = vmatmul.mubr.f32.gmra.mrb[0].mxu0 %v2307
        %v2309 = vpop.f32.mrb[0].mxu0
        %v2310 = vadd.f32 %v2205, %v2309
        %v2311 = vpop.f32.mrb[0].mxu0
        %2312 = vdwg.mxu0
        %v2313 = vmax.f32 %v364, %v1518
        %v2314 = vmax.f32 %v365, %v1525
        %v2315 = vmax.f32 %v366, %v1532
        %v2316 = vmax.f32 %v367, %v1539
        %v2317 = vmax.f32 %v2313, %v1520
        %v2318 = vmax.f32 %v2314, %v1527
        %v2319 = vmax.f32 %v2315, %v1534
        %v2320 = vmax.f32 %v2316, %v1541
        %v2321 = vmax.f32 %v2317, %v2292
        %v2322 = vmax.f32 %v2318, %v2298
        %v2323 = vmax.f32 %v2319, %v2304
        %v2324 = vmax.f32 %v2320, %v2310
        %2325 = vst [vmem:[%s229] sm:$0xff] %v2321
        %2326 = vst [vmem:[%s229 + $0x8] sm:$0xff] %v2322
        %2327 = vst [vmem:[%s229 + $0x10] sm:$0xff] %v2323
        %2328 = vst [vmem:[%s229 + $0x18] sm:$0xff] %v2324
        %2329 = vadd.xlane.f32.xlu0 %v2321
        %v2330 = vpop.xlane.xlu0 %2329
        %2331 = vadd.xlane.f32.xlu0 %v2322
        %v2332 = vpop.xlane.xlu0 %2331
        %2333 = vadd.xlane.f32.xlu0 %v2323
        %v2334 = vpop.xlane.xlu0 %2333
        %2335 = vadd.xlane.f32.xlu0 %v2324
        %v2336 = vpop.xlane.xlu0 %2335
        %vm2337 = vcmask 7168
        %2338 = vst.msk [vmem:[%s256] sm:$0xff] %vm2337, %v2330
        %2339 = vst.msk [vmem:[%s256 + $0x8] sm:$0xff] %vm2337, %v2332
        %2340 = vst.msk [vmem:[%s256 + $0x10] sm:$0xff] %vm2337, %v2334
        %2341 = vst.msk [vmem:[%s256 + $0x18] sm:$0xff] %vm2337, %v2336
        %v2342 = vmul.f32 %v2321, %v2321
        %v2343 = vmul.f32 %v2322, %v2322
        %v2344 = vmul.f32 %v2323, %v2323
        %v2345 = vmul.f32 %v2324, %v2324
        %2346 = vadd.xlane.f32.xlu0 %v2342
        %v2347 = vpop.xlane.xlu0 %2346
        %2348 = vadd.xlane.f32.xlu0 %v2343
        %v2349 = vpop.xlane.xlu0 %2348
        %2350 = vadd.xlane.f32.xlu0 %v2344
        %v2351 = vpop.xlane.xlu0 %2350
        %2352 = vadd.xlane.f32.xlu0 %v2345
        %v2353 = vpop.xlane.xlu0 %2352
        %2354 = vst.msk [vmem:[%s261] sm:$0xff] %vm2337, %v2347
        %2355 = vst.msk [vmem:[%s261 + $0x8] sm:$0xff] %vm2337, %v2349
        %2356 = vst.msk [vmem:[%s261 + $0x10] sm:$0xff] %vm2337, %v2351
        %2357 = vst.msk [vmem:[%s261 + $0x18] sm:$0xff] %vm2337, %v2353
        %s2358 = sand.u32 %s101, 1
        %s2359 = scalar_lea.sflag [#allocation3], %s2358
        %s2360 = sand.u32 %s101, 1
        %s2361 = smul.addr %s2360, 32
        %s2362 = scalar_lea.vmem [#allocation2], %s2361
        %p2363 = scmp.lt.s32.totalorder %s20, 1
        %s2364 = scalar_select %p2363, %s20, 1
        %s2365 = smul.addr %s2364, 4
        %s2366 = smul.addr %s2365, 8
        %s2367 = scalar_lea.vmem %s4, %s2366
        %p2368 = scmp.lt.s32.totalorder %s20, 1
        %s2369 = scalar_select %p2368, %s20, 1
        %s2370 = smul.addr %s2369, 4
        %s2371 = smul.addr %s2370, 8
        %s2372 = scalar_lea.vmem %s5, %s2371
        // Predicated region
        $region33: #{tpu_custom_call.1} parent=31 // pred_check
          %p2373 = pneg %p111
        $region34: #{tpu_custom_call.1} parent=31 // pred_check_branch
          %2375 = sbr.rel (%p2373) target = $region36
        $region35: #{tpu_custom_call.1} parent=31 // pred_region
          %s2377 = ssub.s32 512, 512
          %2378 = vsyncadd %s2359, %s2377
          %s2379 = smul.addr %s20, 4
          %s2380 = smul.addr %s2379, 128
          %s2381 = scalar_lea.hbm %s3, %s2380
          %s2382 = sshll.u32 %s2362, 4
          %s2383 = int_to_ptr.vmem [resolvable:$true] %s2382
          %2388 = dma.vmem_to_hbm [thread:$0]  %s2383, 512, %s2381, %s2359, 128, 128, 8
        $region36: #{tpu_custom_call.1} parent=31 // pred_fallthru
          _
        // Predicated region
        $region37: #{tpu_custom_call.1} parent=31 // pred_check
          %p2389 = pneg %p137
        $region38: #{tpu_custom_call.1} parent=31 // pred_check_branch
          %2391 = sbr.rel (%p2389) target = $region40
        $region39: #{tpu_custom_call.1} parent=31 // pred_region
          _
        $region40: #{tpu_custom_call.1} parent=31 // pred_fallthru
          _
        // Predicated region
        $region41: #{tpu_custom_call.1} parent=31 // pred_check
          %p2392 = pneg %p163
        $region42: #{tpu_custom_call.1} parent=31 // pred_check_branch
          %2394 = sbr.rel (%p2392) target = $region44
        $region43: #{tpu_custom_call.1} parent=31 // pred_region
          _
        $region44: #{tpu_custom_call.1} parent=31 // pred_fallthru
          _
      $region32: #{tpu_custom_call.1} parent=5 // pred_fallthru
        _
      %p2395 = scmp.le.s32.totalorder 2, %s15
      // Predicated region
      $region45: #{tpu_custom_call.1} parent=5 // pred_check
        %p2396 = pneg %p2395
      $region46: #{tpu_custom_call.1} parent=5 // pred_check_branch
        %2398 = sbr.rel (%p2396) target = $region48
      $region47: #{tpu_custom_call.1} parent=5 // pred_region
        %s2399 = ssub.s32 %s15, 2
        // Predicated region
        $region49: #{tpu_custom_call.1} parent=47 // pred_check
          %p2400 = pneg %p117
        $region50: #{tpu_custom_call.1} parent=47 // pred_check_branch
          %2402 = sbr.rel (%p2400) target = $region52
        $region51: #{tpu_custom_call.1} parent=47 // pred_region
          %s2403 = sand.u32 %s102, 1
          %s2404 = scalar_lea.sflag [#allocation3], %s2403
          %s2405 = sand.u32 %s102, 1
          %s2406 = smul.addr %s2405, 32
          %s2407 = scalar_lea.vmem [#allocation2], %s2406
          %2408 = dma.done %s2404, 512
        $region52: #{tpu_custom_call.1} parent=47 // pred_fallthru
          _
        // Predicated region
        $region53: #{tpu_custom_call.1} parent=47 // pred_check
          %p2409 = pneg %p143
        $region54: #{tpu_custom_call.1} parent=47 // pred_check_branch
          %2411 = sbr.rel (%p2409) target = $region56
        $region55: #{tpu_custom_call.1} parent=47 // pred_region
          %p2412 = scmp.lt.s32.totalorder %s21, 1
          %s2413 = scalar_select %p2412, %s21, 1
          %s2414 = smul.addr %s2413, 4
          %s2415 = smul.addr %s2414, 8
          %s2416 = scalar_lea.vmem %s4, %s2415
        $region56: #{tpu_custom_call.1} parent=47 // pred_fallthru
          _
        // Predicated region
        $region57: #{tpu_custom_call.1} parent=47 // pred_check
          %p2417 = pneg %p169
        $region58: #{tpu_custom_call.1} parent=47 // pred_check_branch
          %2419 = sbr.rel (%p2417) target = $region60
        $region59: #{tpu_custom_call.1} parent=47 // pred_region
          %p2420 = scmp.lt.s32.totalorder %s21, 1
          %s2421 = scalar_select %p2420, %s21, 1
          %s2422 = smul.addr %s2421, 4
          %s2423 = smul.addr %s2422, 8
          %s2424 = scalar_lea.vmem %s5, %s2423
        $region60: #{tpu_custom_call.1} parent=47 // pred_fallthru
          _
      $region48: #{tpu_custom_call.1} parent=5 // pred_fallthru
        _
    $region6: #{tpu_custom_call.1} parent=1 // loop_footer
      %s19 = sadd.s32 1, %s15
    $region7: #{tpu_custom_call.1} parent=1 // loop_footer_branch
      %14 = sbr.rel target = $region3
    $region8: #{tpu_custom_call.1} parent=1 // loop_exit
      _
    %2425 = vsyncpa [#allocation3], 1
    %s2426 = scalar_lea.sflag [#allocation3], 1
    %2427 = vsyncpa %s2426, 1

</llo_original>
